<compile_context>
chip_gen: v7x
topology: tpu7x:2x2x1
jax: 0.10.0
libtpu: 0.0.40
codegen_flags: <defaults>
</compile_context>

<pallas_src>
import jax
import jax.numpy as jnp
from jax.experimental import pallas as pl
from jax.experimental.pallas import tpu as pltpu

# ------------------------- model configuration -------------------------
STEP = 5
ONE_STEP = 8                          # (input_size - 13) // step
SPLIT = 4
ACTION_DIM = 13
STATE_DIM = STEP * ONE_STEP           # 40
INPUT_SIZE = STATE_DIM + ACTION_DIM   # 53  (the PyTorch `input_size`)
HIDDEN = 128                          # PyTorch default hidden_size (lane aligned)
FC2_IN = SPLIT * STEP + ONE_STEP + ACTION_DIM  # 4*5 + 8 + 13 = 41


# ------------------------------ kernel ---------------------------------
def critic_kernel(state_ref, action_ref,
                  w1bd_ref, b1t_ref,
                  w2a_ref, w2s_ref, w2act_ref, b2_ref,
                  w3_ref, b3_ref, wq_ref, bq_ref,
                  q_ref):
    state = state_ref[...]            # (TB, STATE_DIM)  f32
    action = action_ref[...]          # (TB, ACTION_DIM) f32

    # fc1 for all 5 steps in one MXU pass (block-diagonal weight), + ReLU.
    # (dropout == identity, see TODO at top of file)
    h1 = jnp.dot(state, w1bd_ref[...], preferred_element_type=jnp.float32)
    h1 = jnp.maximum(h1 + b1t_ref[...], 0.0)                 # (TB, STEP*SPLIT)

    # fc2 as a sum of row-block matmuls (no concatenate, no lane slices).
    h2 = jnp.dot(h1, w2a_ref[...], preferred_element_type=jnp.float32)
    h2 = h2 + jnp.dot(state, w2s_ref[...], preferred_element_type=jnp.float32)
    h2 = h2 + jnp.dot(action, w2act_ref[...], preferred_element_type=jnp.float32)
    h2 = jnp.maximum(h2 + b2_ref[...], 0.0)                  # (TB, HIDDEN)

    # fused heads: fc3_1 || fc3_2 in one matmul + ReLU, then a block-diagonal
    # q-projection producing both Q values as a (TB, 2) tensor.
    x12 = jnp.dot(h2, w3_ref[...], preferred_element_type=jnp.float32)
    x12 = jnp.maximum(x12 + b3_ref[...], 0.0)                # (TB, 2*HIDDEN)
    q = jnp.dot(x12, wq_ref[...], preferred_element_type=jnp.float32) + bq_ref[...]

    q_ref[...] = q.astype(q_ref.dtype)                       # (TB, 2)


# --------------------------- host-side packing --------------------------
def pack_params(params):
    """Fuse the PyTorch-layout weights into the kernel's fused layout.

    params: (w1, b1, w2, b2, w31, b31, wq1, bq1, w32, b32, wq2, bq2)
            with weights stored (in_features, out_features), biases (1, out).
    """
    (w1, b1, w2, b2, w31, b31, wq1, bq1, w32, b32, wq2, bq2) = params

    # block-diagonal fc1 weight: (STATE_DIM, STEP*SPLIT)
    w1bd = jnp.zeros((STATE_DIM, STEP * SPLIT), jnp.float32)
    for i in range(STEP):
        w1bd = w1bd.at[i * ONE_STEP:(i + 1) * ONE_STEP,
                       i * SPLIT:(i + 1) * SPLIT].set(w1)
    b1t = jnp.tile(b1, (1, STEP))                             # (1, STEP*SPLIT)

    # fc2 row split: rows [0:20] <- relu outputs, [20:28] <- last state slice,
    # [28:41] <- action.  The state part is zero-padded to full STATE_DIM rows
    # so the kernel can multiply the whole state tensor without slicing.
    w2a = w2[:STEP * SPLIT]                                   # (20, HIDDEN)
    w2s = jnp.zeros((STATE_DIM, HIDDEN), jnp.float32)
    w2s = w2s.at[(STEP - 1) * ONE_STEP:].set(
        w2[STEP * SPLIT:STEP * SPLIT + ONE_STEP])             # (40, HIDDEN)
    w2act = w2[STEP * SPLIT + ONE_STEP:]                      # (13, HIDDEN)

    # fused dual heads
    w3 = jnp.concatenate([w31, w32], axis=1)                  # (HIDDEN, 2*HIDDEN)
    b3 = jnp.concatenate([b31, b32], axis=1)                  # (1, 2*HIDDEN)
    wq = jnp.zeros((2 * HIDDEN, 2), jnp.float32)
    wq = wq.at[:HIDDEN, 0:1].set(wq1).at[HIDDEN:, 1:2].set(wq2)
    bq = jnp.concatenate([bq1, bq2], axis=1)                  # (1, 2)

    return (w1bd, b1t, w2a, w2s, w2act, b2, w3, b3, wq, bq)


# ------------------------------ wrapper ---------------------------------
def critic_forward(state, action, params, *, tile_b=1024):
    """Returns (q1, q2), each (B, 1) float32."""
    B = state.shape[0]
    packed = pack_params(params)

    # batch tile: multiple of 8 sublanes; don't exceed the (padded) batch.
    tile_b = int(min(tile_b, max(8, ((B + 7) // 8) * 8)))
    b_pad = pl.cdiv(B, tile_b) * tile_b
    if b_pad != B:
        state = jnp.pad(state, ((0, b_pad - B), (0, 0)))
        action = jnp.pad(action, ((0, b_pad - B), (0, 0)))

    def batch_spec(ncols):
        return pl.BlockSpec((tile_b, ncols), lambda i: (i, 0))

    def const_spec(shape):
        return pl.BlockSpec(shape, lambda i: (0, 0))

    in_specs = [batch_spec(STATE_DIM), batch_spec(ACTION_DIM)]
    in_specs += [const_spec(w.shape) for w in packed]
    out_specs = batch_spec(2)

    fn = pl.pallas_call(
        critic_kernel,
        out_shape=jax.ShapeDtypeStruct((b_pad, 2), jnp.float32),
        grid=(b_pad // tile_b,),
        in_specs=in_specs,
        out_specs=out_specs,
        compiler_params=pltpu.CompilerParams(
            dimension_semantics=("parallel",),
            vmem_limit_bytes=32 * 1024 * 1024,
        ),
    )
    q = fn(state, action, *packed)[:B]                        # (B, 2)
    return q[:, 0:1], q[:, 1:2]


# ------------------------------ init/ref --------------------------------
def init_params(key):
    """PyTorch-Linear-like init (U[-1/sqrt(in), 1/sqrt(in)]).

    Weights stored (in_features, out_features); biases as (1, out_features).
    """
    def linear(k, fan_in, fan_out):
        kw, kb = jax.random.split(k)
        bound = 1.0 / jnp.sqrt(jnp.float32(fan_in))
        w = jax.random.uniform(kw, (fan_in, fan_out), jnp.float32, -bound, bound)
        b = jax.random.uniform(kb, (1, fan_out), jnp.float32, -bound, bound)
        return w, b

    keys = jax.random.split(key, 6)
    w1, b1 = linear(keys[0], ONE_STEP, SPLIT)
    w2, b2 = linear(keys[1], FC2_IN, HIDDEN)
    w31, b31 = linear(keys[2], HIDDEN, HIDDEN)
    wq1, bq1 = linear(keys[3], HIDDEN, 1)
    w32, b32 = linear(keys[4], HIDDEN, HIDDEN)
    wq2, bq2 = linear(keys[5], HIDDEN, 1)
    return (w1, b1, w2, b2, w31, b31, wq1, bq1, w32, b32, wq2, bq2)


def critic_reference(state, action, params):
    """Pure-JAX reference of the same (eval-mode) forward pass, un-fused."""
    (w1, b1, w2, b2, w31, b31, wq1, bq1, w32, b32, wq2, bq2) = params
    B = state.shape[0]
    x = state.reshape(B, STEP, ONE_STEP)
    parts = [jnp.maximum(x[:, i] @ w1 + b1, 0.0) for i in range(STEP)]
    parts.append(x[:, -1])
    parts.append(action)
    h = jnp.concatenate(parts, axis=1)
    h = jnp.maximum(h @ w2 + b2, 0.0)
    x1 = jnp.maximum(h @ w31 + b31, 0.0)
    q1 = x1 @ wq1 + bq1
    x2 = jnp.maximum(h @ w32 + b32, 0.0)
    q2 = x2 @ wq2 + bq2
    return q1, q2


# -------------------------------- main ----------------------------------
if __name__ == "__main__":
    # Make the pure-JAX reference matmuls exact f32 so the comparison against
    # the (full-precision) MXU kernel is tight.
    jax.config.update("jax_default_matmul_precision", "highest")

    key = jax.random.PRNGKey(0)
    k_params, k_state, k_action = jax.random.split(key, 3)
    params = init_params(k_params)

    # small primary test (B=2)
    B = 2
    state = jax.random.normal(k_state, (B, STATE_DIM), jnp.float32)
    action = jax.random.normal(k_action, (B, ACTION_DIM), jnp.float32)

    q1, q2 = critic_forward(state, action, params)
    q1, q2 = jax.block_until_ready((q1, q2))

    q1_ref, q2_ref = critic_reference(state, action, params)
    assert q1.shape == (B, 1) and q2.shape == (B, 1)
    assert jnp.allclose(q1, q1_ref, atol=1e-5, rtol=1e-5), (q1, q1_ref)
    assert jnp.allclose(q2, q2_ref, atol=1e-5, rtol=1e-5), (q2, q2_ref)

    # second test exercising multi-tile grid + batch padding (B=20, tile_b=8)
    B2 = 20
    k_s2, k_a2 = jax.random.split(jax.random.PRNGKey(1))
    state2 = jax.random.normal(k_s2, (B2, STATE_DIM), jnp.float32)
    action2 = jax.random.normal(k_a2, (B2, ACTION_DIM), jnp.float32)
    q1b, q2b = critic_forward(state2, action2, params, tile_b=8)
    q1b, q2b = jax.block_until_ready((q1b, q2b))
    q1b_ref, q2b_ref = critic_reference(state2, action2, params)
    assert jnp.allclose(q1b, q1b_ref, atol=1e-5, rtol=1e-5)
    assert jnp.allclose(q2b, q2b_ref, atol=1e-5, rtol=1e-5)

    # third test: larger ragged batch with the default (1024-row) tile,
    # exercising multi-tile pipelining + padding on the perf-relevant path.
    B3 = 2500
    k_s3, k_a3 = jax.random.split(jax.random.PRNGKey(2))
    state3 = jax.random.normal(k_s3, (B3, STATE_DIM), jnp.float32)
    action3 = jax.random.normal(k_a3, (B3, ACTION_DIM), jnp.float32)
    q1c, q2c = critic_forward(state3, action3, params)
    q1c, q2c = jax.block_until_ready((q1c, q2c))
    q1c_ref, q2c_ref = critic_reference(state3, action3, params)
    assert jnp.allclose(q1c, q1c_ref, atol=1e-5, rtol=1e-5)
    assert jnp.allclose(q2c, q2c_ref, atol=1e-5, rtol=1e-5)

    print("KERNEL_OK")
</pallas_src>

<mosaic_0001>
module attributes {stable_mosaic.version = 11 : i64} {
  func.func @critic_kernel(%arg0: i32, %arg1: memref<8x40xf32, #tpu.memory_space<vmem>>, %arg2: memref<8x13xf32, #tpu.memory_space<vmem>>, %arg3: memref<40x20xf32, #tpu.memory_space<vmem>>, %arg4: memref<1x20xf32, #tpu.memory_space<vmem>>, %arg5: memref<20x128xf32, #tpu.memory_space<vmem>>, %arg6: memref<40x128xf32, #tpu.memory_space<vmem>>, %arg7: memref<13x128xf32, #tpu.memory_space<vmem>>, %arg8: memref<1x128xf32, #tpu.memory_space<vmem>>, %arg9: memref<128x256xf32, #tpu.memory_space<vmem>>, %arg10: memref<1x256xf32, #tpu.memory_space<vmem>>, %arg11: memref<256x2xf32, #tpu.memory_space<vmem>>, %arg12: memref<1x2xf32, #tpu.memory_space<vmem>>, %arg13: memref<8x2xf32, #tpu.memory_space<vmem>>) attributes {dimension_semantics = [#tpu.dimension_semantics<parallel>], iteration_bounds = array<i64: 1>, scalar_prefetch = 0 : i64, scratch_operands = 0 : i64, tpu.core_type = #tpu.core_type<tc>, window_params = [{transform_indices = @transform_0, window_bounds = array<i64: 8, 40>}, {transform_indices = @transform_1, window_bounds = array<i64: 8, 13>}, {pipeline_mode = #tpu.pipeline_mode<synchronous>, transform_indices = @transform_2, window_bounds = array<i64: 40, 20>}, {pipeline_mode = #tpu.pipeline_mode<synchronous>, transform_indices = @transform_3, window_bounds = array<i64: 1, 20>}, {pipeline_mode = #tpu.pipeline_mode<synchronous>, transform_indices = @transform_4, window_bounds = array<i64: 20, 128>}, {pipeline_mode = #tpu.pipeline_mode<synchronous>, transform_indices = @transform_5, window_bounds = array<i64: 40, 128>}, {pipeline_mode = #tpu.pipeline_mode<synchronous>, transform_indices = @transform_6, window_bounds = array<i64: 13, 128>}, {pipeline_mode = #tpu.pipeline_mode<synchronous>, transform_indices = @transform_7, window_bounds = array<i64: 1, 128>}, {pipeline_mode = #tpu.pipeline_mode<synchronous>, transform_indices = @transform_8, window_bounds = array<i64: 128, 256>}, {pipeline_mode = #tpu.pipeline_mode<synchronous>, transform_indices = @transform_9, window_bounds = array<i64: 1, 256>}, {pipeline_mode = #tpu.pipeline_mode<synchronous>, transform_indices = @transform_10, window_bounds = array<i64: 256, 2>}, {pipeline_mode = #tpu.pipeline_mode<synchronous>, transform_indices = @transform_11, window_bounds = array<i64: 1, 2>}, {transform_indices = @transform_12, window_bounds = array<i64: 8, 2>}]} {
    %c0 = arith.constant 0 : index
    %c0_0 = arith.constant 0 : index
    %0 = vector.load %arg1[%c0, %c0_0] : memref<8x40xf32, #tpu.memory_space<vmem>>, vector<8x40xf32>
    %c0_1 = arith.constant 0 : index
    %c0_2 = arith.constant 0 : index
    %1 = vector.load %arg2[%c0_1, %c0_2] : memref<8x13xf32, #tpu.memory_space<vmem>>, vector<8x13xf32>
    %c0_3 = arith.constant 0 : index
    %c0_4 = arith.constant 0 : index
    %2 = vector.load %arg3[%c0_3, %c0_4] : memref<40x20xf32, #tpu.memory_space<vmem>>, vector<40x20xf32>
    %cst = arith.constant dense<0.000000e+00> : vector<8x20xf32>
    %3 = tpu.matmul %0, %2, %cst {dimension_numbers = #tpu.dot_dimension_numbers<[1], [0], [0], [1], [0, 0, 1, 1], [], []>, precision = #tpu.contract_precision<fp32>} : vector<8x40xf32>, vector<40x20xf32>, vector<8x20xf32> -> vector<8x20xf32>
    %c0_5 = arith.constant 0 : index
    %c0_6 = arith.constant 0 : index
    %4 = vector.load %arg4[%c0_5, %c0_6] : memref<1x20xf32, #tpu.memory_space<vmem>>, vector<1x20xf32>
    %5 = vector.broadcast %4 : vector<1x20xf32> to vector<8x20xf32>
    %6 = arith.addf %3, %5 : vector<8x20xf32>
    %cst_7 = arith.constant 0.000000e+00 : f32
    %7 = vector.broadcast %cst_7 : f32 to vector<8x20xf32>
    %8 = arith.maximumf %6, %7 : vector<8x20xf32>
    %c0_8 = arith.constant 0 : index
    %c0_9 = arith.constant 0 : index
    %9 = vector.load %arg5[%c0_8, %c0_9] : memref<20x128xf32, #tpu.memory_space<vmem>>, vector<20x128xf32>
    %cst_10 = arith.constant dense<0.000000e+00> : vector<8x128xf32>
    %10 = tpu.matmul %8, %9, %cst_10 {dimension_numbers = #tpu.dot_dimension_numbers<[1], [0], [0], [1], [0, 0, 1, 1], [], []>, precision = #tpu.contract_precision<fp32>} : vector<8x20xf32>, vector<20x128xf32>, vector<8x128xf32> -> vector<8x128xf32>
    %c0_11 = arith.constant 0 : index
    %c0_12 = arith.constant 0 : index
    %11 = vector.load %arg6[%c0_11, %c0_12] : memref<40x128xf32, #tpu.memory_space<vmem>>, vector<40x128xf32>
    %cst_13 = arith.constant dense<0.000000e+00> : vector<8x128xf32>
    %12 = tpu.matmul %0, %11, %cst_13 {dimension_numbers = #tpu.dot_dimension_numbers<[1], [0], [0], [1], [0, 0, 1, 1], [], []>, precision = #tpu.contract_precision<fp32>} : vector<8x40xf32>, vector<40x128xf32>, vector<8x128xf32> -> vector<8x128xf32>
    %13 = arith.addf %10, %12 : vector<8x128xf32>
    %c0_14 = arith.constant 0 : index
    %c0_15 = arith.constant 0 : index
    %14 = vector.load %arg7[%c0_14, %c0_15] : memref<13x128xf32, #tpu.memory_space<vmem>>, vector<13x128xf32>
    %cst_16 = arith.constant dense<0.000000e+00> : vector<8x128xf32>
    %15 = tpu.matmul %1, %14, %cst_16 {dimension_numbers = #tpu.dot_dimension_numbers<[1], [0], [0], [1], [0, 0, 1, 1], [], []>, precision = #tpu.contract_precision<fp32>} : vector<8x13xf32>, vector<13x128xf32>, vector<8x128xf32> -> vector<8x128xf32>
    %16 = arith.addf %13, %15 : vector<8x128xf32>
    %c0_17 = arith.constant 0 : index
    %c0_18 = arith.constant 0 : index
    %17 = vector.load %arg8[%c0_17, %c0_18] : memref<1x128xf32, #tpu.memory_space<vmem>>, vector<1x128xf32>
    %18 = vector.broadcast %17 : vector<1x128xf32> to vector<8x128xf32>
    %19 = arith.addf %16, %18 : vector<8x128xf32>
    %cst_19 = arith.constant 0.000000e+00 : f32
    %20 = vector.broadcast %cst_19 : f32 to vector<8x128xf32>
    %21 = arith.maximumf %19, %20 : vector<8x128xf32>
    %c0_20 = arith.constant 0 : index
    %c0_21 = arith.constant 0 : index
    %22 = vector.load %arg9[%c0_20, %c0_21] : memref<128x256xf32, #tpu.memory_space<vmem>>, vector<128x256xf32>
    %cst_22 = arith.constant dense<0.000000e+00> : vector<8x256xf32>
    %23 = tpu.matmul %21, %22, %cst_22 {dimension_numbers = #tpu.dot_dimension_numbers<[1], [0], [0], [1], [0, 0, 1, 1], [], []>, precision = #tpu.contract_precision<fp32>} : vector<8x128xf32>, vector<128x256xf32>, vector<8x256xf32> -> vector<8x256xf32>
    %c0_23 = arith.constant 0 : index
    %c0_24 = arith.constant 0 : index
    %24 = vector.load %arg10[%c0_23, %c0_24] : memref<1x256xf32, #tpu.memory_space<vmem>>, vector<1x256xf32>
    %25 = vector.broadcast %24 : vector<1x256xf32> to vector<8x256xf32>
    %26 = arith.addf %23, %25 : vector<8x256xf32>
    %cst_25 = arith.constant 0.000000e+00 : f32
    %27 = vector.broadcast %cst_25 : f32 to vector<8x256xf32>
    %28 = arith.maximumf %26, %27 : vector<8x256xf32>
    %c0_26 = arith.constant 0 : index
    %c0_27 = arith.constant 0 : index
    %29 = vector.load %arg11[%c0_26, %c0_27] : memref<256x2xf32, #tpu.memory_space<vmem>>, vector<256x2xf32>
    %cst_28 = arith.constant dense<0.000000e+00> : vector<8x2xf32>
    %30 = tpu.matmul %28, %29, %cst_28 {dimension_numbers = #tpu.dot_dimension_numbers<[1], [0], [0], [1], [0, 0, 1, 1], [], []>, precision = #tpu.contract_precision<fp32>} : vector<8x256xf32>, vector<256x2xf32>, vector<8x2xf32> -> vector<8x2xf32>
    %c0_29 = arith.constant 0 : index
    %c0_30 = arith.constant 0 : index
    %31 = vector.load %arg12[%c0_29, %c0_30] : memref<1x2xf32, #tpu.memory_space<vmem>>, vector<1x2xf32>
    %32 = vector.broadcast %31 : vector<1x2xf32> to vector<8x2xf32>
    %33 = arith.addf %30, %32 : vector<8x2xf32>
    %c0_31 = arith.constant 0 : index
    %c0_32 = arith.constant 0 : index
    %34 = vector.load %arg13[%c0_31, %c0_32] : memref<8x2xf32, #tpu.memory_space<vmem>>, vector<8x2xf32>
    tpu.vector_store %arg13[%c0_31, %c0_32], %33 {strides = array<i32>} : memref<8x2xf32, #tpu.memory_space<vmem>>, vector<8x2xf32>,
    return
  }
  func.func @transform_0(%arg0: i32) -> (i32, i32) {
    %c0_i32 = arith.constant 0 : i32
    %c0_i32_0 = arith.constant 0 : i32
    return %arg0, %c0_i32 : i32, i32
  }
  func.func @transform_1(%arg0: i32) -> (i32, i32) {
    %c0_i32 = arith.constant 0 : i32
    %c0_i32_0 = arith.constant 0 : i32
    return %arg0, %c0_i32 : i32, i32
  }
  func.func @transform_2(%arg0: i32) -> (i32, i32) {
    %c0_i32 = arith.constant 0 : i32
    %c0_i32_0 = arith.constant 0 : i32
    %c0_i32_1 = arith.constant 0 : i32
    return %c0_i32, %c0_i32_0 : i32, i32
  }
  func.func @transform_3(%arg0: i32) -> (i32, i32) {
    %c0_i32 = arith.constant 0 : i32
    %c0_i32_0 = arith.constant 0 : i32
    %c0_i32_1 = arith.constant 0 : i32
    return %c0_i32, %c0_i32_0 : i32, i32
  }
  func.func @transform_4(%arg0: i32) -> (i32, i32) {
    %c0_i32 = arith.constant 0 : i32
    %c0_i32_0 = arith.constant 0 : i32
    %c0_i32_1 = arith.constant 0 : i32
    return %c0_i32, %c0_i32_0 : i32, i32
  }
  func.func @transform_5(%arg0: i32) -> (i32, i32) {
    %c0_i32 = arith.constant 0 : i32
    %c0_i32_0 = arith.constant 0 : i32
    %c0_i32_1 = arith.constant 0 : i32
    return %c0_i32, %c0_i32_0 : i32, i32
  }
  func.func @transform_6(%arg0: i32) -> (i32, i32) {
    %c0_i32 = arith.constant 0 : i32
    %c0_i32_0 = arith.constant 0 : i32
    %c0_i32_1 = arith.constant 0 : i32
    return %c0_i32, %c0_i32_0 : i32, i32
  }
  func.func @transform_7(%arg0: i32) -> (i32, i32) {
    %c0_i32 = arith.constant 0 : i32
    %c0_i32_0 = arith.constant 0 : i32
    %c0_i32_1 = arith.constant 0 : i32
    return %c0_i32, %c0_i32_0 : i32, i32
  }
  func.func @transform_8(%arg0: i32) -> (i32, i32) {
    %c0_i32 = arith.constant 0 : i32
    %c0_i32_0 = arith.constant 0 : i32
    %c0_i32_1 = arith.constant 0 : i32
    return %c0_i32, %c0_i32_0 : i32, i32
  }
  func.func @transform_9(%arg0: i32) -> (i32, i32) {
    %c0_i32 = arith.constant 0 : i32
    %c0_i32_0 = arith.constant 0 : i32
    %c0_i32_1 = arith.constant 0 : i32
    return %c0_i32, %c0_i32_0 : i32, i32
  }
  func.func @transform_10(%arg0: i32) -> (i32, i32) {
    %c0_i32 = arith.constant 0 : i32
    %c0_i32_0 = arith.constant 0 : i32
    %c0_i32_1 = arith.constant 0 : i32
    return %c0_i32, %c0_i32_0 : i32, i32
  }
  func.func @transform_11(%arg0: i32) -> (i32, i32) {
    %c0_i32 = arith.constant 0 : i32
    %c0_i32_0 = arith.constant 0 : i32
    %c0_i32_1 = arith.constant 0 : i32
    return %c0_i32, %c0_i32_0 : i32, i32
  }
  func.func @transform_12(%arg0: i32) -> (i32, i32) {
    %c0_i32 = arith.constant 0 : i32
    %c0_i32_0 = arith.constant 0 : i32
    return %arg0, %c0_i32 : i32, i32
  }
}

</mosaic_0001>

<llo_original>
// kernel: tpu_custom_call.1
$region0: #{tpu_custom_call.1}
  #allocation0 [shape = 'u32[]', space=smem, size = 0x4, offset = 0x4, fixed_abs, tag = 'smem constant byte address 0x4 - core index']
  #allocation1 [shape = 'u32[144,128]{1,0:T(1,128)}', space=vmem, size = 0x12000, scoped, tag = 'internal scratch']
  %s0 = inlined_call_operand.vmem [shape: f32[8,40], index: 0, kind: input, shape index: {}]
  %s1 = inlined_call_operand.vmem [shape: f32[8,13], index: 1, kind: input, shape index: {}]
  %s2 = inlined_call_operand.vmem [shape: f32[40,20], index: 2, kind: input, shape index: {}]
  %s3 = inlined_call_operand.hbm [shape: f32[1,20], index: 3, kind: input, shape index: {}]
  %s4 = inlined_call_operand.vmem [shape: f32[20,128], index: 4, kind: input, shape index: {}]
  %s5 = inlined_call_operand.vmem [shape: f32[40,128], index: 5, kind: input, shape index: {}]
  %s6 = inlined_call_operand.vmem [shape: f32[13,128], index: 6, kind: input, shape index: {}]
  %s7 = inlined_call_operand.hbm [shape: f32[1,128], index: 7, kind: input, shape index: {}]
  %s8 = inlined_call_operand.vmem [shape: f32[128,256], index: 8, kind: input, shape index: {}]
  %s9 = inlined_call_operand.vmem [shape: f32[1,256], index: 9, kind: input, shape index: {}]
  %s10 = inlined_call_operand.vmem [shape: f32[256,2], index: 10, kind: input, shape index: {}]
  %s11 = inlined_call_operand.vmem [shape: f32[1,2], index: 11, kind: input, shape index: {}]
  %s12 = inlined_call_operand.vmem [shape: f32[8,2], index: 12, kind: output, shape index: {}]
  %s13 = sld [smem:[#allocation0]]
  $region66: #{tpu_custom_call.1} parent=0
    _
  %s15 = ssub.s32 1, %s13
  %s16 = scalar_select 0, %s15, %s13
  $region1: #{tpu_custom_call.1} parent=0
    #allocation2 [shape = 'u8[512]{0}', space=vmem, size = 0x400, scoped, tag = 'input window, operand 3, single buffered']
    #allocation3 [shape = 's32[1]{0}', space=sflag, size = 0x4, scoped, tag = 'scoped memory for tpu_custom_call.1']
    #allocation4 [shape = 'u8[512]{0}', space=vmem, size = 0x400, scoped, tag = 'input window, operand 7, single buffered']
    #allocation5 [shape = 's32[1]{0}', space=sflag, size = 0x4, scoped, tag = 'scoped memory for tpu_custom_call.1']
    %17 = vsyncpa [#allocation3], 0
    %18 = vsyncpa [#allocation5], 0
    // Predicated region
    $region2: #{tpu_custom_call.1} parent=1 // pred_check
      _
    $region3: #{tpu_custom_call.1} parent=1 // pred_check_branch
      %20 = sbr.rel (0) target = $region5
    $region4: #{tpu_custom_call.1} parent=1 // pred_region
      _
    $region5: #{tpu_custom_call.1} parent=1 // pred_fallthru
      _
    // Predicated region
    $region6: #{tpu_custom_call.1} parent=1 // pred_check
      _
    $region7: #{tpu_custom_call.1} parent=1 // pred_check_branch
      %22 = sbr.rel (0) target = $region9
    $region8: #{tpu_custom_call.1} parent=1 // pred_region
      _
    $region9: #{tpu_custom_call.1} parent=1 // pred_fallthru
      _
    // Predicated region
    $region10: #{tpu_custom_call.1} parent=1 // pred_check
      _
    $region11: #{tpu_custom_call.1} parent=1 // pred_check_branch
      %24 = sbr.rel (0) target = $region13
    $region12: #{tpu_custom_call.1} parent=1 // pred_region
      _
    $region13: #{tpu_custom_call.1} parent=1 // pred_fallthru
      _
    // Predicated region
    $region14: #{tpu_custom_call.1} parent=1 // pred_check
      _
    $region15: #{tpu_custom_call.1} parent=1 // pred_check_branch
      %26 = sbr.rel (0) target = $region17
    $region16: #{tpu_custom_call.1} parent=1 // pred_region
      %s28 = ssub.s32 16, 16
      %29 = vsyncadd [#allocation3], %s28
      %s31 = sshll.u32 [#allocation2], 4
      %s32 = int_to_ptr.vmem [resolvable:$true] %s31
      %34 = dma.hbm_to_vmem [thread:$0]  %s3, 16, %s32, [#allocation3]
    $region17: #{tpu_custom_call.1} parent=1 // pred_fallthru
      _
    // Predicated region
    $region18: #{tpu_custom_call.1} parent=1 // pred_check
      _
    $region19: #{tpu_custom_call.1} parent=1 // pred_check_branch
      %36 = sbr.rel (0) target = $region21
    $region20: #{tpu_custom_call.1} parent=1 // pred_region
      _
    $region21: #{tpu_custom_call.1} parent=1 // pred_fallthru
      _
    // Predicated region
    $region22: #{tpu_custom_call.1} parent=1 // pred_check
      _
    $region23: #{tpu_custom_call.1} parent=1 // pred_check_branch
      %38 = sbr.rel (0) target = $region25
    $region24: #{tpu_custom_call.1} parent=1 // pred_region
      _
    $region25: #{tpu_custom_call.1} parent=1 // pred_fallthru
      _
    // Predicated region
    $region26: #{tpu_custom_call.1} parent=1 // pred_check
      _
    $region27: #{tpu_custom_call.1} parent=1 // pred_check_branch
      %40 = sbr.rel (0) target = $region29
    $region28: #{tpu_custom_call.1} parent=1 // pred_region
      _
    $region29: #{tpu_custom_call.1} parent=1 // pred_fallthru
      _
    // Predicated region
    $region30: #{tpu_custom_call.1} parent=1 // pred_check
      _
    $region31: #{tpu_custom_call.1} parent=1 // pred_check_branch
      %42 = sbr.rel (0) target = $region33
    $region32: #{tpu_custom_call.1} parent=1 // pred_region
      %s44 = ssub.s32 16, 16
      %45 = vsyncadd [#allocation5], %s44
      %s47 = sshll.u32 [#allocation4], 4
      %s48 = int_to_ptr.vmem [resolvable:$true] %s47
      %50 = dma.hbm_to_vmem [thread:$0]  %s7, 16, %s48, [#allocation5]
    $region33: #{tpu_custom_call.1} parent=1 // pred_fallthru
      _
    // Predicated region
    $region34: #{tpu_custom_call.1} parent=1 // pred_check
      _
    $region35: #{tpu_custom_call.1} parent=1 // pred_check_branch
      %52 = sbr.rel (0) target = $region37
    $region36: #{tpu_custom_call.1} parent=1 // pred_region
      _
    $region37: #{tpu_custom_call.1} parent=1 // pred_fallthru
      _
    // Predicated region
    $region38: #{tpu_custom_call.1} parent=1 // pred_check
      _
    $region39: #{tpu_custom_call.1} parent=1 // pred_check_branch
      %54 = sbr.rel (0) target = $region41
    $region40: #{tpu_custom_call.1} parent=1 // pred_region
      _
    $region41: #{tpu_custom_call.1} parent=1 // pred_fallthru
      _
    // Predicated region
    $region42: #{tpu_custom_call.1} parent=1 // pred_check
      _
    $region43: #{tpu_custom_call.1} parent=1 // pred_check_branch
      %56 = sbr.rel (0) target = $region45
    $region44: #{tpu_custom_call.1} parent=1 // pred_region
      _
    $region45: #{tpu_custom_call.1} parent=1 // pred_fallthru
      _
    // Predicated region
    $region46: #{tpu_custom_call.1} parent=1 // pred_check
      _
    $region47: #{tpu_custom_call.1} parent=1 // pred_check_branch
      %58 = sbr.rel (0) target = $region49
    $region48: #{tpu_custom_call.1} parent=1 // pred_region
      _
    $region49: #{tpu_custom_call.1} parent=1 // pred_fallthru
      _
    // Predicated region
    $region50: #{tpu_custom_call.1} parent=1 // pred_check
      _
    $region51: #{tpu_custom_call.1} parent=1 // pred_check_branch
      %60 = sbr.rel (0) target = $region53
    $region52: #{tpu_custom_call.1} parent=1 // pred_region
      %61 = dma.done [#allocation3], 16
    $region53: #{tpu_custom_call.1} parent=1 // pred_fallthru
      _
    // Predicated region
    $region54: #{tpu_custom_call.1} parent=1 // pred_check
      _
    $region55: #{tpu_custom_call.1} parent=1 // pred_check_branch
      %63 = sbr.rel (0) target = $region57
    $region56: #{tpu_custom_call.1} parent=1 // pred_region
      %64 = dma.done [#allocation5], 16
    $region57: #{tpu_custom_call.1} parent=1 // pred_fallthru
      _
    %v65 = vld [vmem:[%s0] sm:$0xff]
    %v66 = vld [vmem:[%s1] sm:$0xff]
    %v67 = vld [vmem:[%s2] sm:$0xff]
    %v68 = vld [vmem:[%s2 + $0x8] sm:$0xff]
    %v69 = vld [vmem:[%s2 + $0x10] sm:$0xff]
    %v70 = vld [vmem:[%s2 + $0x18] sm:$0xff]
    %v71 = vld [vmem:[%s2 + $0x20] sm:$0xff]
    %v72 = vld [vmem:[#allocation2] sm:$0x1]
    %v74 = vlaneseq
    %v75 = vshrl.u32 %v74, 7
    %v76 = vsub.s32 0, %v75
    %v77 = vrot.slane %v72, %v76
    %vm79 = vcmask 326656
    %v81 = vsel %vm79, %v65, 0
    %83 = vmatprep.subr.mxu0 0.0
    %v84 = vand.u32 %v67, 4294901760
    %85 = vmatpush1.msra.mxu0 %v84
    %86 = vmatprep.subr.mxu0 0.0
    %v87 = vand.u32 %v68, 4294901760
    %88 = vmatpush1.msra.mxu0 %v87
    %89 = vmatprep.subr.mxu0 0.0
    %v90 = vand.u32 %v69, 4294901760
    %91 = vmatpush1.msra.mxu0 %v90
    %92 = vmatprep.subr.mxu0 0.0
    %v93 = vand.u32 %v70, 4294901760
    %94 = vmatpush1.msra.mxu0 %v93
    %95 = vmatprep.subr.mxu0 0.0
    %v96 = vand.u32 %v71, 4294901760
    %97 = vmatpush1.msra.mxu0 %v96
    %98 = vmatprep.subr.mxu0 0.0
    %99 = vmatpush1.msra.mxu0 0.0
    %100 = vmatprep.subr.mxu0 0.0
    %101 = vmatpush1.msra.mxu0 0.0
    %102 = vmatprep.subr.mxu0 0.0
    %103 = vmatpush1.msra.mxu0 0.0
    %104 = vmatprep.subr.mxu0 0.0
    %105 = vmatpush1.msra.mxu0 0.0
    %106 = vmatprep.subr.mxu0 0.0
    %107 = vmatpush1.msra.mxu0 0.0
    %108 = vmatprep.subr.mxu0 0.0
    %109 = vmatpush1.msra.mxu0 0.0
    %110 = vmatprep.subr.mxu0 0.0
    %111 = vmatpush1.msra.mxu0 0.0
    %112 = vmatprep.subr.mxu0 0.0
    %113 = vmatpush1.msra.mxu0 0.0
    %114 = vmatprep.subr.mxu0 0.0
    %115 = vmatpush1.msra.mxu0 0.0
    %116 = vmatprep.subr.mxu0 0.0
    %117 = vmatpush1.msra.mxu0 0.0
    %118 = vmatprep.subr.mxu0 0.0
    %119 = vmatpush1.msra.mxu0 0.0
    %120 = vmatprep.subr.mxu0 0.0
    %121 = vmatpush1.msra.mxu0 0.0
    %122 = vmatprep.subr.mxu0 0.0
    %123 = vmatpush1.msra.mxu0 0.0
    %124 = vmatprep.subr.mxu0 0.0
    %125 = vmatpush1.msra.mxu0 0.0
    %126 = vmatprep.subr.mxu0 0.0
    %127 = vmatpush1.msra.mxu0 0.0
    %128 = vmatprep.subr.mxu0 0.0
    %129 = vmatpush1.msra.mxu0 0.0
    %130 = vmatprep.subr.mxu0 0.0
    %131 = vmatpush1.msra.mxu0 0.0
    %132 = vmatprep.subr.mxu0 0.0
    %133 = vmatpush1.msra.mxu0 0.0
    %134 = vmatprep.subr.mxu0 0.0
    %135 = vmatpush1.msra.mxu0 0.0
    %136 = vmatprep.subr.mxu0 0.0
    %137 = vmatpush1.msra.mxu0 0.0
    %138 = vmatprep.subr.mxu0 0.0
    %139 = vmatpush1.msra.mxu0 0.0
    %140 = vmatprep.subr.mxu0 0.0
    %141 = vmatpush1.msra.mxu0 0.0
    %142 = vmatprep.subr.mxu0 0.0
    %143 = vmatpush1.msra.mxu0 0.0
    %144 = vmatprep.subr.mxu0 0.0
    %145 = vmatpush1.msra.mxu0 0.0
    %146 = vmatprep.subr.mxu0 0.0
    %147 = vmatpush1.msra.mxu0 0.0
    %148 = vmatprep.subr.mxu0 0.0
    %149 = vmatpush1.msra.mxu0 0.0
    %150 = vmatprep.subr.mxu0 0.0
    %151 = vmatpush1.msra.mxu0 0.0
    %152 = vmatprep.mubr.f32.mxu0 0.0
    %v153 = vand.u32 %v81, 4294901760
    %v154 = vsub.f32 %v81, %v153
    %v155 = vand.u32 %v154, 4294901760
    %v156 = vsub.f32 %v154, %v155
    %v157 = vand.u32 %v156, 4294901760
    %158 = vmatmul.mubr.f32.gmra.mrb[0].mxu0 %v157
    %v159 = vpop.f32.mrb[0].mxu0
    %v160 = vadd.f32 %v77, %v159
    %v161 = vpop.f32.mrb[0].mxu0
    %162 = vdwg.mxu0
    %163 = vmatprep.subr.mxu0 0.0
    %v164 = vand.u32 %v67, 4294901760
    %v165 = vsub.f32 %v67, %v164
    %v166 = vand.u32 %v165, 4294901760
    %v167 = vsub.f32 %v165, %v166
    %v168 = vand.u32 %v167, 4294901760
    %169 = vmatpush1.msra.mxu0 %v168
    %170 = vmatprep.subr.mxu0 0.0
    %v171 = vand.u32 %v68, 4294901760
    %v172 = vsub.f32 %v68, %v171
    %v173 = vand.u32 %v172, 4294901760
    %v174 = vsub.f32 %v172, %v173
    %v175 = vand.u32 %v174, 4294901760
    %176 = vmatpush1.msra.mxu0 %v175
    %177 = vmatprep.subr.mxu0 0.0
    %v178 = vand.u32 %v69, 4294901760
    %v179 = vsub.f32 %v69, %v178
    %v180 = vand.u32 %v179, 4294901760
    %v181 = vsub.f32 %v179, %v180
    %v182 = vand.u32 %v181, 4294901760
    %183 = vmatpush1.msra.mxu0 %v182
    %184 = vmatprep.subr.mxu0 0.0
    %v185 = vand.u32 %v70, 4294901760
    %v186 = vsub.f32 %v70, %v185
    %v187 = vand.u32 %v186, 4294901760
    %v188 = vsub.f32 %v186, %v187
    %v189 = vand.u32 %v188, 4294901760
    %190 = vmatpush1.msra.mxu0 %v189
    %191 = vmatprep.subr.mxu0 0.0
    %v192 = vand.u32 %v71, 4294901760
    %v193 = vsub.f32 %v71, %v192
    %v194 = vand.u32 %v193, 4294901760
    %v195 = vsub.f32 %v193, %v194
    %v196 = vand.u32 %v195, 4294901760
    %197 = vmatpush1.msra.mxu0 %v196
    %198 = vmatprep.subr.mxu0 0.0
    %199 = vmatpush1.msra.mxu0 0.0
    %200 = vmatprep.subr.mxu0 0.0
    %201 = vmatpush1.msra.mxu0 0.0
    %202 = vmatprep.subr.mxu0 0.0
    %203 = vmatpush1.msra.mxu0 0.0
    %204 = vmatprep.subr.mxu0 0.0
    %205 = vmatpush1.msra.mxu0 0.0
    %206 = vmatprep.subr.mxu0 0.0
    %207 = vmatpush1.msra.mxu0 0.0
    %208 = vmatprep.subr.mxu0 0.0
    %209 = vmatpush1.msra.mxu0 0.0
    %210 = vmatprep.subr.mxu0 0.0
    %211 = vmatpush1.msra.mxu0 0.0
    %212 = vmatprep.subr.mxu0 0.0
    %213 = vmatpush1.msra.mxu0 0.0
    %214 = vmatprep.subr.mxu0 0.0
    %215 = vmatpush1.msra.mxu0 0.0
    %216 = vmatprep.subr.mxu0 0.0
    %217 = vmatpush1.msra.mxu0 0.0
    %218 = vmatprep.subr.mxu0 0.0
    %219 = vmatpush1.msra.mxu0 0.0
    %220 = vmatprep.subr.mxu0 0.0
    %221 = vmatpush1.msra.mxu0 0.0
    %222 = vmatprep.subr.mxu0 0.0
    %223 = vmatpush1.msra.mxu0 0.0
    %224 = vmatprep.subr.mxu0 0.0
    %225 = vmatpush1.msra.mxu0 0.0
    %226 = vmatprep.subr.mxu0 0.0
    %227 = vmatpush1.msra.mxu0 0.0
    %228 = vmatprep.subr.mxu0 0.0
    %229 = vmatpush1.msra.mxu0 0.0
    %230 = vmatprep.subr.mxu0 0.0
    %231 = vmatpush1.msra.mxu0 0.0
    %232 = vmatprep.subr.mxu0 0.0
    %233 = vmatpush1.msra.mxu0 0.0
    %234 = vmatprep.subr.mxu0 0.0
    %235 = vmatpush1.msra.mxu0 0.0
    %236 = vmatprep.subr.mxu0 0.0
    %237 = vmatpush1.msra.mxu0 0.0
    %238 = vmatprep.subr.mxu0 0.0
    %239 = vmatpush1.msra.mxu0 0.0
    %240 = vmatprep.subr.mxu0 0.0
    %241 = vmatpush1.msra.mxu0 0.0
    %242 = vmatprep.subr.mxu0 0.0
    %243 = vmatpush1.msra.mxu0 0.0
    %244 = vmatprep.subr.mxu0 0.0
    %245 = vmatpush1.msra.mxu0 0.0
    %246 = vmatprep.subr.mxu0 0.0
    %247 = vmatpush1.msra.mxu0 0.0
    %248 = vmatprep.subr.mxu0 0.0
    %249 = vmatpush1.msra.mxu0 0.0
    %250 = vmatprep.subr.mxu0 0.0
    %251 = vmatpush1.msra.mxu0 0.0
    %252 = vmatprep.mubr.f32.mxu0 0.0
    %v253 = vand.u32 %v81, 4294901760
    %254 = vmatmul.mubr.f32.gmra.mrb[0].mxu0 %v253
    %v255 = vpop.f32.mrb[0].mxu0
    %v256 = vadd.f32 %v160, %v255
    %v257 = vpop.f32.mrb[0].mxu0
    %258 = vdwg.mxu0
    %259 = vmatprep.subr.mxu0 0.0
    %v260 = vand.u32 %v67, 4294901760
    %v261 = vsub.f32 %v67, %v260
    %262 = vmatpush1.msra.mxu0 %v261
    %263 = vmatprep.subr.mxu0 0.0
    %v264 = vand.u32 %v68, 4294901760
    %v265 = vsub.f32 %v68, %v264
    %266 = vmatpush1.msra.mxu0 %v265
    %267 = vmatprep.subr.mxu0 0.0
    %v268 = vand.u32 %v69, 4294901760
    %v269 = vsub.f32 %v69, %v268
    %270 = vmatpush1.msra.mxu0 %v269
    %271 = vmatprep.subr.mxu0 0.0
    %v272 = vand.u32 %v70, 4294901760
    %v273 = vsub.f32 %v70, %v272
    %274 = vmatpush1.msra.mxu0 %v273
    %275 = vmatprep.subr.mxu0 0.0
    %v276 = vand.u32 %v71, 4294901760
    %v277 = vsub.f32 %v71, %v276
    %278 = vmatpush1.msra.mxu0 %v277
    %279 = vmatprep.subr.mxu0 0.0
    %280 = vmatpush1.msra.mxu0 0.0
    %281 = vmatprep.subr.mxu0 0.0
    %282 = vmatpush1.msra.mxu0 0.0
    %283 = vmatprep.subr.mxu0 0.0
    %284 = vmatpush1.msra.mxu0 0.0
    %285 = vmatprep.subr.mxu0 0.0
    %286 = vmatpush1.msra.mxu0 0.0
    %287 = vmatprep.subr.mxu0 0.0
    %288 = vmatpush1.msra.mxu0 0.0
    %289 = vmatprep.subr.mxu0 0.0
    %290 = vmatpush1.msra.mxu0 0.0
    %291 = vmatprep.subr.mxu0 0.0
    %292 = vmatpush1.msra.mxu0 0.0
    %293 = vmatprep.subr.mxu0 0.0
    %294 = vmatpush1.msra.mxu0 0.0
    %295 = vmatprep.subr.mxu0 0.0
    %296 = vmatpush1.msra.mxu0 0.0
    %297 = vmatprep.subr.mxu0 0.0
    %298 = vmatpush1.msra.mxu0 0.0
    %299 = vmatprep.subr.mxu0 0.0
    %300 = vmatpush1.msra.mxu0 0.0
    %301 = vmatprep.subr.mxu0 0.0
    %302 = vmatpush1.msra.mxu0 0.0
    %303 = vmatprep.subr.mxu0 0.0
    %304 = vmatpush1.msra.mxu0 0.0
    %305 = vmatprep.subr.mxu0 0.0
    %306 = vmatpush1.msra.mxu0 0.0
    %307 = vmatprep.subr.mxu0 0.0
    %308 = vmatpush1.msra.mxu0 0.0
    %309 = vmatprep.subr.mxu0 0.0
    %310 = vmatpush1.msra.mxu0 0.0
    %311 = vmatprep.subr.mxu0 0.0
    %312 = vmatpush1.msra.mxu0 0.0
    %313 = vmatprep.subr.mxu0 0.0
    %314 = vmatpush1.msra.mxu0 0.0
    %315 = vmatprep.subr.mxu0 0.0
    %316 = vmatpush1.msra.mxu0 0.0
    %317 = vmatprep.subr.mxu0 0.0
    %318 = vmatpush1.msra.mxu0 0.0
    %319 = vmatprep.subr.mxu0 0.0
    %320 = vmatpush1.msra.mxu0 0.0
    %321 = vmatprep.subr.mxu0 0.0
    %322 = vmatpush1.msra.mxu0 0.0
    %323 = vmatprep.subr.mxu0 0.0
    %324 = vmatpush1.msra.mxu0 0.0
    %325 = vmatprep.subr.mxu0 0.0
    %326 = vmatpush1.msra.mxu0 0.0
    %327 = vmatprep.subr.mxu0 0.0
    %328 = vmatpush1.msra.mxu0 0.0
    %329 = vmatprep.subr.mxu0 0.0
    %330 = vmatpush1.msra.mxu0 0.0
    %331 = vmatprep.subr.mxu0 0.0
    %332 = vmatpush1.msra.mxu0 0.0
    %333 = vmatprep.mubr.f32.mxu0 0.0
    %v334 = vand.u32 %v81, 4294901760
    %v335 = vsub.f32 %v81, %v334
    %336 = vmatmul.mubr.f32.gmra.mrb[0].mxu0 %v335
    %v337 = vpop.f32.mrb[0].mxu0
    %v338 = vadd.f32 %v256, %v337
    %v339 = vpop.f32.mrb[0].mxu0
    %340 = vdwg.mxu0
    %341 = vmatprep.subr.mxu0 0.0
    %v342 = vand.u32 %v67, 4294901760
    %343 = vmatpush1.msra.mxu0 %v342
    %344 = vmatprep.subr.mxu0 0.0
    %v345 = vand.u32 %v68, 4294901760
    %346 = vmatpush1.msra.mxu0 %v345
    %347 = vmatprep.subr.mxu0 0.0
    %v348 = vand.u32 %v69, 4294901760
    %349 = vmatpush1.msra.mxu0 %v348
    %350 = vmatprep.subr.mxu0 0.0
    %v351 = vand.u32 %v70, 4294901760
    %352 = vmatpush1.msra.mxu0 %v351
    %353 = vmatprep.subr.mxu0 0.0
    %v354 = vand.u32 %v71, 4294901760
    %355 = vmatpush1.msra.mxu0 %v354
    %356 = vmatprep.subr.mxu0 0.0
    %357 = vmatpush1.msra.mxu0 0.0
    %358 = vmatprep.subr.mxu0 0.0
    %359 = vmatpush1.msra.mxu0 0.0
    %360 = vmatprep.subr.mxu0 0.0
    %361 = vmatpush1.msra.mxu0 0.0
    %362 = vmatprep.subr.mxu0 0.0
    %363 = vmatpush1.msra.mxu0 0.0
    %364 = vmatprep.subr.mxu0 0.0
    %365 = vmatpush1.msra.mxu0 0.0
    %366 = vmatprep.subr.mxu0 0.0
    %367 = vmatpush1.msra.mxu0 0.0
    %368 = vmatprep.subr.mxu0 0.0
    %369 = vmatpush1.msra.mxu0 0.0
    %370 = vmatprep.subr.mxu0 0.0
    %371 = vmatpush1.msra.mxu0 0.0
    %372 = vmatprep.subr.mxu0 0.0
    %373 = vmatpush1.msra.mxu0 0.0
    %374 = vmatprep.subr.mxu0 0.0
    %375 = vmatpush1.msra.mxu0 0.0
    %376 = vmatprep.subr.mxu0 0.0
    %377 = vmatpush1.msra.mxu0 0.0
    %378 = vmatprep.subr.mxu0 0.0
    %379 = vmatpush1.msra.mxu0 0.0
    %380 = vmatprep.subr.mxu0 0.0
    %381 = vmatpush1.msra.mxu0 0.0
    %382 = vmatprep.subr.mxu0 0.0
    %383 = vmatpush1.msra.mxu0 0.0
    %384 = vmatprep.subr.mxu0 0.0
    %385 = vmatpush1.msra.mxu0 0.0
    %386 = vmatprep.subr.mxu0 0.0
    %387 = vmatpush1.msra.mxu0 0.0
    %388 = vmatprep.subr.mxu0 0.0
    %389 = vmatpush1.msra.mxu0 0.0
    %390 = vmatprep.subr.mxu0 0.0
    %391 = vmatpush1.msra.mxu0 0.0
    %392 = vmatprep.subr.mxu0 0.0
    %393 = vmatpush1.msra.mxu0 0.0
    %394 = vmatprep.subr.mxu0 0.0
    %395 = vmatpush1.msra.mxu0 0.0
    %396 = vmatprep.subr.mxu0 0.0
    %397 = vmatpush1.msra.mxu0 0.0
    %398 = vmatprep.subr.mxu0 0.0
    %399 = vmatpush1.msra.mxu0 0.0
    %400 = vmatprep.subr.mxu0 0.0
    %401 = vmatpush1.msra.mxu0 0.0
    %402 = vmatprep.subr.mxu0 0.0
    %403 = vmatpush1.msra.mxu0 0.0
    %404 = vmatprep.subr.mxu0 0.0
    %405 = vmatpush1.msra.mxu0 0.0
    %406 = vmatprep.subr.mxu0 0.0
    %407 = vmatpush1.msra.mxu0 0.0
    %408 = vmatprep.subr.mxu0 0.0
    %409 = vmatpush1.msra.mxu0 0.0
    %410 = vmatprep.mubr.f32.mxu0 0.0
    %v411 = vand.u32 %v81, 4294901760
    %v412 = vsub.f32 %v81, %v411
    %v413 = vand.u32 %v412, 4294901760
    %414 = vmatmul.mubr.f32.gmra.mrb[0].mxu0 %v413
    %v415 = vpop.f32.mrb[0].mxu0
    %v416 = vadd.f32 %v338, %v415
    %v417 = vpop.f32.mrb[0].mxu0
    %418 = vdwg.mxu0
    %419 = vmatprep.subr.mxu0 0.0
    %v420 = vand.u32 %v67, 4294901760
    %v421 = vsub.f32 %v67, %v420
    %v422 = vand.u32 %v421, 4294901760
    %423 = vmatpush1.msra.mxu0 %v422
    %424 = vmatprep.subr.mxu0 0.0
    %v425 = vand.u32 %v68, 4294901760
    %v426 = vsub.f32 %v68, %v425
    %v427 = vand.u32 %v426, 4294901760
    %428 = vmatpush1.msra.mxu0 %v427
    %429 = vmatprep.subr.mxu0 0.0
    %v430 = vand.u32 %v69, 4294901760
    %v431 = vsub.f32 %v69, %v430
    %v432 = vand.u32 %v431, 4294901760
    %433 = vmatpush1.msra.mxu0 %v432
    %434 = vmatprep.subr.mxu0 0.0
    %v435 = vand.u32 %v70, 4294901760
    %v436 = vsub.f32 %v70, %v435
    %v437 = vand.u32 %v436, 4294901760
    %438 = vmatpush1.msra.mxu0 %v437
    %439 = vmatprep.subr.mxu0 0.0
    %v440 = vand.u32 %v71, 4294901760
    %v441 = vsub.f32 %v71, %v440
    %v442 = vand.u32 %v441, 4294901760
    %443 = vmatpush1.msra.mxu0 %v442
    %444 = vmatprep.subr.mxu0 0.0
    %445 = vmatpush1.msra.mxu0 0.0
    %446 = vmatprep.subr.mxu0 0.0
    %447 = vmatpush1.msra.mxu0 0.0
    %448 = vmatprep.subr.mxu0 0.0
    %449 = vmatpush1.msra.mxu0 0.0
    %450 = vmatprep.subr.mxu0 0.0
    %451 = vmatpush1.msra.mxu0 0.0
    %452 = vmatprep.subr.mxu0 0.0
    %453 = vmatpush1.msra.mxu0 0.0
    %454 = vmatprep.subr.mxu0 0.0
    %455 = vmatpush1.msra.mxu0 0.0
    %456 = vmatprep.subr.mxu0 0.0
    %457 = vmatpush1.msra.mxu0 0.0
    %458 = vmatprep.subr.mxu0 0.0
    %459 = vmatpush1.msra.mxu0 0.0
    %460 = vmatprep.subr.mxu0 0.0
    %461 = vmatpush1.msra.mxu0 0.0
    %462 = vmatprep.subr.mxu0 0.0
    %463 = vmatpush1.msra.mxu0 0.0
    %464 = vmatprep.subr.mxu0 0.0
    %465 = vmatpush1.msra.mxu0 0.0
    %466 = vmatprep.subr.mxu0 0.0
    %467 = vmatpush1.msra.mxu0 0.0
    %468 = vmatprep.subr.mxu0 0.0
    %469 = vmatpush1.msra.mxu0 0.0
    %470 = vmatprep.subr.mxu0 0.0
    %471 = vmatpush1.msra.mxu0 0.0
    %472 = vmatprep.subr.mxu0 0.0
    %473 = vmatpush1.msra.mxu0 0.0
    %474 = vmatprep.subr.mxu0 0.0
    %475 = vmatpush1.msra.mxu0 0.0
    %476 = vmatprep.subr.mxu0 0.0
    %477 = vmatpush1.msra.mxu0 0.0
    %478 = vmatprep.subr.mxu0 0.0
    %479 = vmatpush1.msra.mxu0 0.0
    %480 = vmatprep.subr.mxu0 0.0
    %481 = vmatpush1.msra.mxu0 0.0
    %482 = vmatprep.subr.mxu0 0.0
    %483 = vmatpush1.msra.mxu0 0.0
    %484 = vmatprep.subr.mxu0 0.0
    %485 = vmatpush1.msra.mxu0 0.0
    %486 = vmatprep.subr.mxu0 0.0
    %487 = vmatpush1.msra.mxu0 0.0
    %488 = vmatprep.subr.mxu0 0.0
    %489 = vmatpush1.msra.mxu0 0.0
    %490 = vmatprep.subr.mxu0 0.0
    %491 = vmatpush1.msra.mxu0 0.0
    %492 = vmatprep.subr.mxu0 0.0
    %493 = vmatpush1.msra.mxu0 0.0
    %494 = vmatprep.subr.mxu0 0.0
    %495 = vmatpush1.msra.mxu0 0.0
    %496 = vmatprep.subr.mxu0 0.0
    %497 = vmatpush1.msra.mxu0 0.0
    %498 = vmatprep.mubr.f32.mxu0 0.0
    %v499 = vand.u32 %v81, 4294901760
    %500 = vmatmul.mubr.f32.gmra.mrb[0].mxu0 %v499
    %v501 = vpop.f32.mrb[0].mxu0
    %v502 = vadd.f32 %v416, %v501
    %v503 = vpop.f32.mrb[0].mxu0
    %504 = vdwg.mxu0
    %505 = vmatprep.subr.mxu0 0.0
    %v506 = vand.u32 %v67, 4294901760
    %507 = vmatpush1.msra.mxu0 %v506
    %508 = vmatprep.subr.mxu0 0.0
    %v509 = vand.u32 %v68, 4294901760
    %510 = vmatpush1.msra.mxu0 %v509
    %511 = vmatprep.subr.mxu0 0.0
    %v512 = vand.u32 %v69, 4294901760
    %513 = vmatpush1.msra.mxu0 %v512
    %514 = vmatprep.subr.mxu0 0.0
    %v515 = vand.u32 %v70, 4294901760
    %516 = vmatpush1.msra.mxu0 %v515
    %517 = vmatprep.subr.mxu0 0.0
    %v518 = vand.u32 %v71, 4294901760
    %519 = vmatpush1.msra.mxu0 %v518
    %520 = vmatprep.subr.mxu0 0.0
    %521 = vmatpush1.msra.mxu0 0.0
    %522 = vmatprep.subr.mxu0 0.0
    %523 = vmatpush1.msra.mxu0 0.0
    %524 = vmatprep.subr.mxu0 0.0
    %525 = vmatpush1.msra.mxu0 0.0
    %526 = vmatprep.subr.mxu0 0.0
    %527 = vmatpush1.msra.mxu0 0.0
    %528 = vmatprep.subr.mxu0 0.0
    %529 = vmatpush1.msra.mxu0 0.0
    %530 = vmatprep.subr.mxu0 0.0
    %531 = vmatpush1.msra.mxu0 0.0
    %532 = vmatprep.subr.mxu0 0.0
    %533 = vmatpush1.msra.mxu0 0.0
    %534 = vmatprep.subr.mxu0 0.0
    %535 = vmatpush1.msra.mxu0 0.0
    %536 = vmatprep.subr.mxu0 0.0
    %537 = vmatpush1.msra.mxu0 0.0
    %538 = vmatprep.subr.mxu0 0.0
    %539 = vmatpush1.msra.mxu0 0.0
    %540 = vmatprep.subr.mxu0 0.0
    %541 = vmatpush1.msra.mxu0 0.0
    %542 = vmatprep.subr.mxu0 0.0
    %543 = vmatpush1.msra.mxu0 0.0
    %544 = vmatprep.subr.mxu0 0.0
    %545 = vmatpush1.msra.mxu0 0.0
    %546 = vmatprep.subr.mxu0 0.0
    %547 = vmatpush1.msra.mxu0 0.0
    %548 = vmatprep.subr.mxu0 0.0
    %549 = vmatpush1.msra.mxu0 0.0
    %550 = vmatprep.subr.mxu0 0.0
    %551 = vmatpush1.msra.mxu0 0.0
    %552 = vmatprep.subr.mxu0 0.0
    %553 = vmatpush1.msra.mxu0 0.0
    %554 = vmatprep.subr.mxu0 0.0
    %555 = vmatpush1.msra.mxu0 0.0
    %556 = vmatprep.subr.mxu0 0.0
    %557 = vmatpush1.msra.mxu0 0.0
    %558 = vmatprep.subr.mxu0 0.0
    %559 = vmatpush1.msra.mxu0 0.0
    %560 = vmatprep.subr.mxu0 0.0
    %561 = vmatpush1.msra.mxu0 0.0
    %562 = vmatprep.subr.mxu0 0.0
    %563 = vmatpush1.msra.mxu0 0.0
    %564 = vmatprep.subr.mxu0 0.0
    %565 = vmatpush1.msra.mxu0 0.0
    %566 = vmatprep.subr.mxu0 0.0
    %567 = vmatpush1.msra.mxu0 0.0
    %568 = vmatprep.subr.mxu0 0.0
    %569 = vmatpush1.msra.mxu0 0.0
    %570 = vmatprep.subr.mxu0 0.0
    %571 = vmatpush1.msra.mxu0 0.0
    %572 = vmatprep.subr.mxu0 0.0
    %573 = vmatpush1.msra.mxu0 0.0
    %574 = vmatprep.mubr.f32.mxu0 0.0
    %v575 = vand.u32 %v81, 4294901760
    %576 = vmatmul.mubr.f32.gmra.mrb[0].mxu0 %v575
    %v577 = vpop.f32.mrb[0].mxu0
    %v578 = vadd.f32 %v502, %v577
    %v579 = vpop.f32.mrb[0].mxu0
    %580 = vdwg.mxu0
    %v581 = vmax.f32 %v578, 0.0
    %v582 = vld [vmem:[%s4] sm:$0xff]
    %v583 = vld [vmem:[%s4 + $0x8] sm:$0xff]
    %v584 = vld [vmem:[%s4 + $0x10] sm:$0xf]
    %v585 = vld [vmem:[%s5] sm:$0xff]
    %v586 = vld [vmem:[%s5 + $0x8] sm:$0xff]
    %v587 = vld [vmem:[%s5 + $0x10] sm:$0xff]
    %v588 = vld [vmem:[%s5 + $0x18] sm:$0xff]
    %v589 = vld [vmem:[%s5 + $0x20] sm:$0xff]
    %590 = vmatprep.subr.mxu0 0.0
    %v591 = vand.u32 %v585, 4294901760
    %592 = vmatpush1.msra.mxu0 %v591
    %593 = vmatprep.subr.mxu0 0.0
    %v594 = vand.u32 %v586, 4294901760
    %595 = vmatpush1.msra.mxu0 %v594
    %596 = vmatprep.subr.mxu0 0.0
    %v597 = vand.u32 %v587, 4294901760
    %598 = vmatpush1.msra.mxu0 %v597
    %599 = vmatprep.subr.mxu0 0.0
    %v600 = vand.u32 %v588, 4294901760
    %601 = vmatpush1.msra.mxu0 %v600
    %602 = vmatprep.subr.mxu0 0.0
    %v603 = vand.u32 %v589, 4294901760
    %604 = vmatpush1.msra.mxu0 %v603
    %605 = vmatprep.subr.mxu0 0.0
    %606 = vmatpush1.msra.mxu0 0.0
    %607 = vmatprep.subr.mxu0 0.0
    %608 = vmatpush1.msra.mxu0 0.0
    %609 = vmatprep.subr.mxu0 0.0
    %610 = vmatpush1.msra.mxu0 0.0
    %611 = vmatprep.subr.mxu0 0.0
    %612 = vmatpush1.msra.mxu0 0.0
    %613 = vmatprep.subr.mxu0 0.0
    %614 = vmatpush1.msra.mxu0 0.0
    %615 = vmatprep.subr.mxu0 0.0
    %616 = vmatpush1.msra.mxu0 0.0
    %617 = vmatprep.subr.mxu0 0.0
    %618 = vmatpush1.msra.mxu0 0.0
    %619 = vmatprep.subr.mxu0 0.0
    %620 = vmatpush1.msra.mxu0 0.0
    %621 = vmatprep.subr.mxu0 0.0
    %622 = vmatpush1.msra.mxu0 0.0
    %623 = vmatprep.subr.mxu0 0.0
    %624 = vmatpush1.msra.mxu0 0.0
    %625 = vmatprep.subr.mxu0 0.0
    %626 = vmatpush1.msra.mxu0 0.0
    %627 = vmatprep.subr.mxu0 0.0
    %628 = vmatpush1.msra.mxu0 0.0
    %629 = vmatprep.subr.mxu0 0.0
    %630 = vmatpush1.msra.mxu0 0.0
    %631 = vmatprep.subr.mxu0 0.0
    %632 = vmatpush1.msra.mxu0 0.0
    %633 = vmatprep.subr.mxu0 0.0
    %634 = vmatpush1.msra.mxu0 0.0
    %635 = vmatprep.subr.mxu0 0.0
    %636 = vmatpush1.msra.mxu0 0.0
    %637 = vmatprep.subr.mxu0 0.0
    %638 = vmatpush1.msra.mxu0 0.0
    %639 = vmatprep.subr.mxu0 0.0
    %640 = vmatpush1.msra.mxu0 0.0
    %641 = vmatprep.subr.mxu0 0.0
    %642 = vmatpush1.msra.mxu0 0.0
    %643 = vmatprep.subr.mxu0 0.0
    %644 = vmatpush1.msra.mxu0 0.0
    %645 = vmatprep.subr.mxu0 0.0
    %646 = vmatpush1.msra.mxu0 0.0
    %647 = vmatprep.subr.mxu0 0.0
    %648 = vmatpush1.msra.mxu0 0.0
    %649 = vmatprep.subr.mxu0 0.0
    %650 = vmatpush1.msra.mxu0 0.0
    %651 = vmatprep.subr.mxu0 0.0
    %652 = vmatpush1.msra.mxu0 0.0
    %653 = vmatprep.subr.mxu0 0.0
    %654 = vmatpush1.msra.mxu0 0.0
    %655 = vmatprep.subr.mxu0 0.0
    %656 = vmatpush1.msra.mxu0 0.0
    %657 = vmatprep.subr.mxu0 0.0
    %658 = vmatpush1.msra.mxu0 0.0
    %659 = vmatprep.mubr.f32.mxu0 0.0
    %v660 = vand.u32 %v81, 4294901760
    %v661 = vsub.f32 %v81, %v660
    %v662 = vand.u32 %v661, 4294901760
    %v663 = vsub.f32 %v661, %v662
    %v664 = vand.u32 %v663, 4294901760
    %665 = vmatmul.mubr.f32.gmra.mrb[0].mxu0 %v664
    %v666 = vpop.f32.mrb[0].mxu0
    %v667 = vadd.f32 0.0, %v666
    %v668 = vpop.f32.mrb[0].mxu0
    %669 = vdwg.mxu0
    %670 = vmatprep.subr.mxu0 0.0
    %v671 = vand.u32 %v585, 4294901760
    %v672 = vsub.f32 %v585, %v671
    %v673 = vand.u32 %v672, 4294901760
    %v674 = vsub.f32 %v672, %v673
    %v675 = vand.u32 %v674, 4294901760
    %676 = vmatpush1.msra.mxu0 %v675
    %677 = vmatprep.subr.mxu0 0.0
    %v678 = vand.u32 %v586, 4294901760
    %v679 = vsub.f32 %v586, %v678
    %v680 = vand.u32 %v679, 4294901760
    %v681 = vsub.f32 %v679, %v680
    %v682 = vand.u32 %v681, 4294901760
    %683 = vmatpush1.msra.mxu0 %v682
    %684 = vmatprep.subr.mxu0 0.0
    %v685 = vand.u32 %v587, 4294901760
    %v686 = vsub.f32 %v587, %v685
    %v687 = vand.u32 %v686, 4294901760
    %v688 = vsub.f32 %v686, %v687
    %v689 = vand.u32 %v688, 4294901760
    %690 = vmatpush1.msra.mxu0 %v689
    %691 = vmatprep.subr.mxu0 0.0
    %v692 = vand.u32 %v588, 4294901760
    %v693 = vsub.f32 %v588, %v692
    %v694 = vand.u32 %v693, 4294901760
    %v695 = vsub.f32 %v693, %v694
    %v696 = vand.u32 %v695, 4294901760
    %697 = vmatpush1.msra.mxu0 %v696
    %698 = vmatprep.subr.mxu0 0.0
    %v699 = vand.u32 %v589, 4294901760
    %v700 = vsub.f32 %v589, %v699
    %v701 = vand.u32 %v700, 4294901760
    %v702 = vsub.f32 %v700, %v701
    %v703 = vand.u32 %v702, 4294901760
    %704 = vmatpush1.msra.mxu0 %v703
    %705 = vmatprep.subr.mxu0 0.0
    %706 = vmatpush1.msra.mxu0 0.0
    %707 = vmatprep.subr.mxu0 0.0
    %708 = vmatpush1.msra.mxu0 0.0
    %709 = vmatprep.subr.mxu0 0.0
    %710 = vmatpush1.msra.mxu0 0.0
    %711 = vmatprep.subr.mxu0 0.0
    %712 = vmatpush1.msra.mxu0 0.0
    %713 = vmatprep.subr.mxu0 0.0
    %714 = vmatpush1.msra.mxu0 0.0
    %715 = vmatprep.subr.mxu0 0.0
    %716 = vmatpush1.msra.mxu0 0.0
    %717 = vmatprep.subr.mxu0 0.0
    %718 = vmatpush1.msra.mxu0 0.0
    %719 = vmatprep.subr.mxu0 0.0
    %720 = vmatpush1.msra.mxu0 0.0
    %721 = vmatprep.subr.mxu0 0.0
    %722 = vmatpush1.msra.mxu0 0.0
    %723 = vmatprep.subr.mxu0 0.0
    %724 = vmatpush1.msra.mxu0 0.0
    %725 = vmatprep.subr.mxu0 0.0
    %726 = vmatpush1.msra.mxu0 0.0
    %727 = vmatprep.subr.mxu0 0.0
    %728 = vmatpush1.msra.mxu0 0.0
    %729 = vmatprep.subr.mxu0 0.0
    %730 = vmatpush1.msra.mxu0 0.0
    %731 = vmatprep.subr.mxu0 0.0
    %732 = vmatpush1.msra.mxu0 0.0
    %733 = vmatprep.subr.mxu0 0.0
    %734 = vmatpush1.msra.mxu0 0.0
    %735 = vmatprep.subr.mxu0 0.0
    %736 = vmatpush1.msra.mxu0 0.0
    %737 = vmatprep.subr.mxu0 0.0
    %738 = vmatpush1.msra.mxu0 0.0
    %739 = vmatprep.subr.mxu0 0.0
    %740 = vmatpush1.msra.mxu0 0.0
    %741 = vmatprep.subr.mxu0 0.0
    %742 = vmatpush1.msra.mxu0 0.0
    %743 = vmatprep.subr.mxu0 0.0
    %744 = vmatpush1.msra.mxu0 0.0
    %745 = vmatprep.subr.mxu0 0.0
    %746 = vmatpush1.msra.mxu0 0.0
    %747 = vmatprep.subr.mxu0 0.0
    %748 = vmatpush1.msra.mxu0 0.0
    %749 = vmatprep.subr.mxu0 0.0
    %750 = vmatpush1.msra.mxu0 0.0
    %751 = vmatprep.subr.mxu0 0.0
    %752 = vmatpush1.msra.mxu0 0.0
    %753 = vmatprep.subr.mxu0 0.0
    %754 = vmatpush1.msra.mxu0 0.0
    %755 = vmatprep.subr.mxu0 0.0
    %756 = vmatpush1.msra.mxu0 0.0
    %757 = vmatprep.subr.mxu0 0.0
    %758 = vmatpush1.msra.mxu0 0.0
    %759 = vmatprep.mubr.f32.mxu0 0.0
    %v760 = vand.u32 %v81, 4294901760
    %761 = vmatmul.mubr.f32.gmra.mrb[0].mxu0 %v760
    %v762 = vpop.f32.mrb[0].mxu0
    %v763 = vadd.f32 %v667, %v762
    %v764 = vpop.f32.mrb[0].mxu0
    %765 = vdwg.mxu0
    %766 = vmatprep.subr.mxu0 0.0
    %v767 = vand.u32 %v585, 4294901760
    %v768 = vsub.f32 %v585, %v767
    %769 = vmatpush1.msra.mxu0 %v768
    %770 = vmatprep.subr.mxu0 0.0
    %v771 = vand.u32 %v586, 4294901760
    %v772 = vsub.f32 %v586, %v771
    %773 = vmatpush1.msra.mxu0 %v772
    %774 = vmatprep.subr.mxu0 0.0
    %v775 = vand.u32 %v587, 4294901760
    %v776 = vsub.f32 %v587, %v775
    %777 = vmatpush1.msra.mxu0 %v776
    %778 = vmatprep.subr.mxu0 0.0
    %v779 = vand.u32 %v588, 4294901760
    %v780 = vsub.f32 %v588, %v779
    %781 = vmatpush1.msra.mxu0 %v780
    %782 = vmatprep.subr.mxu0 0.0
    %v783 = vand.u32 %v589, 4294901760
    %v784 = vsub.f32 %v589, %v783
    %785 = vmatpush1.msra.mxu0 %v784
    %786 = vmatprep.subr.mxu0 0.0
    %787 = vmatpush1.msra.mxu0 0.0
    %788 = vmatprep.subr.mxu0 0.0
    %789 = vmatpush1.msra.mxu0 0.0
    %790 = vmatprep.subr.mxu0 0.0
    %791 = vmatpush1.msra.mxu0 0.0
    %792 = vmatprep.subr.mxu0 0.0
    %793 = vmatpush1.msra.mxu0 0.0
    %794 = vmatprep.subr.mxu0 0.0
    %795 = vmatpush1.msra.mxu0 0.0
    %796 = vmatprep.subr.mxu0 0.0
    %797 = vmatpush1.msra.mxu0 0.0
    %798 = vmatprep.subr.mxu0 0.0
    %799 = vmatpush1.msra.mxu0 0.0
    %800 = vmatprep.subr.mxu0 0.0
    %801 = vmatpush1.msra.mxu0 0.0
    %802 = vmatprep.subr.mxu0 0.0
    %803 = vmatpush1.msra.mxu0 0.0
    %804 = vmatprep.subr.mxu0 0.0
    %805 = vmatpush1.msra.mxu0 0.0
    %806 = vmatprep.subr.mxu0 0.0
    %807 = vmatpush1.msra.mxu0 0.0
    %808 = vmatprep.subr.mxu0 0.0
    %809 = vmatpush1.msra.mxu0 0.0
    %810 = vmatprep.subr.mxu0 0.0
    %811 = vmatpush1.msra.mxu0 0.0
    %812 = vmatprep.subr.mxu0 0.0
    %813 = vmatpush1.msra.mxu0 0.0
    %814 = vmatprep.subr.mxu0 0.0
    %815 = vmatpush1.msra.mxu0 0.0
    %816 = vmatprep.subr.mxu0 0.0
    %817 = vmatpush1.msra.mxu0 0.0
    %818 = vmatprep.subr.mxu0 0.0
    %819 = vmatpush1.msra.mxu0 0.0
    %820 = vmatprep.subr.mxu0 0.0
    %821 = vmatpush1.msra.mxu0 0.0
    %822 = vmatprep.subr.mxu0 0.0
    %823 = vmatpush1.msra.mxu0 0.0
    %824 = vmatprep.subr.mxu0 0.0
    %825 = vmatpush1.msra.mxu0 0.0
    %826 = vmatprep.subr.mxu0 0.0
    %827 = vmatpush1.msra.mxu0 0.0
    %828 = vmatprep.subr.mxu0 0.0
    %829 = vmatpush1.msra.mxu0 0.0
    %830 = vmatprep.subr.mxu0 0.0
    %831 = vmatpush1.msra.mxu0 0.0
    %832 = vmatprep.subr.mxu0 0.0
    %833 = vmatpush1.msra.mxu0 0.0
    %834 = vmatprep.subr.mxu0 0.0
    %835 = vmatpush1.msra.mxu0 0.0
    %836 = vmatprep.subr.mxu0 0.0
    %837 = vmatpush1.msra.mxu0 0.0
    %838 = vmatprep.subr.mxu0 0.0
    %839 = vmatpush1.msra.mxu0 0.0
    %840 = vmatprep.mubr.f32.mxu0 0.0
    %v841 = vand.u32 %v81, 4294901760
    %v842 = vsub.f32 %v81, %v841
    %843 = vmatmul.mubr.f32.gmra.mrb[0].mxu0 %v842
    %v844 = vpop.f32.mrb[0].mxu0
    %v845 = vadd.f32 %v763, %v844
    %v846 = vpop.f32.mrb[0].mxu0
    %847 = vdwg.mxu0
    %848 = vmatprep.subr.mxu0 0.0
    %v849 = vand.u32 %v585, 4294901760
    %850 = vmatpush1.msra.mxu0 %v849
    %851 = vmatprep.subr.mxu0 0.0
    %v852 = vand.u32 %v586, 4294901760
    %853 = vmatpush1.msra.mxu0 %v852
    %854 = vmatprep.subr.mxu0 0.0
    %v855 = vand.u32 %v587, 4294901760
    %856 = vmatpush1.msra.mxu0 %v855
    %857 = vmatprep.subr.mxu0 0.0
    %v858 = vand.u32 %v588, 4294901760
    %859 = vmatpush1.msra.mxu0 %v858
    %860 = vmatprep.subr.mxu0 0.0
    %v861 = vand.u32 %v589, 4294901760
    %862 = vmatpush1.msra.mxu0 %v861
    %863 = vmatprep.subr.mxu0 0.0
    %864 = vmatpush1.msra.mxu0 0.0
    %865 = vmatprep.subr.mxu0 0.0
    %866 = vmatpush1.msra.mxu0 0.0
    %867 = vmatprep.subr.mxu0 0.0
    %868 = vmatpush1.msra.mxu0 0.0
    %869 = vmatprep.subr.mxu0 0.0
    %870 = vmatpush1.msra.mxu0 0.0
    %871 = vmatprep.subr.mxu0 0.0
    %872 = vmatpush1.msra.mxu0 0.0
    %873 = vmatprep.subr.mxu0 0.0
    %874 = vmatpush1.msra.mxu0 0.0
    %875 = vmatprep.subr.mxu0 0.0
    %876 = vmatpush1.msra.mxu0 0.0
    %877 = vmatprep.subr.mxu0 0.0
    %878 = vmatpush1.msra.mxu0 0.0
    %879 = vmatprep.subr.mxu0 0.0
    %880 = vmatpush1.msra.mxu0 0.0
    %881 = vmatprep.subr.mxu0 0.0
    %882 = vmatpush1.msra.mxu0 0.0
    %883 = vmatprep.subr.mxu0 0.0
    %884 = vmatpush1.msra.mxu0 0.0
    %885 = vmatprep.subr.mxu0 0.0
    %886 = vmatpush1.msra.mxu0 0.0
    %887 = vmatprep.subr.mxu0 0.0
    %888 = vmatpush1.msra.mxu0 0.0
    %889 = vmatprep.subr.mxu0 0.0
    %890 = vmatpush1.msra.mxu0 0.0
    %891 = vmatprep.subr.mxu0 0.0
    %892 = vmatpush1.msra.mxu0 0.0
    %893 = vmatprep.subr.mxu0 0.0
    %894 = vmatpush1.msra.mxu0 0.0
    %895 = vmatprep.subr.mxu0 0.0
    %896 = vmatpush1.msra.mxu0 0.0
    %897 = vmatprep.subr.mxu0 0.0
    %898 = vmatpush1.msra.mxu0 0.0
    %899 = vmatprep.subr.mxu0 0.0
    %900 = vmatpush1.msra.mxu0 0.0
    %901 = vmatprep.subr.mxu0 0.0
    %902 = vmatpush1.msra.mxu0 0.0
    %903 = vmatprep.subr.mxu0 0.0
    %904 = vmatpush1.msra.mxu0 0.0
    %905 = vmatprep.subr.mxu0 0.0
    %906 = vmatpush1.msra.mxu0 0.0
    %907 = vmatprep.subr.mxu0 0.0
    %908 = vmatpush1.msra.mxu0 0.0
    %909 = vmatprep.subr.mxu0 0.0
    %910 = vmatpush1.msra.mxu0 0.0
    %911 = vmatprep.subr.mxu0 0.0
    %912 = vmatpush1.msra.mxu0 0.0
    %913 = vmatprep.subr.mxu0 0.0
    %914 = vmatpush1.msra.mxu0 0.0
    %915 = vmatprep.subr.mxu0 0.0
    %916 = vmatpush1.msra.mxu0 0.0
    %917 = vmatprep.mubr.f32.mxu0 0.0
    %v918 = vand.u32 %v81, 4294901760
    %v919 = vsub.f32 %v81, %v918
    %v920 = vand.u32 %v919, 4294901760
    %921 = vmatmul.mubr.f32.gmra.mrb[0].mxu0 %v920
    %v922 = vpop.f32.mrb[0].mxu0
    %v923 = vadd.f32 %v845, %v922
    %v924 = vpop.f32.mrb[0].mxu0
    %925 = vdwg.mxu0
    %926 = vmatprep.subr.mxu0 0.0
    %v927 = vand.u32 %v585, 4294901760
    %v928 = vsub.f32 %v585, %v927
    %v929 = vand.u32 %v928, 4294901760
    %930 = vmatpush1.msra.mxu0 %v929
    %931 = vmatprep.subr.mxu0 0.0
    %v932 = vand.u32 %v586, 4294901760
    %v933 = vsub.f32 %v586, %v932
    %v934 = vand.u32 %v933, 4294901760
    %935 = vmatpush1.msra.mxu0 %v934
    %936 = vmatprep.subr.mxu0 0.0
    %v937 = vand.u32 %v587, 4294901760
    %v938 = vsub.f32 %v587, %v937
    %v939 = vand.u32 %v938, 4294901760
    %940 = vmatpush1.msra.mxu0 %v939
    %941 = vmatprep.subr.mxu0 0.0
    %v942 = vand.u32 %v588, 4294901760
    %v943 = vsub.f32 %v588, %v942
    %v944 = vand.u32 %v943, 4294901760
    %945 = vmatpush1.msra.mxu0 %v944
    %946 = vmatprep.subr.mxu0 0.0
    %v947 = vand.u32 %v589, 4294901760
    %v948 = vsub.f32 %v589, %v947
    %v949 = vand.u32 %v948, 4294901760
    %950 = vmatpush1.msra.mxu0 %v949
    %951 = vmatprep.subr.mxu0 0.0
    %952 = vmatpush1.msra.mxu0 0.0
    %953 = vmatprep.subr.mxu0 0.0
    %954 = vmatpush1.msra.mxu0 0.0
    %955 = vmatprep.subr.mxu0 0.0
    %956 = vmatpush1.msra.mxu0 0.0
    %957 = vmatprep.subr.mxu0 0.0
    %958 = vmatpush1.msra.mxu0 0.0
    %959 = vmatprep.subr.mxu0 0.0
    %960 = vmatpush1.msra.mxu0 0.0
    %961 = vmatprep.subr.mxu0 0.0
    %962 = vmatpush1.msra.mxu0 0.0
    %963 = vmatprep.subr.mxu0 0.0
    %964 = vmatpush1.msra.mxu0 0.0
    %965 = vmatprep.subr.mxu0 0.0
    %966 = vmatpush1.msra.mxu0 0.0
    %967 = vmatprep.subr.mxu0 0.0
    %968 = vmatpush1.msra.mxu0 0.0
    %969 = vmatprep.subr.mxu0 0.0
    %970 = vmatpush1.msra.mxu0 0.0
    %971 = vmatprep.subr.mxu0 0.0
    %972 = vmatpush1.msra.mxu0 0.0
    %973 = vmatprep.subr.mxu0 0.0
    %974 = vmatpush1.msra.mxu0 0.0
    %975 = vmatprep.subr.mxu0 0.0
    %976 = vmatpush1.msra.mxu0 0.0
    %977 = vmatprep.subr.mxu0 0.0
    %978 = vmatpush1.msra.mxu0 0.0
    %979 = vmatprep.subr.mxu0 0.0
    %980 = vmatpush1.msra.mxu0 0.0
    %981 = vmatprep.subr.mxu0 0.0
    %982 = vmatpush1.msra.mxu0 0.0
    %983 = vmatprep.subr.mxu0 0.0
    %984 = vmatpush1.msra.mxu0 0.0
    %985 = vmatprep.subr.mxu0 0.0
    %986 = vmatpush1.msra.mxu0 0.0
    %987 = vmatprep.subr.mxu0 0.0
    %988 = vmatpush1.msra.mxu0 0.0
    %989 = vmatprep.subr.mxu0 0.0
    %990 = vmatpush1.msra.mxu0 0.0
    %991 = vmatprep.subr.mxu0 0.0
    %992 = vmatpush1.msra.mxu0 0.0
    %993 = vmatprep.subr.mxu0 0.0
    %994 = vmatpush1.msra.mxu0 0.0
    %995 = vmatprep.subr.mxu0 0.0
    %996 = vmatpush1.msra.mxu0 0.0
    %997 = vmatprep.subr.mxu0 0.0
    %998 = vmatpush1.msra.mxu0 0.0
    %999 = vmatprep.subr.mxu0 0.0
    %1000 = vmatpush1.msra.mxu0 0.0
    %1001 = vmatprep.subr.mxu0 0.0
    %1002 = vmatpush1.msra.mxu0 0.0
    %1003 = vmatprep.subr.mxu0 0.0
    %1004 = vmatpush1.msra.mxu0 0.0
    %1005 = vmatprep.mubr.f32.mxu0 0.0
    %v1006 = vand.u32 %v81, 4294901760
    %1007 = vmatmul.mubr.f32.gmra.mrb[0].mxu0 %v1006
    %v1008 = vpop.f32.mrb[0].mxu0
    %v1009 = vadd.f32 %v923, %v1008
    %v1010 = vpop.f32.mrb[0].mxu0
    %1011 = vdwg.mxu0
    %1012 = vmatprep.subr.mxu0 0.0
    %v1013 = vand.u32 %v585, 4294901760
    %1014 = vmatpush1.msra.mxu0 %v1013
    %1015 = vmatprep.subr.mxu0 0.0
    %v1016 = vand.u32 %v586, 4294901760
    %1017 = vmatpush1.msra.mxu0 %v1016
    %1018 = vmatprep.subr.mxu0 0.0
    %v1019 = vand.u32 %v587, 4294901760
    %1020 = vmatpush1.msra.mxu0 %v1019
    %1021 = vmatprep.subr.mxu0 0.0
    %v1022 = vand.u32 %v588, 4294901760
    %1023 = vmatpush1.msra.mxu0 %v1022
    %1024 = vmatprep.subr.mxu0 0.0
    %v1025 = vand.u32 %v589, 4294901760
    %1026 = vmatpush1.msra.mxu0 %v1025
    %1027 = vmatprep.subr.mxu0 0.0
    %1028 = vmatpush1.msra.mxu0 0.0
    %1029 = vmatprep.subr.mxu0 0.0
    %1030 = vmatpush1.msra.mxu0 0.0
    %1031 = vmatprep.subr.mxu0 0.0
    %1032 = vmatpush1.msra.mxu0 0.0
    %1033 = vmatprep.subr.mxu0 0.0
    %1034 = vmatpush1.msra.mxu0 0.0
    %1035 = vmatprep.subr.mxu0 0.0
    %1036 = vmatpush1.msra.mxu0 0.0
    %1037 = vmatprep.subr.mxu0 0.0
    %1038 = vmatpush1.msra.mxu0 0.0
    %1039 = vmatprep.subr.mxu0 0.0
    %1040 = vmatpush1.msra.mxu0 0.0
    %1041 = vmatprep.subr.mxu0 0.0
    %1042 = vmatpush1.msra.mxu0 0.0
    %1043 = vmatprep.subr.mxu0 0.0
    %1044 = vmatpush1.msra.mxu0 0.0
    %1045 = vmatprep.subr.mxu0 0.0
    %1046 = vmatpush1.msra.mxu0 0.0
    %1047 = vmatprep.subr.mxu0 0.0
    %1048 = vmatpush1.msra.mxu0 0.0
    %1049 = vmatprep.subr.mxu0 0.0
    %1050 = vmatpush1.msra.mxu0 0.0
    %1051 = vmatprep.subr.mxu0 0.0
    %1052 = vmatpush1.msra.mxu0 0.0
    %1053 = vmatprep.subr.mxu0 0.0
    %1054 = vmatpush1.msra.mxu0 0.0
    %1055 = vmatprep.subr.mxu0 0.0
    %1056 = vmatpush1.msra.mxu0 0.0
    %1057 = vmatprep.subr.mxu0 0.0
    %1058 = vmatpush1.msra.mxu0 0.0
    %1059 = vmatprep.subr.mxu0 0.0
    %1060 = vmatpush1.msra.mxu0 0.0
    %1061 = vmatprep.subr.mxu0 0.0
    %1062 = vmatpush1.msra.mxu0 0.0
    %1063 = vmatprep.subr.mxu0 0.0
    %1064 = vmatpush1.msra.mxu0 0.0
    %1065 = vmatprep.subr.mxu0 0.0
    %1066 = vmatpush1.msra.mxu0 0.0
    %1067 = vmatprep.subr.mxu0 0.0
    %1068 = vmatpush1.msra.mxu0 0.0
    %1069 = vmatprep.subr.mxu0 0.0
    %1070 = vmatpush1.msra.mxu0 0.0
    %1071 = vmatprep.subr.mxu0 0.0
    %1072 = vmatpush1.msra.mxu0 0.0
    %1073 = vmatprep.subr.mxu0 0.0
    %1074 = vmatpush1.msra.mxu0 0.0
    %1075 = vmatprep.subr.mxu0 0.0
    %1076 = vmatpush1.msra.mxu0 0.0
    %1077 = vmatprep.subr.mxu0 0.0
    %1078 = vmatpush1.msra.mxu0 0.0
    %1079 = vmatprep.subr.mxu0 0.0
    %1080 = vmatpush1.msra.mxu0 0.0
    %1081 = vmatprep.mubr.f32.mxu0 0.0
    %v1082 = vand.u32 %v81, 4294901760
    %1083 = vmatmul.mubr.f32.gmra.mrb[0].mxu0 %v1082
    %v1084 = vpop.f32.mrb[0].mxu0
    %v1085 = vadd.f32 %v1009, %v1084
    %v1086 = vpop.f32.mrb[0].mxu0
    %1087 = vdwg.mxu0
    %vm1088 = vcmask 162816
    %v1090 = vsel %vm1088, %v581, 0
    %vm1092 = vcmask 1043456
    %v1094 = vsel %vm1092, %v584, 0
    %1096 = vmatprep.subr.mxu0 0.0
    %v1097 = vand.u32 %v582, 4294901760
    %1098 = vmatpush1.msra.mxu0 %v1097
    %1099 = vmatprep.subr.mxu0 0.0
    %v1100 = vand.u32 %v583, 4294901760
    %1101 = vmatpush1.msra.mxu0 %v1100
    %1102 = vmatprep.subr.mxu0 0.0
    %v1103 = vand.u32 %v1094, 4294901760
    %1104 = vmatpush1.msra.mxu0 %v1103
    %1105 = vmatprep.subr.mxu0 0.0
    %1106 = vmatpush1.msra.mxu0 0.0
    %1107 = vmatprep.subr.mxu0 0.0
    %1108 = vmatpush1.msra.mxu0 0.0
    %1109 = vmatprep.subr.mxu0 0.0
    %1110 = vmatpush1.msra.mxu0 0.0
    %1111 = vmatprep.subr.mxu0 0.0
    %1112 = vmatpush1.msra.mxu0 0.0
    %1113 = vmatprep.subr.mxu0 0.0
    %1114 = vmatpush1.msra.mxu0 0.0
    %1115 = vmatprep.subr.mxu0 0.0
    %1116 = vmatpush1.msra.mxu0 0.0
    %1117 = vmatprep.subr.mxu0 0.0
    %1118 = vmatpush1.msra.mxu0 0.0
    %1119 = vmatprep.subr.mxu0 0.0
    %1120 = vmatpush1.msra.mxu0 0.0
    %1121 = vmatprep.subr.mxu0 0.0
    %1122 = vmatpush1.msra.mxu0 0.0
    %1123 = vmatprep.subr.mxu0 0.0
    %1124 = vmatpush1.msra.mxu0 0.0
    %1125 = vmatprep.subr.mxu0 0.0
    %1126 = vmatpush1.msra.mxu0 0.0
    %1127 = vmatprep.subr.mxu0 0.0
    %1128 = vmatpush1.msra.mxu0 0.0
    %1129 = vmatprep.subr.mxu0 0.0
    %1130 = vmatpush1.msra.mxu0 0.0
    %1131 = vmatprep.subr.mxu0 0.0
    %1132 = vmatpush1.msra.mxu0 0.0
    %1133 = vmatprep.subr.mxu0 0.0
    %1134 = vmatpush1.msra.mxu0 0.0
    %1135 = vmatprep.subr.mxu0 0.0
    %1136 = vmatpush1.msra.mxu0 0.0
    %1137 = vmatprep.subr.mxu0 0.0
    %1138 = vmatpush1.msra.mxu0 0.0
    %1139 = vmatprep.subr.mxu0 0.0
    %1140 = vmatpush1.msra.mxu0 0.0
    %1141 = vmatprep.subr.mxu0 0.0
    %1142 = vmatpush1.msra.mxu0 0.0
    %1143 = vmatprep.subr.mxu0 0.0
    %1144 = vmatpush1.msra.mxu0 0.0
    %1145 = vmatprep.subr.mxu0 0.0
    %1146 = vmatpush1.msra.mxu0 0.0
    %1147 = vmatprep.subr.mxu0 0.0
    %1148 = vmatpush1.msra.mxu0 0.0
    %1149 = vmatprep.subr.mxu0 0.0
    %1150 = vmatpush1.msra.mxu0 0.0
    %1151 = vmatprep.subr.mxu0 0.0
    %1152 = vmatpush1.msra.mxu0 0.0
    %1153 = vmatprep.subr.mxu0 0.0
    %1154 = vmatpush1.msra.mxu0 0.0
    %1155 = vmatprep.subr.mxu0 0.0
    %1156 = vmatpush1.msra.mxu0 0.0
    %1157 = vmatprep.subr.mxu0 0.0
    %1158 = vmatpush1.msra.mxu0 0.0
    %1159 = vmatprep.subr.mxu0 0.0
    %1160 = vmatpush1.msra.mxu0 0.0
    %1161 = vmatprep.subr.mxu0 0.0
    %1162 = vmatpush1.msra.mxu0 0.0
    %1163 = vmatprep.mubr.f32.mxu0 0.0
    %v1164 = vand.u32 %v1090, 4294901760
    %v1165 = vsub.f32 %v1090, %v1164
    %v1166 = vand.u32 %v1165, 4294901760
    %v1167 = vsub.f32 %v1165, %v1166
    %v1168 = vand.u32 %v1167, 4294901760
    %1169 = vmatmul.mubr.f32.gmra.mrb[0].mxu0 %v1168
    %v1170 = vpop.f32.mrb[0].mxu0
    %v1171 = vadd.f32 %v1085, %v1170
    %v1172 = vpop.f32.mrb[0].mxu0
    %1173 = vdwg.mxu0
    %1174 = vmatprep.subr.mxu0 0.0
    %v1175 = vand.u32 %v582, 4294901760
    %v1176 = vsub.f32 %v582, %v1175
    %v1177 = vand.u32 %v1176, 4294901760
    %v1178 = vsub.f32 %v1176, %v1177
    %v1179 = vand.u32 %v1178, 4294901760
    %1180 = vmatpush1.msra.mxu0 %v1179
    %1181 = vmatprep.subr.mxu0 0.0
    %v1182 = vand.u32 %v583, 4294901760
    %v1183 = vsub.f32 %v583, %v1182
    %v1184 = vand.u32 %v1183, 4294901760
    %v1185 = vsub.f32 %v1183, %v1184
    %v1186 = vand.u32 %v1185, 4294901760
    %1187 = vmatpush1.msra.mxu0 %v1186
    %1188 = vmatprep.subr.mxu0 0.0
    %v1189 = vand.u32 %v1094, 4294901760
    %v1190 = vsub.f32 %v1094, %v1189
    %v1191 = vand.u32 %v1190, 4294901760
    %v1192 = vsub.f32 %v1190, %v1191
    %v1193 = vand.u32 %v1192, 4294901760
    %1194 = vmatpush1.msra.mxu0 %v1193
    %1195 = vmatprep.subr.mxu0 0.0
    %1196 = vmatpush1.msra.mxu0 0.0
    %1197 = vmatprep.subr.mxu0 0.0
    %1198 = vmatpush1.msra.mxu0 0.0
    %1199 = vmatprep.subr.mxu0 0.0
    %1200 = vmatpush1.msra.mxu0 0.0
    %1201 = vmatprep.subr.mxu0 0.0
    %1202 = vmatpush1.msra.mxu0 0.0
    %1203 = vmatprep.subr.mxu0 0.0
    %1204 = vmatpush1.msra.mxu0 0.0
    %1205 = vmatprep.subr.mxu0 0.0
    %1206 = vmatpush1.msra.mxu0 0.0
    %1207 = vmatprep.subr.mxu0 0.0
    %1208 = vmatpush1.msra.mxu0 0.0
    %1209 = vmatprep.subr.mxu0 0.0
    %1210 = vmatpush1.msra.mxu0 0.0
    %1211 = vmatprep.subr.mxu0 0.0
    %1212 = vmatpush1.msra.mxu0 0.0
    %1213 = vmatprep.subr.mxu0 0.0
    %1214 = vmatpush1.msra.mxu0 0.0
    %1215 = vmatprep.subr.mxu0 0.0
    %1216 = vmatpush1.msra.mxu0 0.0
    %1217 = vmatprep.subr.mxu0 0.0
    %1218 = vmatpush1.msra.mxu0 0.0
    %1219 = vmatprep.subr.mxu0 0.0
    %1220 = vmatpush1.msra.mxu0 0.0
    %1221 = vmatprep.subr.mxu0 0.0
    %1222 = vmatpush1.msra.mxu0 0.0
    %1223 = vmatprep.subr.mxu0 0.0
    %1224 = vmatpush1.msra.mxu0 0.0
    %1225 = vmatprep.subr.mxu0 0.0
    %1226 = vmatpush1.msra.mxu0 0.0
    %1227 = vmatprep.subr.mxu0 0.0
    %1228 = vmatpush1.msra.mxu0 0.0
    %1229 = vmatprep.subr.mxu0 0.0
    %1230 = vmatpush1.msra.mxu0 0.0
    %1231 = vmatprep.subr.mxu0 0.0
    %1232 = vmatpush1.msra.mxu0 0.0
    %1233 = vmatprep.subr.mxu0 0.0
    %1234 = vmatpush1.msra.mxu0 0.0
    %1235 = vmatprep.subr.mxu0 0.0
    %1236 = vmatpush1.msra.mxu0 0.0
    %1237 = vmatprep.subr.mxu0 0.0
    %1238 = vmatpush1.msra.mxu0 0.0
    %1239 = vmatprep.subr.mxu0 0.0
    %1240 = vmatpush1.msra.mxu0 0.0
    %1241 = vmatprep.subr.mxu0 0.0
    %1242 = vmatpush1.msra.mxu0 0.0
    %1243 = vmatprep.subr.mxu0 0.0
    %1244 = vmatpush1.msra.mxu0 0.0
    %1245 = vmatprep.subr.mxu0 0.0
    %1246 = vmatpush1.msra.mxu0 0.0
    %1247 = vmatprep.subr.mxu0 0.0
    %1248 = vmatpush1.msra.mxu0 0.0
    %1249 = vmatprep.subr.mxu0 0.0
    %1250 = vmatpush1.msra.mxu0 0.0
    %1251 = vmatprep.subr.mxu0 0.0
    %1252 = vmatpush1.msra.mxu0 0.0
    %1253 = vmatprep.mubr.f32.mxu0 0.0
    %v1254 = vand.u32 %v1090, 4294901760
    %1255 = vmatmul.mubr.f32.gmra.mrb[0].mxu0 %v1254
    %v1256 = vpop.f32.mrb[0].mxu0
    %v1257 = vadd.f32 %v1171, %v1256
    %v1258 = vpop.f32.mrb[0].mxu0
    %1259 = vdwg.mxu0
    %1260 = vmatprep.subr.mxu0 0.0
    %v1261 = vand.u32 %v582, 4294901760
    %v1262 = vsub.f32 %v582, %v1261
    %1263 = vmatpush1.msra.mxu0 %v1262
    %1264 = vmatprep.subr.mxu0 0.0
    %v1265 = vand.u32 %v583, 4294901760
    %v1266 = vsub.f32 %v583, %v1265
    %1267 = vmatpush1.msra.mxu0 %v1266
    %1268 = vmatprep.subr.mxu0 0.0
    %v1269 = vand.u32 %v1094, 4294901760
    %v1270 = vsub.f32 %v1094, %v1269
    %1271 = vmatpush1.msra.mxu0 %v1270
    %1272 = vmatprep.subr.mxu0 0.0
    %1273 = vmatpush1.msra.mxu0 0.0
    %1274 = vmatprep.subr.mxu0 0.0
    %1275 = vmatpush1.msra.mxu0 0.0
    %1276 = vmatprep.subr.mxu0 0.0
    %1277 = vmatpush1.msra.mxu0 0.0
    %1278 = vmatprep.subr.mxu0 0.0
    %1279 = vmatpush1.msra.mxu0 0.0
    %1280 = vmatprep.subr.mxu0 0.0
    %1281 = vmatpush1.msra.mxu0 0.0
    %1282 = vmatprep.subr.mxu0 0.0
    %1283 = vmatpush1.msra.mxu0 0.0
    %1284 = vmatprep.subr.mxu0 0.0
    %1285 = vmatpush1.msra.mxu0 0.0
    %1286 = vmatprep.subr.mxu0 0.0
    %1287 = vmatpush1.msra.mxu0 0.0
    %1288 = vmatprep.subr.mxu0 0.0
    %1289 = vmatpush1.msra.mxu0 0.0
    %1290 = vmatprep.subr.mxu0 0.0
    %1291 = vmatpush1.msra.mxu0 0.0
    %1292 = vmatprep.subr.mxu0 0.0
    %1293 = vmatpush1.msra.mxu0 0.0
    %1294 = vmatprep.subr.mxu0 0.0
    %1295 = vmatpush1.msra.mxu0 0.0
    %1296 = vmatprep.subr.mxu0 0.0
    %1297 = vmatpush1.msra.mxu0 0.0
    %1298 = vmatprep.subr.mxu0 0.0
    %1299 = vmatpush1.msra.mxu0 0.0
    %1300 = vmatprep.subr.mxu0 0.0
    %1301 = vmatpush1.msra.mxu0 0.0
    %1302 = vmatprep.subr.mxu0 0.0
    %1303 = vmatpush1.msra.mxu0 0.0
    %1304 = vmatprep.subr.mxu0 0.0
    %1305 = vmatpush1.msra.mxu0 0.0
    %1306 = vmatprep.subr.mxu0 0.0
    %1307 = vmatpush1.msra.mxu0 0.0
    %1308 = vmatprep.subr.mxu0 0.0
    %1309 = vmatpush1.msra.mxu0 0.0
    %1310 = vmatprep.subr.mxu0 0.0
    %1311 = vmatpush1.msra.mxu0 0.0
    %1312 = vmatprep.subr.mxu0 0.0
    %1313 = vmatpush1.msra.mxu0 0.0
    %1314 = vmatprep.subr.mxu0 0.0
    %1315 = vmatpush1.msra.mxu0 0.0
    %1316 = vmatprep.subr.mxu0 0.0
    %1317 = vmatpush1.msra.mxu0 0.0
    %1318 = vmatprep.subr.mxu0 0.0
    %1319 = vmatpush1.msra.mxu0 0.0
    %1320 = vmatprep.subr.mxu0 0.0
    %1321 = vmatpush1.msra.mxu0 0.0
    %1322 = vmatprep.subr.mxu0 0.0
    %1323 = vmatpush1.msra.mxu0 0.0
    %1324 = vmatprep.subr.mxu0 0.0
    %1325 = vmatpush1.msra.mxu0 0.0
    %1326 = vmatprep.subr.mxu0 0.0
    %1327 = vmatpush1.msra.mxu0 0.0
    %1328 = vmatprep.subr.mxu0 0.0
    %1329 = vmatpush1.msra.mxu0 0.0
    %1330 = vmatprep.mubr.f32.mxu0 0.0
    %v1331 = vand.u32 %v1090, 4294901760
    %v1332 = vsub.f32 %v1090, %v1331
    %1333 = vmatmul.mubr.f32.gmra.mrb[0].mxu0 %v1332
    %v1334 = vpop.f32.mrb[0].mxu0
    %v1335 = vadd.f32 %v1257, %v1334
    %v1336 = vpop.f32.mrb[0].mxu0
    %1337 = vdwg.mxu0
    %1338 = vmatprep.subr.mxu0 0.0
    %v1339 = vand.u32 %v582, 4294901760
    %1340 = vmatpush1.msra.mxu0 %v1339
    %1341 = vmatprep.subr.mxu0 0.0
    %v1342 = vand.u32 %v583, 4294901760
    %1343 = vmatpush1.msra.mxu0 %v1342
    %1344 = vmatprep.subr.mxu0 0.0
    %v1345 = vand.u32 %v1094, 4294901760
    %1346 = vmatpush1.msra.mxu0 %v1345
    %1347 = vmatprep.subr.mxu0 0.0
    %1348 = vmatpush1.msra.mxu0 0.0
    %1349 = vmatprep.subr.mxu0 0.0
    %1350 = vmatpush1.msra.mxu0 0.0
    %1351 = vmatprep.subr.mxu0 0.0
    %1352 = vmatpush1.msra.mxu0 0.0
    %1353 = vmatprep.subr.mxu0 0.0
    %1354 = vmatpush1.msra.mxu0 0.0
    %1355 = vmatprep.subr.mxu0 0.0
    %1356 = vmatpush1.msra.mxu0 0.0
    %1357 = vmatprep.subr.mxu0 0.0
    %1358 = vmatpush1.msra.mxu0 0.0
    %1359 = vmatprep.subr.mxu0 0.0
    %1360 = vmatpush1.msra.mxu0 0.0
    %1361 = vmatprep.subr.mxu0 0.0
    %1362 = vmatpush1.msra.mxu0 0.0
    %1363 = vmatprep.subr.mxu0 0.0
    %1364 = vmatpush1.msra.mxu0 0.0
    %1365 = vmatprep.subr.mxu0 0.0
    %1366 = vmatpush1.msra.mxu0 0.0
    %1367 = vmatprep.subr.mxu0 0.0
    %1368 = vmatpush1.msra.mxu0 0.0
    %1369 = vmatprep.subr.mxu0 0.0
    %1370 = vmatpush1.msra.mxu0 0.0
    %1371 = vmatprep.subr.mxu0 0.0
    %1372 = vmatpush1.msra.mxu0 0.0
    %1373 = vmatprep.subr.mxu0 0.0
    %1374 = vmatpush1.msra.mxu0 0.0
    %1375 = vmatprep.subr.mxu0 0.0
    %1376 = vmatpush1.msra.mxu0 0.0
    %1377 = vmatprep.subr.mxu0 0.0
    %1378 = vmatpush1.msra.mxu0 0.0
    %1379 = vmatprep.subr.mxu0 0.0
    %1380 = vmatpush1.msra.mxu0 0.0
    %1381 = vmatprep.subr.mxu0 0.0
    %1382 = vmatpush1.msra.mxu0 0.0
    %1383 = vmatprep.subr.mxu0 0.0
    %1384 = vmatpush1.msra.mxu0 0.0
    %1385 = vmatprep.subr.mxu0 0.0
    %1386 = vmatpush1.msra.mxu0 0.0
    %1387 = vmatprep.subr.mxu0 0.0
    %1388 = vmatpush1.msra.mxu0 0.0
    %1389 = vmatprep.subr.mxu0 0.0
    %1390 = vmatpush1.msra.mxu0 0.0
    %1391 = vmatprep.subr.mxu0 0.0
    %1392 = vmatpush1.msra.mxu0 0.0
    %1393 = vmatprep.subr.mxu0 0.0
    %1394 = vmatpush1.msra.mxu0 0.0
    %1395 = vmatprep.subr.mxu0 0.0
    %1396 = vmatpush1.msra.mxu0 0.0
    %1397 = vmatprep.subr.mxu0 0.0
    %1398 = vmatpush1.msra.mxu0 0.0
    %1399 = vmatprep.subr.mxu0 0.0
    %1400 = vmatpush1.msra.mxu0 0.0
    %1401 = vmatprep.subr.mxu0 0.0
    %1402 = vmatpush1.msra.mxu0 0.0
    %1403 = vmatprep.subr.mxu0 0.0
    %1404 = vmatpush1.msra.mxu0 0.0
    %1405 = vmatprep.mubr.f32.mxu0 0.0
    %v1406 = vand.u32 %v1090, 4294901760
    %v1407 = vsub.f32 %v1090, %v1406
    %v1408 = vand.u32 %v1407, 4294901760
    %1409 = vmatmul.mubr.f32.gmra.mrb[0].mxu0 %v1408
    %v1410 = vpop.f32.mrb[0].mxu0
    %v1411 = vadd.f32 %v1335, %v1410
    %v1412 = vpop.f32.mrb[0].mxu0
    %1413 = vdwg.mxu0
    %1414 = vmatprep.subr.mxu0 0.0
    %v1415 = vand.u32 %v582, 4294901760
    %v1416 = vsub.f32 %v582, %v1415
    %v1417 = vand.u32 %v1416, 4294901760
    %1418 = vmatpush1.msra.mxu0 %v1417
    %1419 = vmatprep.subr.mxu0 0.0
    %v1420 = vand.u32 %v583, 4294901760
    %v1421 = vsub.f32 %v583, %v1420
    %v1422 = vand.u32 %v1421, 4294901760
    %1423 = vmatpush1.msra.mxu0 %v1422
    %1424 = vmatprep.subr.mxu0 0.0
    %v1425 = vand.u32 %v1094, 4294901760
    %v1426 = vsub.f32 %v1094, %v1425
    %v1427 = vand.u32 %v1426, 4294901760
    %1428 = vmatpush1.msra.mxu0 %v1427
    %1429 = vmatprep.subr.mxu0 0.0
    %1430 = vmatpush1.msra.mxu0 0.0
    %1431 = vmatprep.subr.mxu0 0.0
    %1432 = vmatpush1.msra.mxu0 0.0
    %1433 = vmatprep.subr.mxu0 0.0
    %1434 = vmatpush1.msra.mxu0 0.0
    %1435 = vmatprep.subr.mxu0 0.0
    %1436 = vmatpush1.msra.mxu0 0.0
    %1437 = vmatprep.subr.mxu0 0.0
    %1438 = vmatpush1.msra.mxu0 0.0
    %1439 = vmatprep.subr.mxu0 0.0
    %1440 = vmatpush1.msra.mxu0 0.0
    %1441 = vmatprep.subr.mxu0 0.0
    %1442 = vmatpush1.msra.mxu0 0.0
    %1443 = vmatprep.subr.mxu0 0.0
    %1444 = vmatpush1.msra.mxu0 0.0
    %1445 = vmatprep.subr.mxu0 0.0
    %1446 = vmatpush1.msra.mxu0 0.0
    %1447 = vmatprep.subr.mxu0 0.0
    %1448 = vmatpush1.msra.mxu0 0.0
    %1449 = vmatprep.subr.mxu0 0.0
    %1450 = vmatpush1.msra.mxu0 0.0
    %1451 = vmatprep.subr.mxu0 0.0
    %1452 = vmatpush1.msra.mxu0 0.0
    %1453 = vmatprep.subr.mxu0 0.0
    %1454 = vmatpush1.msra.mxu0 0.0
    %1455 = vmatprep.subr.mxu0 0.0
    %1456 = vmatpush1.msra.mxu0 0.0
    %1457 = vmatprep.subr.mxu0 0.0
    %1458 = vmatpush1.msra.mxu0 0.0
    %1459 = vmatprep.subr.mxu0 0.0
    %1460 = vmatpush1.msra.mxu0 0.0
    %1461 = vmatprep.subr.mxu0 0.0
    %1462 = vmatpush1.msra.mxu0 0.0
    %1463 = vmatprep.subr.mxu0 0.0
    %1464 = vmatpush1.msra.mxu0 0.0
    %1465 = vmatprep.subr.mxu0 0.0
    %1466 = vmatpush1.msra.mxu0 0.0
    %1467 = vmatprep.subr.mxu0 0.0
    %1468 = vmatpush1.msra.mxu0 0.0
    %1469 = vmatprep.subr.mxu0 0.0
    %1470 = vmatpush1.msra.mxu0 0.0
    %1471 = vmatprep.subr.mxu0 0.0
    %1472 = vmatpush1.msra.mxu0 0.0
    %1473 = vmatprep.subr.mxu0 0.0
    %1474 = vmatpush1.msra.mxu0 0.0
    %1475 = vmatprep.subr.mxu0 0.0
    %1476 = vmatpush1.msra.mxu0 0.0
    %1477 = vmatprep.subr.mxu0 0.0
    %1478 = vmatpush1.msra.mxu0 0.0
    %1479 = vmatprep.subr.mxu0 0.0
    %1480 = vmatpush1.msra.mxu0 0.0
    %1481 = vmatprep.subr.mxu0 0.0
    %1482 = vmatpush1.msra.mxu0 0.0
    %1483 = vmatprep.subr.mxu0 0.0
    %1484 = vmatpush1.msra.mxu0 0.0
    %1485 = vmatprep.subr.mxu0 0.0
    %1486 = vmatpush1.msra.mxu0 0.0
    %1487 = vmatprep.mubr.f32.mxu0 0.0
    %v1488 = vand.u32 %v1090, 4294901760
    %1489 = vmatmul.mubr.f32.gmra.mrb[0].mxu0 %v1488
    %v1490 = vpop.f32.mrb[0].mxu0
    %v1491 = vadd.f32 %v1411, %v1490
    %v1492 = vpop.f32.mrb[0].mxu0
    %1493 = vdwg.mxu0
    %1494 = vmatprep.subr.mxu0 0.0
    %v1495 = vand.u32 %v582, 4294901760
    %1496 = vmatpush1.msra.mxu0 %v1495
    %1497 = vmatprep.subr.mxu0 0.0
    %v1498 = vand.u32 %v583, 4294901760
    %1499 = vmatpush1.msra.mxu0 %v1498
    %1500 = vmatprep.subr.mxu0 0.0
    %v1501 = vand.u32 %v1094, 4294901760
    %1502 = vmatpush1.msra.mxu0 %v1501
    %1503 = vmatprep.subr.mxu0 0.0
    %1504 = vmatpush1.msra.mxu0 0.0
    %1505 = vmatprep.subr.mxu0 0.0
    %1506 = vmatpush1.msra.mxu0 0.0
    %1507 = vmatprep.subr.mxu0 0.0
    %1508 = vmatpush1.msra.mxu0 0.0
    %1509 = vmatprep.subr.mxu0 0.0
    %1510 = vmatpush1.msra.mxu0 0.0
    %1511 = vmatprep.subr.mxu0 0.0
    %1512 = vmatpush1.msra.mxu0 0.0
    %1513 = vmatprep.subr.mxu0 0.0
    %1514 = vmatpush1.msra.mxu0 0.0
    %1515 = vmatprep.subr.mxu0 0.0
    %1516 = vmatpush1.msra.mxu0 0.0
    %1517 = vmatprep.subr.mxu0 0.0
    %1518 = vmatpush1.msra.mxu0 0.0
    %1519 = vmatprep.subr.mxu0 0.0
    %1520 = vmatpush1.msra.mxu0 0.0
    %1521 = vmatprep.subr.mxu0 0.0
    %1522 = vmatpush1.msra.mxu0 0.0
    %1523 = vmatprep.subr.mxu0 0.0
    %1524 = vmatpush1.msra.mxu0 0.0
    %1525 = vmatprep.subr.mxu0 0.0
    %1526 = vmatpush1.msra.mxu0 0.0
    %1527 = vmatprep.subr.mxu0 0.0
    %1528 = vmatpush1.msra.mxu0 0.0
    %1529 = vmatprep.subr.mxu0 0.0
    %1530 = vmatpush1.msra.mxu0 0.0
    %1531 = vmatprep.subr.mxu0 0.0
    %1532 = vmatpush1.msra.mxu0 0.0
    %1533 = vmatprep.subr.mxu0 0.0
    %1534 = vmatpush1.msra.mxu0 0.0
    %1535 = vmatprep.subr.mxu0 0.0
    %1536 = vmatpush1.msra.mxu0 0.0
    %1537 = vmatprep.subr.mxu0 0.0
    %1538 = vmatpush1.msra.mxu0 0.0
    %1539 = vmatprep.subr.mxu0 0.0
    %1540 = vmatpush1.msra.mxu0 0.0
    %1541 = vmatprep.subr.mxu0 0.0
    %1542 = vmatpush1.msra.mxu0 0.0
    %1543 = vmatprep.subr.mxu0 0.0
    %1544 = vmatpush1.msra.mxu0 0.0
    %1545 = vmatprep.subr.mxu0 0.0
    %1546 = vmatpush1.msra.mxu0 0.0
    %1547 = vmatprep.subr.mxu0 0.0
    %1548 = vmatpush1.msra.mxu0 0.0
    %1549 = vmatprep.subr.mxu0 0.0
    %1550 = vmatpush1.msra.mxu0 0.0
    %1551 = vmatprep.subr.mxu0 0.0
    %1552 = vmatpush1.msra.mxu0 0.0
    %1553 = vmatprep.subr.mxu0 0.0
    %1554 = vmatpush1.msra.mxu0 0.0
    %1555 = vmatprep.subr.mxu0 0.0
    %1556 = vmatpush1.msra.mxu0 0.0
    %1557 = vmatprep.subr.mxu0 0.0
    %1558 = vmatpush1.msra.mxu0 0.0
    %1559 = vmatprep.subr.mxu0 0.0
    %1560 = vmatpush1.msra.mxu0 0.0
    %1561 = vmatprep.mubr.f32.mxu0 0.0
    %v1562 = vand.u32 %v1090, 4294901760
    %1563 = vmatmul.mubr.f32.gmra.mrb[0].mxu0 %v1562
    %v1564 = vpop.f32.mrb[0].mxu0
    %v1565 = vadd.f32 %v1491, %v1564
    %v1566 = vpop.f32.mrb[0].mxu0
    %1567 = vdwg.mxu0
    %v1568 = vld [vmem:[%s6] sm:$0xff]
    %v1569 = vld [vmem:[%s6 + $0x8] sm:$0x1f]
    %vm1570 = vcmask 105472
    %v1572 = vsel %vm1570, %v66, 0
    %vm1574 = vcmask 1044480
    %v1576 = vsel %vm1574, %v1569, 0
    %1578 = vmatprep.subr.mxu0 0.0
    %v1579 = vand.u32 %v1568, 4294901760
    %1580 = vmatpush1.msra.mxu0 %v1579
    %1581 = vmatprep.subr.mxu0 0.0
    %v1582 = vand.u32 %v1576, 4294901760
    %1583 = vmatpush1.msra.mxu0 %v1582
    %1584 = vmatprep.subr.mxu0 0.0
    %1585 = vmatpush1.msra.mxu0 0.0
    %1586 = vmatprep.subr.mxu0 0.0
    %1587 = vmatpush1.msra.mxu0 0.0
    %1588 = vmatprep.subr.mxu0 0.0
    %1589 = vmatpush1.msra.mxu0 0.0
    %1590 = vmatprep.subr.mxu0 0.0
    %1591 = vmatpush1.msra.mxu0 0.0
    %1592 = vmatprep.subr.mxu0 0.0
    %1593 = vmatpush1.msra.mxu0 0.0
    %1594 = vmatprep.subr.mxu0 0.0
    %1595 = vmatpush1.msra.mxu0 0.0
    %1596 = vmatprep.subr.mxu0 0.0
    %1597 = vmatpush1.msra.mxu0 0.0
    %1598 = vmatprep.subr.mxu0 0.0
    %1599 = vmatpush1.msra.mxu0 0.0
    %1600 = vmatprep.subr.mxu0 0.0
    %1601 = vmatpush1.msra.mxu0 0.0
    %1602 = vmatprep.subr.mxu0 0.0
    %1603 = vmatpush1.msra.mxu0 0.0
    %1604 = vmatprep.subr.mxu0 0.0
    %1605 = vmatpush1.msra.mxu0 0.0
    %1606 = vmatprep.subr.mxu0 0.0
    %1607 = vmatpush1.msra.mxu0 0.0
    %1608 = vmatprep.subr.mxu0 0.0
    %1609 = vmatpush1.msra.mxu0 0.0
    %1610 = vmatprep.subr.mxu0 0.0
    %1611 = vmatpush1.msra.mxu0 0.0
    %1612 = vmatprep.subr.mxu0 0.0
    %1613 = vmatpush1.msra.mxu0 0.0
    %1614 = vmatprep.subr.mxu0 0.0
    %1615 = vmatpush1.msra.mxu0 0.0
    %1616 = vmatprep.subr.mxu0 0.0
    %1617 = vmatpush1.msra.mxu0 0.0
    %1618 = vmatprep.subr.mxu0 0.0
    %1619 = vmatpush1.msra.mxu0 0.0
    %1620 = vmatprep.subr.mxu0 0.0
    %1621 = vmatpush1.msra.mxu0 0.0
    %1622 = vmatprep.subr.mxu0 0.0
    %1623 = vmatpush1.msra.mxu0 0.0
    %1624 = vmatprep.subr.mxu0 0.0
    %1625 = vmatpush1.msra.mxu0 0.0
    %1626 = vmatprep.subr.mxu0 0.0
    %1627 = vmatpush1.msra.mxu0 0.0
    %1628 = vmatprep.subr.mxu0 0.0
    %1629 = vmatpush1.msra.mxu0 0.0
    %1630 = vmatprep.subr.mxu0 0.0
    %1631 = vmatpush1.msra.mxu0 0.0
    %1632 = vmatprep.subr.mxu0 0.0
    %1633 = vmatpush1.msra.mxu0 0.0
    %1634 = vmatprep.subr.mxu0 0.0
    %1635 = vmatpush1.msra.mxu0 0.0
    %1636 = vmatprep.subr.mxu0 0.0
    %1637 = vmatpush1.msra.mxu0 0.0
    %1638 = vmatprep.subr.mxu0 0.0
    %1639 = vmatpush1.msra.mxu0 0.0
    %1640 = vmatprep.subr.mxu0 0.0
    %1641 = vmatpush1.msra.mxu0 0.0
    %1642 = vmatprep.subr.mxu0 0.0
    %1643 = vmatpush1.msra.mxu0 0.0
    %1644 = vmatprep.mubr.f32.mxu0 0.0
    %v1645 = vand.u32 %v1572, 4294901760
    %v1646 = vsub.f32 %v1572, %v1645
    %v1647 = vand.u32 %v1646, 4294901760
    %v1648 = vsub.f32 %v1646, %v1647
    %v1649 = vand.u32 %v1648, 4294901760
    %1650 = vmatmul.mubr.f32.gmra.mrb[0].mxu0 %v1649
    %v1651 = vpop.f32.mrb[0].mxu0
    %v1652 = vadd.f32 0.0, %v1651
    %v1653 = vpop.f32.mrb[0].mxu0
    %1654 = vdwg.mxu0
    %1655 = vmatprep.subr.mxu0 0.0
    %v1656 = vand.u32 %v1568, 4294901760
    %v1657 = vsub.f32 %v1568, %v1656
    %v1658 = vand.u32 %v1657, 4294901760
    %v1659 = vsub.f32 %v1657, %v1658
    %v1660 = vand.u32 %v1659, 4294901760
    %1661 = vmatpush1.msra.mxu0 %v1660
    %1662 = vmatprep.subr.mxu0 0.0
    %v1663 = vand.u32 %v1576, 4294901760
    %v1664 = vsub.f32 %v1576, %v1663
    %v1665 = vand.u32 %v1664, 4294901760
    %v1666 = vsub.f32 %v1664, %v1665
    %v1667 = vand.u32 %v1666, 4294901760
    %1668 = vmatpush1.msra.mxu0 %v1667
    %1669 = vmatprep.subr.mxu0 0.0
    %1670 = vmatpush1.msra.mxu0 0.0
    %1671 = vmatprep.subr.mxu0 0.0
    %1672 = vmatpush1.msra.mxu0 0.0
    %1673 = vmatprep.subr.mxu0 0.0
    %1674 = vmatpush1.msra.mxu0 0.0
    %1675 = vmatprep.subr.mxu0 0.0
    %1676 = vmatpush1.msra.mxu0 0.0
    %1677 = vmatprep.subr.mxu0 0.0
    %1678 = vmatpush1.msra.mxu0 0.0
    %1679 = vmatprep.subr.mxu0 0.0
    %1680 = vmatpush1.msra.mxu0 0.0
    %1681 = vmatprep.subr.mxu0 0.0
    %1682 = vmatpush1.msra.mxu0 0.0
    %1683 = vmatprep.subr.mxu0 0.0
    %1684 = vmatpush1.msra.mxu0 0.0
    %1685 = vmatprep.subr.mxu0 0.0
    %1686 = vmatpush1.msra.mxu0 0.0
    %1687 = vmatprep.subr.mxu0 0.0
    %1688 = vmatpush1.msra.mxu0 0.0
    %1689 = vmatprep.subr.mxu0 0.0
    %1690 = vmatpush1.msra.mxu0 0.0
    %1691 = vmatprep.subr.mxu0 0.0
    %1692 = vmatpush1.msra.mxu0 0.0
    %1693 = vmatprep.subr.mxu0 0.0
    %1694 = vmatpush1.msra.mxu0 0.0
    %1695 = vmatprep.subr.mxu0 0.0
    %1696 = vmatpush1.msra.mxu0 0.0
    %1697 = vmatprep.subr.mxu0 0.0
    %1698 = vmatpush1.msra.mxu0 0.0
    %1699 = vmatprep.subr.mxu0 0.0
    %1700 = vmatpush1.msra.mxu0 0.0
    %1701 = vmatprep.subr.mxu0 0.0
    %1702 = vmatpush1.msra.mxu0 0.0
    %1703 = vmatprep.subr.mxu0 0.0
    %1704 = vmatpush1.msra.mxu0 0.0
    %1705 = vmatprep.subr.mxu0 0.0
    %1706 = vmatpush1.msra.mxu0 0.0
    %1707 = vmatprep.subr.mxu0 0.0
    %1708 = vmatpush1.msra.mxu0 0.0
    %1709 = vmatprep.subr.mxu0 0.0
    %1710 = vmatpush1.msra.mxu0 0.0
    %1711 = vmatprep.subr.mxu0 0.0
    %1712 = vmatpush1.msra.mxu0 0.0
    %1713 = vmatprep.subr.mxu0 0.0
    %1714 = vmatpush1.msra.mxu0 0.0
    %1715 = vmatprep.subr.mxu0 0.0
    %1716 = vmatpush1.msra.mxu0 0.0
    %1717 = vmatprep.subr.mxu0 0.0
    %1718 = vmatpush1.msra.mxu0 0.0
    %1719 = vmatprep.subr.mxu0 0.0
    %1720 = vmatpush1.msra.mxu0 0.0
    %1721 = vmatprep.subr.mxu0 0.0
    %1722 = vmatpush1.msra.mxu0 0.0
    %1723 = vmatprep.subr.mxu0 0.0
    %1724 = vmatpush1.msra.mxu0 0.0
    %1725 = vmatprep.subr.mxu0 0.0
    %1726 = vmatpush1.msra.mxu0 0.0
    %1727 = vmatprep.subr.mxu0 0.0
    %1728 = vmatpush1.msra.mxu0 0.0
    %1729 = vmatprep.mubr.f32.mxu0 0.0
    %v1730 = vand.u32 %v1572, 4294901760
    %1731 = vmatmul.mubr.f32.gmra.mrb[0].mxu0 %v1730
    %v1732 = vpop.f32.mrb[0].mxu0
    %v1733 = vadd.f32 %v1652, %v1732
    %v1734 = vpop.f32.mrb[0].mxu0
    %1735 = vdwg.mxu0
    %1736 = vmatprep.subr.mxu0 0.0
    %v1737 = vand.u32 %v1568, 4294901760
    %v1738 = vsub.f32 %v1568, %v1737
    %1739 = vmatpush1.msra.mxu0 %v1738
    %1740 = vmatprep.subr.mxu0 0.0
    %v1741 = vand.u32 %v1576, 4294901760
    %v1742 = vsub.f32 %v1576, %v1741
    %1743 = vmatpush1.msra.mxu0 %v1742
    %1744 = vmatprep.subr.mxu0 0.0
    %1745 = vmatpush1.msra.mxu0 0.0
    %1746 = vmatprep.subr.mxu0 0.0
    %1747 = vmatpush1.msra.mxu0 0.0
    %1748 = vmatprep.subr.mxu0 0.0
    %1749 = vmatpush1.msra.mxu0 0.0
    %1750 = vmatprep.subr.mxu0 0.0
    %1751 = vmatpush1.msra.mxu0 0.0
    %1752 = vmatprep.subr.mxu0 0.0
    %1753 = vmatpush1.msra.mxu0 0.0
    %1754 = vmatprep.subr.mxu0 0.0
    %1755 = vmatpush1.msra.mxu0 0.0
    %1756 = vmatprep.subr.mxu0 0.0
    %1757 = vmatpush1.msra.mxu0 0.0
    %1758 = vmatprep.subr.mxu0 0.0
    %1759 = vmatpush1.msra.mxu0 0.0
    %1760 = vmatprep.subr.mxu0 0.0
    %1761 = vmatpush1.msra.mxu0 0.0
    %1762 = vmatprep.subr.mxu0 0.0
    %1763 = vmatpush1.msra.mxu0 0.0
    %1764 = vmatprep.subr.mxu0 0.0
    %1765 = vmatpush1.msra.mxu0 0.0
    %1766 = vmatprep.subr.mxu0 0.0
    %1767 = vmatpush1.msra.mxu0 0.0
    %1768 = vmatprep.subr.mxu0 0.0
    %1769 = vmatpush1.msra.mxu0 0.0
    %1770 = vmatprep.subr.mxu0 0.0
    %1771 = vmatpush1.msra.mxu0 0.0
    %1772 = vmatprep.subr.mxu0 0.0
    %1773 = vmatpush1.msra.mxu0 0.0
    %1774 = vmatprep.subr.mxu0 0.0
    %1775 = vmatpush1.msra.mxu0 0.0
    %1776 = vmatprep.subr.mxu0 0.0
    %1777 = vmatpush1.msra.mxu0 0.0
    %1778 = vmatprep.subr.mxu0 0.0
    %1779 = vmatpush1.msra.mxu0 0.0
    %1780 = vmatprep.subr.mxu0 0.0
    %1781 = vmatpush1.msra.mxu0 0.0
    %1782 = vmatprep.subr.mxu0 0.0
    %1783 = vmatpush1.msra.mxu0 0.0
    %1784 = vmatprep.subr.mxu0 0.0
    %1785 = vmatpush1.msra.mxu0 0.0
    %1786 = vmatprep.subr.mxu0 0.0
    %1787 = vmatpush1.msra.mxu0 0.0
    %1788 = vmatprep.subr.mxu0 0.0
    %1789 = vmatpush1.msra.mxu0 0.0
    %1790 = vmatprep.subr.mxu0 0.0
    %1791 = vmatpush1.msra.mxu0 0.0
    %1792 = vmatprep.subr.mxu0 0.0
    %1793 = vmatpush1.msra.mxu0 0.0
    %1794 = vmatprep.subr.mxu0 0.0
    %1795 = vmatpush1.msra.mxu0 0.0
    %1796 = vmatprep.subr.mxu0 0.0
    %1797 = vmatpush1.msra.mxu0 0.0
    %1798 = vmatprep.subr.mxu0 0.0
    %1799 = vmatpush1.msra.mxu0 0.0
    %1800 = vmatprep.subr.mxu0 0.0
    %1801 = vmatpush1.msra.mxu0 0.0
    %1802 = vmatprep.subr.mxu0 0.0
    %1803 = vmatpush1.msra.mxu0 0.0
    %1804 = vmatprep.mubr.f32.mxu0 0.0
    %v1805 = vand.u32 %v1572, 4294901760
    %v1806 = vsub.f32 %v1572, %v1805
    %1807 = vmatmul.mubr.f32.gmra.mrb[0].mxu0 %v1806
    %v1808 = vpop.f32.mrb[0].mxu0
    %v1809 = vadd.f32 %v1733, %v1808
    %v1810 = vpop.f32.mrb[0].mxu0
    %1811 = vdwg.mxu0
    %1812 = vmatprep.subr.mxu0 0.0
    %v1813 = vand.u32 %v1568, 4294901760
    %1814 = vmatpush1.msra.mxu0 %v1813
    %1815 = vmatprep.subr.mxu0 0.0
    %v1816 = vand.u32 %v1576, 4294901760
    %1817 = vmatpush1.msra.mxu0 %v1816
    %1818 = vmatprep.subr.mxu0 0.0
    %1819 = vmatpush1.msra.mxu0 0.0
    %1820 = vmatprep.subr.mxu0 0.0
    %1821 = vmatpush1.msra.mxu0 0.0
    %1822 = vmatprep.subr.mxu0 0.0
    %1823 = vmatpush1.msra.mxu0 0.0
    %1824 = vmatprep.subr.mxu0 0.0
    %1825 = vmatpush1.msra.mxu0 0.0
    %1826 = vmatprep.subr.mxu0 0.0
    %1827 = vmatpush1.msra.mxu0 0.0
    %1828 = vmatprep.subr.mxu0 0.0
    %1829 = vmatpush1.msra.mxu0 0.0
    %1830 = vmatprep.subr.mxu0 0.0
    %1831 = vmatpush1.msra.mxu0 0.0
    %1832 = vmatprep.subr.mxu0 0.0
    %1833 = vmatpush1.msra.mxu0 0.0
    %1834 = vmatprep.subr.mxu0 0.0
    %1835 = vmatpush1.msra.mxu0 0.0
    %1836 = vmatprep.subr.mxu0 0.0
    %1837 = vmatpush1.msra.mxu0 0.0
    %1838 = vmatprep.subr.mxu0 0.0
    %1839 = vmatpush1.msra.mxu0 0.0
    %1840 = vmatprep.subr.mxu0 0.0
    %1841 = vmatpush1.msra.mxu0 0.0
    %1842 = vmatprep.subr.mxu0 0.0
    %1843 = vmatpush1.msra.mxu0 0.0
    %1844 = vmatprep.subr.mxu0 0.0
    %1845 = vmatpush1.msra.mxu0 0.0
    %1846 = vmatprep.subr.mxu0 0.0
    %1847 = vmatpush1.msra.mxu0 0.0
    %1848 = vmatprep.subr.mxu0 0.0
    %1849 = vmatpush1.msra.mxu0 0.0
    %1850 = vmatprep.subr.mxu0 0.0
    %1851 = vmatpush1.msra.mxu0 0.0
    %1852 = vmatprep.subr.mxu0 0.0
    %1853 = vmatpush1.msra.mxu0 0.0
    %1854 = vmatprep.subr.mxu0 0.0
    %1855 = vmatpush1.msra.mxu0 0.0
    %1856 = vmatprep.subr.mxu0 0.0
    %1857 = vmatpush1.msra.mxu0 0.0
    %1858 = vmatprep.subr.mxu0 0.0
    %1859 = vmatpush1.msra.mxu0 0.0
    %1860 = vmatprep.subr.mxu0 0.0
    %1861 = vmatpush1.msra.mxu0 0.0
    %1862 = vmatprep.subr.mxu0 0.0
    %1863 = vmatpush1.msra.mxu0 0.0
    %1864 = vmatprep.subr.mxu0 0.0
    %1865 = vmatpush1.msra.mxu0 0.0
    %1866 = vmatprep.subr.mxu0 0.0
    %1867 = vmatpush1.msra.mxu0 0.0
    %1868 = vmatprep.subr.mxu0 0.0
    %1869 = vmatpush1.msra.mxu0 0.0
    %1870 = vmatprep.subr.mxu0 0.0
    %1871 = vmatpush1.msra.mxu0 0.0
    %1872 = vmatprep.subr.mxu0 0.0
    %1873 = vmatpush1.msra.mxu0 0.0
    %1874 = vmatprep.subr.mxu0 0.0
    %1875 = vmatpush1.msra.mxu0 0.0
    %1876 = vmatprep.subr.mxu0 0.0
    %1877 = vmatpush1.msra.mxu0 0.0
    %1878 = vmatprep.mubr.f32.mxu0 0.0
    %v1879 = vand.u32 %v1572, 4294901760
    %v1880 = vsub.f32 %v1572, %v1879
    %v1881 = vand.u32 %v1880, 4294901760
    %1882 = vmatmul.mubr.f32.gmra.mrb[0].mxu0 %v1881
    %v1883 = vpop.f32.mrb[0].mxu0
    %v1884 = vadd.f32 %v1809, %v1883
    %v1885 = vpop.f32.mrb[0].mxu0
    %1886 = vdwg.mxu0
    %1887 = vmatprep.subr.mxu0 0.0
    %v1888 = vand.u32 %v1568, 4294901760
    %v1889 = vsub.f32 %v1568, %v1888
    %v1890 = vand.u32 %v1889, 4294901760
    %1891 = vmatpush1.msra.mxu0 %v1890
    %1892 = vmatprep.subr.mxu0 0.0
    %v1893 = vand.u32 %v1576, 4294901760
    %v1894 = vsub.f32 %v1576, %v1893
    %v1895 = vand.u32 %v1894, 4294901760
    %1896 = vmatpush1.msra.mxu0 %v1895
    %1897 = vmatprep.subr.mxu0 0.0
    %1898 = vmatpush1.msra.mxu0 0.0
    %1899 = vmatprep.subr.mxu0 0.0
    %1900 = vmatpush1.msra.mxu0 0.0
    %1901 = vmatprep.subr.mxu0 0.0
    %1902 = vmatpush1.msra.mxu0 0.0
    %1903 = vmatprep.subr.mxu0 0.0
    %1904 = vmatpush1.msra.mxu0 0.0
    %1905 = vmatprep.subr.mxu0 0.0
    %1906 = vmatpush1.msra.mxu0 0.0
    %1907 = vmatprep.subr.mxu0 0.0
    %1908 = vmatpush1.msra.mxu0 0.0
    %1909 = vmatprep.subr.mxu0 0.0
    %1910 = vmatpush1.msra.mxu0 0.0
    %1911 = vmatprep.subr.mxu0 0.0
    %1912 = vmatpush1.msra.mxu0 0.0
    %1913 = vmatprep.subr.mxu0 0.0
    %1914 = vmatpush1.msra.mxu0 0.0
    %1915 = vmatprep.subr.mxu0 0.0
    %1916 = vmatpush1.msra.mxu0 0.0
    %1917 = vmatprep.subr.mxu0 0.0
    %1918 = vmatpush1.msra.mxu0 0.0
    %1919 = vmatprep.subr.mxu0 0.0
    %1920 = vmatpush1.msra.mxu0 0.0
    %1921 = vmatprep.subr.mxu0 0.0
    %1922 = vmatpush1.msra.mxu0 0.0
    %1923 = vmatprep.subr.mxu0 0.0
    %1924 = vmatpush1.msra.mxu0 0.0
    %1925 = vmatprep.subr.mxu0 0.0
    %1926 = vmatpush1.msra.mxu0 0.0
    %1927 = vmatprep.subr.mxu0 0.0
    %1928 = vmatpush1.msra.mxu0 0.0
    %1929 = vmatprep.subr.mxu0 0.0
    %1930 = vmatpush1.msra.mxu0 0.0
    %1931 = vmatprep.subr.mxu0 0.0
    %1932 = vmatpush1.msra.mxu0 0.0
    %1933 = vmatprep.subr.mxu0 0.0
    %1934 = vmatpush1.msra.mxu0 0.0
    %1935 = vmatprep.subr.mxu0 0.0
    %1936 = vmatpush1.msra.mxu0 0.0
    %1937 = vmatprep.subr.mxu0 0.0
    %1938 = vmatpush1.msra.mxu0 0.0
    %1939 = vmatprep.subr.mxu0 0.0
    %1940 = vmatpush1.msra.mxu0 0.0
    %1941 = vmatprep.subr.mxu0 0.0
    %1942 = vmatpush1.msra.mxu0 0.0
    %1943 = vmatprep.subr.mxu0 0.0
    %1944 = vmatpush1.msra.mxu0 0.0
    %1945 = vmatprep.subr.mxu0 0.0
    %1946 = vmatpush1.msra.mxu0 0.0
    %1947 = vmatprep.subr.mxu0 0.0
    %1948 = vmatpush1.msra.mxu0 0.0
    %1949 = vmatprep.subr.mxu0 0.0
    %1950 = vmatpush1.msra.mxu0 0.0
    %1951 = vmatprep.subr.mxu0 0.0
    %1952 = vmatpush1.msra.mxu0 0.0
    %1953 = vmatprep.subr.mxu0 0.0
    %1954 = vmatpush1.msra.mxu0 0.0
    %1955 = vmatprep.subr.mxu0 0.0
    %1956 = vmatpush1.msra.mxu0 0.0
    %1957 = vmatprep.mubr.f32.mxu0 0.0
    %v1958 = vand.u32 %v1572, 4294901760
    %1959 = vmatmul.mubr.f32.gmra.mrb[0].mxu0 %v1958
    %v1960 = vpop.f32.mrb[0].mxu0
    %v1961 = vadd.f32 %v1884, %v1960
    %v1962 = vpop.f32.mrb[0].mxu0
    %1963 = vdwg.mxu0
    %1964 = vmatprep.subr.mxu0 0.0
    %v1965 = vand.u32 %v1568, 4294901760
    %1966 = vmatpush1.msra.mxu0 %v1965
    %1967 = vmatprep.subr.mxu0 0.0
    %v1968 = vand.u32 %v1576, 4294901760
    %1969 = vmatpush1.msra.mxu0 %v1968
    %1970 = vmatprep.subr.mxu0 0.0
    %1971 = vmatpush1.msra.mxu0 0.0
    %1972 = vmatprep.subr.mxu0 0.0
    %1973 = vmatpush1.msra.mxu0 0.0
    %1974 = vmatprep.subr.mxu0 0.0
    %1975 = vmatpush1.msra.mxu0 0.0
    %1976 = vmatprep.subr.mxu0 0.0
    %1977 = vmatpush1.msra.mxu0 0.0
    %1978 = vmatprep.subr.mxu0 0.0
    %1979 = vmatpush1.msra.mxu0 0.0
    %1980 = vmatprep.subr.mxu0 0.0
    %1981 = vmatpush1.msra.mxu0 0.0
    %1982 = vmatprep.subr.mxu0 0.0
    %1983 = vmatpush1.msra.mxu0 0.0
    %1984 = vmatprep.subr.mxu0 0.0
    %1985 = vmatpush1.msra.mxu0 0.0
    %1986 = vmatprep.subr.mxu0 0.0
    %1987 = vmatpush1.msra.mxu0 0.0
    %1988 = vmatprep.subr.mxu0 0.0
    %1989 = vmatpush1.msra.mxu0 0.0
    %1990 = vmatprep.subr.mxu0 0.0
    %1991 = vmatpush1.msra.mxu0 0.0
    %1992 = vmatprep.subr.mxu0 0.0
    %1993 = vmatpush1.msra.mxu0 0.0
    %1994 = vmatprep.subr.mxu0 0.0
    %1995 = vmatpush1.msra.mxu0 0.0
    %1996 = vmatprep.subr.mxu0 0.0
    %1997 = vmatpush1.msra.mxu0 0.0
    %1998 = vmatprep.subr.mxu0 0.0
    %1999 = vmatpush1.msra.mxu0 0.0
    %2000 = vmatprep.subr.mxu0 0.0
    %2001 = vmatpush1.msra.mxu0 0.0
    %2002 = vmatprep.subr.mxu0 0.0
    %2003 = vmatpush1.msra.mxu0 0.0
    %2004 = vmatprep.subr.mxu0 0.0
    %2005 = vmatpush1.msra.mxu0 0.0
    %2006 = vmatprep.subr.mxu0 0.0
    %2007 = vmatpush1.msra.mxu0 0.0
    %2008 = vmatprep.subr.mxu0 0.0
    %2009 = vmatpush1.msra.mxu0 0.0
    %2010 = vmatprep.subr.mxu0 0.0
    %2011 = vmatpush1.msra.mxu0 0.0
    %2012 = vmatprep.subr.mxu0 0.0
    %2013 = vmatpush1.msra.mxu0 0.0
    %2014 = vmatprep.subr.mxu0 0.0
    %2015 = vmatpush1.msra.mxu0 0.0
    %2016 = vmatprep.subr.mxu0 0.0
    %2017 = vmatpush1.msra.mxu0 0.0
    %2018 = vmatprep.subr.mxu0 0.0
    %2019 = vmatpush1.msra.mxu0 0.0
    %2020 = vmatprep.subr.mxu0 0.0
    %2021 = vmatpush1.msra.mxu0 0.0
    %2022 = vmatprep.subr.mxu0 0.0
    %2023 = vmatpush1.msra.mxu0 0.0
    %2024 = vmatprep.subr.mxu0 0.0
    %2025 = vmatpush1.msra.mxu0 0.0
    %2026 = vmatprep.subr.mxu0 0.0
    %2027 = vmatpush1.msra.mxu0 0.0
    %2028 = vmatprep.subr.mxu0 0.0
    %2029 = vmatpush1.msra.mxu0 0.0
    %2030 = vmatprep.mubr.f32.mxu0 0.0
    %v2031 = vand.u32 %v1572, 4294901760
    %2032 = vmatmul.mubr.f32.gmra.mrb[0].mxu0 %v2031
    %v2033 = vpop.f32.mrb[0].mxu0
    %v2034 = vadd.f32 %v1961, %v2033
    %v2035 = vpop.f32.mrb[0].mxu0
    %2036 = vdwg.mxu0
    %v2037 = vadd.f32 %v1565, %v2034
    %v2038 = vld [vmem:[#allocation4] sm:$0x1]
    %v2040 = vlaneseq
    %v2041 = vshrl.u32 %v2040, 7
    %v2042 = vsub.s32 0, %v2041
    %v2043 = vrot.slane %v2038, %v2042
    %v2045 = vadd.f32 %v2037, %v2043
    %v2046 = vmax.f32 %v2045, 0.0
    %v2047 = vld [vmem:[%s8] sm:$0xff]
    %v2048 = vld [vmem:[%s8 + $0x8] sm:$0xff]
    %v2049 = vld [vmem:[%s8 + $0x10] sm:$0xff]
    %v2050 = vld [vmem:[%s8 + $0x18] sm:$0xff]
    %v2051 = vld [vmem:[%s8 + $0x20] sm:$0xff]
    %v2052 = vld [vmem:[%s8 + $0x28] sm:$0xff]
    %v2053 = vld [vmem:[%s8 + $0x30] sm:$0xff]
    %v2054 = vld [vmem:[%s8 + $0x38] sm:$0xff]
    %v2055 = vld [vmem:[%s8 + $0x40] sm:$0xff]
    %v2056 = vld [vmem:[%s8 + $0x48] sm:$0xff]
    %v2057 = vld [vmem:[%s8 + $0x50] sm:$0xff]
    %v2058 = vld [vmem:[%s8 + $0x58] sm:$0xff]
    %v2059 = vld [vmem:[%s8 + $0x60] sm:$0xff]
    %v2060 = vld [vmem:[%s8 + $0x68] sm:$0xff]
    %v2061 = vld [vmem:[%s8 + $0x70] sm:$0xff]
    %v2062 = vld [vmem:[%s8 + $0x78] sm:$0xff]
    %v2063 = vld [vmem:[%s8 + $0x80] sm:$0xff]
    %v2064 = vld [vmem:[%s8 + $0x88] sm:$0xff]
    %v2065 = vld [vmem:[%s8 + $0x90] sm:$0xff]
    %v2066 = vld [vmem:[%s8 + $0x98] sm:$0xff]
    %v2067 = vld [vmem:[%s8 + $0xa0] sm:$0xff]
    %v2068 = vld [vmem:[%s8 + $0xa8] sm:$0xff]
    %v2069 = vld [vmem:[%s8 + $0xb0] sm:$0xff]
    %v2070 = vld [vmem:[%s8 + $0xb8] sm:$0xff]
    %v2071 = vld [vmem:[%s8 + $0xc0] sm:$0xff]
    %v2072 = vld [vmem:[%s8 + $0xc8] sm:$0xff]
    %v2073 = vld [vmem:[%s8 + $0xd0] sm:$0xff]
    %v2074 = vld [vmem:[%s8 + $0xd8] sm:$0xff]
    %v2075 = vld [vmem:[%s8 + $0xe0] sm:$0xff]
    %v2076 = vld [vmem:[%s8 + $0xe8] sm:$0xff]
    %v2077 = vld [vmem:[%s8 + $0xf0] sm:$0xff]
    %v2078 = vld [vmem:[%s8 + $0xf8] sm:$0xff]
    %v2079 = vld [vmem:[%s9] sm:$0x3]
    %v2081 = vlaneseq
    %v2082 = vshrl.u32 %v2081, 7
    %v2083 = vsub.s32 0, %v2082
    %v2084 = vrot.slane %v2079, %v2083
    %v2085 = vlaneseq
    %v2086 = vshrl.u32 %v2085, 7
    %v2087 = vsub.s32 1, %v2086
    %v2088 = vrot.slane %v2079, %v2087
    %v2091 = vand.u32 %v2048, 4294901760
    %2092 = vmatprep.subr.mxu0 %v2091
    %v2093 = vand.u32 %v2047, 4294901760
    %2094 = vmatpush1.msra.mxu0 %v2093
    %v2095 = vand.u32 %v2050, 4294901760
    %2096 = vmatprep.subr.mxu0 %v2095
    %v2097 = vand.u32 %v2049, 4294901760
    %2098 = vmatpush1.msra.mxu0 %v2097
    %v2099 = vand.u32 %v2052, 4294901760
    %2100 = vmatprep.subr.mxu0 %v2099
    %v2101 = vand.u32 %v2051, 4294901760
    %2102 = vmatpush1.msra.mxu0 %v2101
    %v2103 = vand.u32 %v2054, 4294901760
    %2104 = vmatprep.subr.mxu0 %v2103
    %v2105 = vand.u32 %v2053, 4294901760
    %2106 = vmatpush1.msra.mxu0 %v2105
    %v2107 = vand.u32 %v2056, 4294901760
    %2108 = vmatprep.subr.mxu0 %v2107
    %v2109 = vand.u32 %v2055, 4294901760
    %2110 = vmatpush1.msra.mxu0 %v2109
    %v2111 = vand.u32 %v2058, 4294901760
    %2112 = vmatprep.subr.mxu0 %v2111
    %v2113 = vand.u32 %v2057, 4294901760
    %2114 = vmatpush1.msra.mxu0 %v2113
    %v2115 = vand.u32 %v2060, 4294901760
    %2116 = vmatprep.subr.mxu0 %v2115
    %v2117 = vand.u32 %v2059, 4294901760
    %2118 = vmatpush1.msra.mxu0 %v2117
    %v2119 = vand.u32 %v2062, 4294901760
    %2120 = vmatprep.subr.mxu0 %v2119
    %v2121 = vand.u32 %v2061, 4294901760
    %2122 = vmatpush1.msra.mxu0 %v2121
    %v2123 = vand.u32 %v2064, 4294901760
    %2124 = vmatprep.subr.mxu0 %v2123
    %v2125 = vand.u32 %v2063, 4294901760
    %2126 = vmatpush1.msra.mxu0 %v2125
    %v2127 = vand.u32 %v2066, 4294901760
    %2128 = vmatprep.subr.mxu0 %v2127
    %v2129 = vand.u32 %v2065, 4294901760
    %2130 = vmatpush1.msra.mxu0 %v2129
    %v2131 = vand.u32 %v2068, 4294901760
    %2132 = vmatprep.subr.mxu0 %v2131
    %v2133 = vand.u32 %v2067, 4294901760
    %2134 = vmatpush1.msra.mxu0 %v2133
    %v2135 = vand.u32 %v2070, 4294901760
    %2136 = vmatprep.subr.mxu0 %v2135
    %v2137 = vand.u32 %v2069, 4294901760
    %2138 = vmatpush1.msra.mxu0 %v2137
    %v2139 = vand.u32 %v2072, 4294901760
    %2140 = vmatprep.subr.mxu0 %v2139
    %v2141 = vand.u32 %v2071, 4294901760
    %2142 = vmatpush1.msra.mxu0 %v2141
    %v2143 = vand.u32 %v2074, 4294901760
    %2144 = vmatprep.subr.mxu0 %v2143
    %v2145 = vand.u32 %v2073, 4294901760
    %2146 = vmatpush1.msra.mxu0 %v2145
    %v2147 = vand.u32 %v2076, 4294901760
    %2148 = vmatprep.subr.mxu0 %v2147
    %v2149 = vand.u32 %v2075, 4294901760
    %2150 = vmatpush1.msra.mxu0 %v2149
    %v2151 = vand.u32 %v2078, 4294901760
    %2152 = vmatprep.subr.mxu0 %v2151
    %v2153 = vand.u32 %v2077, 4294901760
    %2154 = vmatpush1.msra.mxu0 %v2153
    %2155 = vmatprep.subr.mxu0 0.0
    %2156 = vmatpush1.msra.mxu0 0.0
    %2157 = vmatprep.subr.mxu0 0.0
    %2158 = vmatpush1.msra.mxu0 0.0
    %2159 = vmatprep.subr.mxu0 0.0
    %2160 = vmatpush1.msra.mxu0 0.0
    %2161 = vmatprep.subr.mxu0 0.0
    %2162 = vmatpush1.msra.mxu0 0.0
    %2163 = vmatprep.subr.mxu0 0.0
    %2164 = vmatpush1.msra.mxu0 0.0
    %2165 = vmatprep.subr.mxu0 0.0
    %2166 = vmatpush1.msra.mxu0 0.0
    %2167 = vmatprep.subr.mxu0 0.0
    %2168 = vmatpush1.msra.mxu0 0.0
    %2169 = vmatprep.subr.mxu0 0.0
    %2170 = vmatpush1.msra.mxu0 0.0
    %2171 = vmatprep.subr.mxu0 0.0
    %2172 = vmatpush1.msra.mxu0 0.0
    %2173 = vmatprep.subr.mxu0 0.0
    %2174 = vmatpush1.msra.mxu0 0.0
    %2175 = vmatprep.subr.mxu0 0.0
    %2176 = vmatpush1.msra.mxu0 0.0
    %2177 = vmatprep.subr.mxu0 0.0
    %2178 = vmatpush1.msra.mxu0 0.0
    %2179 = vmatprep.subr.mxu0 0.0
    %2180 = vmatpush1.msra.mxu0 0.0
    %2181 = vmatprep.subr.mxu0 0.0
    %2182 = vmatpush1.msra.mxu0 0.0
    %2183 = vmatprep.subr.mxu0 0.0
    %2184 = vmatpush1.msra.mxu0 0.0
    %2185 = vmatprep.subr.mxu0 0.0
    %2186 = vmatpush1.msra.mxu0 0.0
    %2187 = vmatprep.mubr.f32.mxu0 0.0
    %v2188 = vand.u32 %v2046, 4294901760
    %v2189 = vsub.f32 %v2046, %v2188
    %v2190 = vand.u32 %v2189, 4294901760
    %v2191 = vsub.f32 %v2189, %v2190
    %v2192 = vand.u32 %v2191, 4294901760
    %2193 = vmatmul.mubr.f32.gmra.mrb[0].mxu0 %v2192
    %v2194 = vpop.f32.mrb[0].mxu0
    %v2195 = vadd.f32 %v2084, %v2194
    %v2196 = vpop.f32.mrb[0].mxu0
    %v2197 = vadd.f32 %v2088, %v2196
    %2198 = vdwg.mxu0
    %v2199 = vand.u32 %v2048, 4294901760
    %v2200 = vsub.f32 %v2048, %v2199
    %v2201 = vand.u32 %v2200, 4294901760
    %v2202 = vsub.f32 %v2200, %v2201
    %v2203 = vand.u32 %v2202, 4294901760
    %2204 = vmatprep.subr.mxu0 %v2203
    %v2205 = vand.u32 %v2047, 4294901760
    %v2206 = vsub.f32 %v2047, %v2205
    %v2207 = vand.u32 %v2206, 4294901760
    %v2208 = vsub.f32 %v2206, %v2207
    %v2209 = vand.u32 %v2208, 4294901760
    %2210 = vmatpush1.msra.mxu0 %v2209
    %v2211 = vand.u32 %v2050, 4294901760
    %v2212 = vsub.f32 %v2050, %v2211
    %v2213 = vand.u32 %v2212, 4294901760
    %v2214 = vsub.f32 %v2212, %v2213
    %v2215 = vand.u32 %v2214, 4294901760
    %2216 = vmatprep.subr.mxu0 %v2215
    %v2217 = vand.u32 %v2049, 4294901760
    %v2218 = vsub.f32 %v2049, %v2217
    %v2219 = vand.u32 %v2218, 4294901760
    %v2220 = vsub.f32 %v2218, %v2219
    %v2221 = vand.u32 %v2220, 4294901760
    %2222 = vmatpush1.msra.mxu0 %v2221
    %v2223 = vand.u32 %v2052, 4294901760
    %v2224 = vsub.f32 %v2052, %v2223
    %v2225 = vand.u32 %v2224, 4294901760
    %v2226 = vsub.f32 %v2224, %v2225
    %v2227 = vand.u32 %v2226, 4294901760
    %2228 = vmatprep.subr.mxu0 %v2227
    %v2229 = vand.u32 %v2051, 4294901760
    %v2230 = vsub.f32 %v2051, %v2229
    %v2231 = vand.u32 %v2230, 4294901760
    %v2232 = vsub.f32 %v2230, %v2231
    %v2233 = vand.u32 %v2232, 4294901760
    %2234 = vmatpush1.msra.mxu0 %v2233
    %v2235 = vand.u32 %v2054, 4294901760
    %v2236 = vsub.f32 %v2054, %v2235
    %v2237 = vand.u32 %v2236, 4294901760
    %v2238 = vsub.f32 %v2236, %v2237
    %v2239 = vand.u32 %v2238, 4294901760
    %2240 = vmatprep.subr.mxu0 %v2239
    %v2241 = vand.u32 %v2053, 4294901760
    %v2242 = vsub.f32 %v2053, %v2241
    %v2243 = vand.u32 %v2242, 4294901760
    %v2244 = vsub.f32 %v2242, %v2243
    %v2245 = vand.u32 %v2244, 4294901760
    %2246 = vmatpush1.msra.mxu0 %v2245
    %v2247 = vand.u32 %v2056, 4294901760
    %v2248 = vsub.f32 %v2056, %v2247
    %v2249 = vand.u32 %v2248, 4294901760
    %v2250 = vsub.f32 %v2248, %v2249
    %v2251 = vand.u32 %v2250, 4294901760
    %2252 = vmatprep.subr.mxu0 %v2251
    %v2253 = vand.u32 %v2055, 4294901760
    %v2254 = vsub.f32 %v2055, %v2253
    %v2255 = vand.u32 %v2254, 4294901760
    %v2256 = vsub.f32 %v2254, %v2255
    %v2257 = vand.u32 %v2256, 4294901760
    %2258 = vmatpush1.msra.mxu0 %v2257
    %v2259 = vand.u32 %v2058, 4294901760
    %v2260 = vsub.f32 %v2058, %v2259
    %v2261 = vand.u32 %v2260, 4294901760
    %v2262 = vsub.f32 %v2260, %v2261
    %v2263 = vand.u32 %v2262, 4294901760
    %2264 = vmatprep.subr.mxu0 %v2263
    %v2265 = vand.u32 %v2057, 4294901760
    %v2266 = vsub.f32 %v2057, %v2265
    %v2267 = vand.u32 %v2266, 4294901760
    %v2268 = vsub.f32 %v2266, %v2267
    %v2269 = vand.u32 %v2268, 4294901760
    %2270 = vmatpush1.msra.mxu0 %v2269
    %v2271 = vand.u32 %v2060, 4294901760
    %v2272 = vsub.f32 %v2060, %v2271
    %v2273 = vand.u32 %v2272, 4294901760
    %v2274 = vsub.f32 %v2272, %v2273
    %v2275 = vand.u32 %v2274, 4294901760
    %2276 = vmatprep.subr.mxu0 %v2275
    %v2277 = vand.u32 %v2059, 4294901760
    %v2278 = vsub.f32 %v2059, %v2277
    %v2279 = vand.u32 %v2278, 4294901760
    %v2280 = vsub.f32 %v2278, %v2279
    %v2281 = vand.u32 %v2280, 4294901760
    %2282 = vmatpush1.msra.mxu0 %v2281
    %v2283 = vand.u32 %v2062, 4294901760
    %v2284 = vsub.f32 %v2062, %v2283
    %v2285 = vand.u32 %v2284, 4294901760
    %v2286 = vsub.f32 %v2284, %v2285
    %v2287 = vand.u32 %v2286, 4294901760
    %2288 = vmatprep.subr.mxu0 %v2287
    %v2289 = vand.u32 %v2061, 4294901760
    %v2290 = vsub.f32 %v2061, %v2289
    %v2291 = vand.u32 %v2290, 4294901760
    %v2292 = vsub.f32 %v2290, %v2291
    %v2293 = vand.u32 %v2292, 4294901760
    %2294 = vmatpush1.msra.mxu0 %v2293
    %v2295 = vand.u32 %v2064, 4294901760
    %v2296 = vsub.f32 %v2064, %v2295
    %v2297 = vand.u32 %v2296, 4294901760
    %v2298 = vsub.f32 %v2296, %v2297
    %v2299 = vand.u32 %v2298, 4294901760
    %2300 = vmatprep.subr.mxu0 %v2299
    %v2301 = vand.u32 %v2063, 4294901760
    %v2302 = vsub.f32 %v2063, %v2301
    %v2303 = vand.u32 %v2302, 4294901760
    %v2304 = vsub.f32 %v2302, %v2303
    %v2305 = vand.u32 %v2304, 4294901760
    %2306 = vmatpush1.msra.mxu0 %v2305
    %v2307 = vand.u32 %v2066, 4294901760
    %v2308 = vsub.f32 %v2066, %v2307
    %v2309 = vand.u32 %v2308, 4294901760
    %v2310 = vsub.f32 %v2308, %v2309
    %v2311 = vand.u32 %v2310, 4294901760
    %2312 = vmatprep.subr.mxu0 %v2311
    %v2313 = vand.u32 %v2065, 4294901760
    %v2314 = vsub.f32 %v2065, %v2313
    %v2315 = vand.u32 %v2314, 4294901760
    %v2316 = vsub.f32 %v2314, %v2315
    %v2317 = vand.u32 %v2316, 4294901760
    %2318 = vmatpush1.msra.mxu0 %v2317
    %v2319 = vand.u32 %v2068, 4294901760
    %v2320 = vsub.f32 %v2068, %v2319
    %v2321 = vand.u32 %v2320, 4294901760
    %v2322 = vsub.f32 %v2320, %v2321
    %v2323 = vand.u32 %v2322, 4294901760
    %2324 = vmatprep.subr.mxu0 %v2323
    %v2325 = vand.u32 %v2067, 4294901760
    %v2326 = vsub.f32 %v2067, %v2325
    %v2327 = vand.u32 %v2326, 4294901760
    %v2328 = vsub.f32 %v2326, %v2327
    %v2329 = vand.u32 %v2328, 4294901760
    %2330 = vmatpush1.msra.mxu0 %v2329
    %v2331 = vand.u32 %v2070, 4294901760
    %v2332 = vsub.f32 %v2070, %v2331
    %v2333 = vand.u32 %v2332, 4294901760
    %v2334 = vsub.f32 %v2332, %v2333
    %v2335 = vand.u32 %v2334, 4294901760
    %2336 = vmatprep.subr.mxu0 %v2335
    %v2337 = vand.u32 %v2069, 4294901760
    %v2338 = vsub.f32 %v2069, %v2337
    %v2339 = vand.u32 %v2338, 4294901760
    %v2340 = vsub.f32 %v2338, %v2339
    %v2341 = vand.u32 %v2340, 4294901760
    %2342 = vmatpush1.msra.mxu0 %v2341
    %v2343 = vand.u32 %v2072, 4294901760
    %v2344 = vsub.f32 %v2072, %v2343
    %v2345 = vand.u32 %v2344, 4294901760
    %v2346 = vsub.f32 %v2344, %v2345
    %v2347 = vand.u32 %v2346, 4294901760
    %2348 = vmatprep.subr.mxu0 %v2347
    %v2349 = vand.u32 %v2071, 4294901760
    %v2350 = vsub.f32 %v2071, %v2349
    %v2351 = vand.u32 %v2350, 4294901760
    %v2352 = vsub.f32 %v2350, %v2351
    %v2353 = vand.u32 %v2352, 4294901760
    %2354 = vmatpush1.msra.mxu0 %v2353
    %v2355 = vand.u32 %v2074, 4294901760
    %v2356 = vsub.f32 %v2074, %v2355
    %v2357 = vand.u32 %v2356, 4294901760
    %v2358 = vsub.f32 %v2356, %v2357
    %v2359 = vand.u32 %v2358, 4294901760
    %2360 = vmatprep.subr.mxu0 %v2359
    %v2361 = vand.u32 %v2073, 4294901760
    %v2362 = vsub.f32 %v2073, %v2361
    %v2363 = vand.u32 %v2362, 4294901760
    %v2364 = vsub.f32 %v2362, %v2363
    %v2365 = vand.u32 %v2364, 4294901760
    %2366 = vmatpush1.msra.mxu0 %v2365
    %v2367 = vand.u32 %v2076, 4294901760
    %v2368 = vsub.f32 %v2076, %v2367
    %v2369 = vand.u32 %v2368, 4294901760
    %v2370 = vsub.f32 %v2368, %v2369
    %v2371 = vand.u32 %v2370, 4294901760
    %2372 = vmatprep.subr.mxu0 %v2371
    %v2373 = vand.u32 %v2075, 4294901760
    %v2374 = vsub.f32 %v2075, %v2373
    %v2375 = vand.u32 %v2374, 4294901760
    %v2376 = vsub.f32 %v2374, %v2375
    %v2377 = vand.u32 %v2376, 4294901760
    %2378 = vmatpush1.msra.mxu0 %v2377
    %v2379 = vand.u32 %v2078, 4294901760
    %v2380 = vsub.f32 %v2078, %v2379
    %v2381 = vand.u32 %v2380, 4294901760
    %v2382 = vsub.f32 %v2380, %v2381
    %v2383 = vand.u32 %v2382, 4294901760
    %2384 = vmatprep.subr.mxu0 %v2383
    %v2385 = vand.u32 %v2077, 4294901760
    %v2386 = vsub.f32 %v2077, %v2385
    %v2387 = vand.u32 %v2386, 4294901760
    %v2388 = vsub.f32 %v2386, %v2387
    %v2389 = vand.u32 %v2388, 4294901760
    %2390 = vmatpush1.msra.mxu0 %v2389
    %2391 = vmatprep.subr.mxu0 0.0
    %2392 = vmatpush1.msra.mxu0 0.0
    %2393 = vmatprep.subr.mxu0 0.0
    %2394 = vmatpush1.msra.mxu0 0.0
    %2395 = vmatprep.subr.mxu0 0.0
    %2396 = vmatpush1.msra.mxu0 0.0
    %2397 = vmatprep.subr.mxu0 0.0
    %2398 = vmatpush1.msra.mxu0 0.0
    %2399 = vmatprep.subr.mxu0 0.0
    %2400 = vmatpush1.msra.mxu0 0.0
    %2401 = vmatprep.subr.mxu0 0.0
    %2402 = vmatpush1.msra.mxu0 0.0
    %2403 = vmatprep.subr.mxu0 0.0
    %2404 = vmatpush1.msra.mxu0 0.0
    %2405 = vmatprep.subr.mxu0 0.0
    %2406 = vmatpush1.msra.mxu0 0.0
    %2407 = vmatprep.subr.mxu0 0.0
    %2408 = vmatpush1.msra.mxu0 0.0
    %2409 = vmatprep.subr.mxu0 0.0
    %2410 = vmatpush1.msra.mxu0 0.0
    %2411 = vmatprep.subr.mxu0 0.0
    %2412 = vmatpush1.msra.mxu0 0.0
    %2413 = vmatprep.subr.mxu0 0.0
    %2414 = vmatpush1.msra.mxu0 0.0
    %2415 = vmatprep.subr.mxu0 0.0
    %2416 = vmatpush1.msra.mxu0 0.0
    %2417 = vmatprep.subr.mxu0 0.0
    %2418 = vmatpush1.msra.mxu0 0.0
    %2419 = vmatprep.subr.mxu0 0.0
    %2420 = vmatpush1.msra.mxu0 0.0
    %2421 = vmatprep.subr.mxu0 0.0
    %2422 = vmatpush1.msra.mxu0 0.0
    %2423 = vmatprep.mubr.f32.mxu0 0.0
    %v2424 = vand.u32 %v2046, 4294901760
    %2425 = vmatmul.mubr.f32.gmra.mrb[0].mxu0 %v2424
    %v2426 = vpop.f32.mrb[0].mxu0
    %v2427 = vadd.f32 %v2195, %v2426
    %v2428 = vpop.f32.mrb[0].mxu0
    %v2429 = vadd.f32 %v2197, %v2428
    %2430 = vdwg.mxu0
    %v2431 = vand.u32 %v2048, 4294901760
    %v2432 = vsub.f32 %v2048, %v2431
    %2433 = vmatprep.subr.mxu0 %v2432
    %v2434 = vand.u32 %v2047, 4294901760
    %v2435 = vsub.f32 %v2047, %v2434
    %2436 = vmatpush1.msra.mxu0 %v2435
    %v2437 = vand.u32 %v2050, 4294901760
    %v2438 = vsub.f32 %v2050, %v2437
    %2439 = vmatprep.subr.mxu0 %v2438
    %v2440 = vand.u32 %v2049, 4294901760
    %v2441 = vsub.f32 %v2049, %v2440
    %2442 = vmatpush1.msra.mxu0 %v2441
    %v2443 = vand.u32 %v2052, 4294901760
    %v2444 = vsub.f32 %v2052, %v2443
    %2445 = vmatprep.subr.mxu0 %v2444
    %v2446 = vand.u32 %v2051, 4294901760
    %v2447 = vsub.f32 %v2051, %v2446
    %2448 = vmatpush1.msra.mxu0 %v2447
    %v2449 = vand.u32 %v2054, 4294901760
    %v2450 = vsub.f32 %v2054, %v2449
    %2451 = vmatprep.subr.mxu0 %v2450
    %v2452 = vand.u32 %v2053, 4294901760
    %v2453 = vsub.f32 %v2053, %v2452
    %2454 = vmatpush1.msra.mxu0 %v2453
    %v2455 = vand.u32 %v2056, 4294901760
    %v2456 = vsub.f32 %v2056, %v2455
    %2457 = vmatprep.subr.mxu0 %v2456
    %v2458 = vand.u32 %v2055, 4294901760
    %v2459 = vsub.f32 %v2055, %v2458
    %2460 = vmatpush1.msra.mxu0 %v2459
    %v2461 = vand.u32 %v2058, 4294901760
    %v2462 = vsub.f32 %v2058, %v2461
    %2463 = vmatprep.subr.mxu0 %v2462
    %v2464 = vand.u32 %v2057, 4294901760
    %v2465 = vsub.f32 %v2057, %v2464
    %2466 = vmatpush1.msra.mxu0 %v2465
    %v2467 = vand.u32 %v2060, 4294901760
    %v2468 = vsub.f32 %v2060, %v2467
    %2469 = vmatprep.subr.mxu0 %v2468
    %v2470 = vand.u32 %v2059, 4294901760
    %v2471 = vsub.f32 %v2059, %v2470
    %2472 = vmatpush1.msra.mxu0 %v2471
    %v2473 = vand.u32 %v2062, 4294901760
    %v2474 = vsub.f32 %v2062, %v2473
    %2475 = vmatprep.subr.mxu0 %v2474
    %v2476 = vand.u32 %v2061, 4294901760
    %v2477 = vsub.f32 %v2061, %v2476
    %2478 = vmatpush1.msra.mxu0 %v2477
    %v2479 = vand.u32 %v2064, 4294901760
    %v2480 = vsub.f32 %v2064, %v2479
    %2481 = vmatprep.subr.mxu0 %v2480
    %v2482 = vand.u32 %v2063, 4294901760
    %v2483 = vsub.f32 %v2063, %v2482
    %2484 = vmatpush1.msra.mxu0 %v2483
    %v2485 = vand.u32 %v2066, 4294901760
    %v2486 = vsub.f32 %v2066, %v2485
    %2487 = vmatprep.subr.mxu0 %v2486
    %v2488 = vand.u32 %v2065, 4294901760
    %v2489 = vsub.f32 %v2065, %v2488
    %2490 = vmatpush1.msra.mxu0 %v2489
    %v2491 = vand.u32 %v2068, 4294901760
    %v2492 = vsub.f32 %v2068, %v2491
    %2493 = vmatprep.subr.mxu0 %v2492
    %v2494 = vand.u32 %v2067, 4294901760
    %v2495 = vsub.f32 %v2067, %v2494
    %2496 = vmatpush1.msra.mxu0 %v2495
    %v2497 = vand.u32 %v2070, 4294901760
    %v2498 = vsub.f32 %v2070, %v2497
    %2499 = vmatprep.subr.mxu0 %v2498
    %v2500 = vand.u32 %v2069, 4294901760
    %v2501 = vsub.f32 %v2069, %v2500
    %2502 = vmatpush1.msra.mxu0 %v2501
    %v2503 = vand.u32 %v2072, 4294901760
    %v2504 = vsub.f32 %v2072, %v2503
    %2505 = vmatprep.subr.mxu0 %v2504
    %v2506 = vand.u32 %v2071, 4294901760
    %v2507 = vsub.f32 %v2071, %v2506
    %2508 = vmatpush1.msra.mxu0 %v2507
    %v2509 = vand.u32 %v2074, 4294901760
    %v2510 = vsub.f32 %v2074, %v2509
    %2511 = vmatprep.subr.mxu0 %v2510
    %v2512 = vand.u32 %v2073, 4294901760
    %v2513 = vsub.f32 %v2073, %v2512
    %2514 = vmatpush1.msra.mxu0 %v2513
    %v2515 = vand.u32 %v2076, 4294901760
    %v2516 = vsub.f32 %v2076, %v2515
    %2517 = vmatprep.subr.mxu0 %v2516
    %v2518 = vand.u32 %v2075, 4294901760
    %v2519 = vsub.f32 %v2075, %v2518
    %2520 = vmatpush1.msra.mxu0 %v2519
    %v2521 = vand.u32 %v2078, 4294901760
    %v2522 = vsub.f32 %v2078, %v2521
    %2523 = vmatprep.subr.mxu0 %v2522
    %v2524 = vand.u32 %v2077, 4294901760
    %v2525 = vsub.f32 %v2077, %v2524
    %2526 = vmatpush1.msra.mxu0 %v2525
    %2527 = vmatprep.subr.mxu0 0.0
    %2528 = vmatpush1.msra.mxu0 0.0
    %2529 = vmatprep.subr.mxu0 0.0
    %2530 = vmatpush1.msra.mxu0 0.0
    %2531 = vmatprep.subr.mxu0 0.0
    %2532 = vmatpush1.msra.mxu0 0.0
    %2533 = vmatprep.subr.mxu0 0.0
    %2534 = vmatpush1.msra.mxu0 0.0
    %2535 = vmatprep.subr.mxu0 0.0
    %2536 = vmatpush1.msra.mxu0 0.0
    %2537 = vmatprep.subr.mxu0 0.0
    %2538 = vmatpush1.msra.mxu0 0.0
    %2539 = vmatprep.subr.mxu0 0.0
    %2540 = vmatpush1.msra.mxu0 0.0
    %2541 = vmatprep.subr.mxu0 0.0
    %2542 = vmatpush1.msra.mxu0 0.0
    %2543 = vmatprep.subr.mxu0 0.0
    %2544 = vmatpush1.msra.mxu0 0.0
    %2545 = vmatprep.subr.mxu0 0.0
    %2546 = vmatpush1.msra.mxu0 0.0
    %2547 = vmatprep.subr.mxu0 0.0
    %2548 = vmatpush1.msra.mxu0 0.0
    %2549 = vmatprep.subr.mxu0 0.0
    %2550 = vmatpush1.msra.mxu0 0.0
    %2551 = vmatprep.subr.mxu0 0.0
    %2552 = vmatpush1.msra.mxu0 0.0
    %2553 = vmatprep.subr.mxu0 0.0
    %2554 = vmatpush1.msra.mxu0 0.0
    %2555 = vmatprep.subr.mxu0 0.0
    %2556 = vmatpush1.msra.mxu0 0.0
    %2557 = vmatprep.subr.mxu0 0.0
    %2558 = vmatpush1.msra.mxu0 0.0
    %2559 = vmatprep.mubr.f32.mxu0 0.0
    %v2560 = vand.u32 %v2046, 4294901760
    %v2561 = vsub.f32 %v2046, %v2560
    %2562 = vmatmul.mubr.f32.gmra.mrb[0].mxu0 %v2561
    %v2563 = vpop.f32.mrb[0].mxu0
    %v2564 = vadd.f32 %v2427, %v2563
    %v2565 = vpop.f32.mrb[0].mxu0
    %v2566 = vadd.f32 %v2429, %v2565
    %2567 = vdwg.mxu0
    %v2568 = vand.u32 %v2048, 4294901760
    %2569 = vmatprep.subr.mxu0 %v2568
    %v2570 = vand.u32 %v2047, 4294901760
    %2571 = vmatpush1.msra.mxu0 %v2570
    %v2572 = vand.u32 %v2050, 4294901760
    %2573 = vmatprep.subr.mxu0 %v2572
    %v2574 = vand.u32 %v2049, 4294901760
    %2575 = vmatpush1.msra.mxu0 %v2574
    %v2576 = vand.u32 %v2052, 4294901760
    %2577 = vmatprep.subr.mxu0 %v2576
    %v2578 = vand.u32 %v2051, 4294901760
    %2579 = vmatpush1.msra.mxu0 %v2578
    %v2580 = vand.u32 %v2054, 4294901760
    %2581 = vmatprep.subr.mxu0 %v2580
    %v2582 = vand.u32 %v2053, 4294901760
    %2583 = vmatpush1.msra.mxu0 %v2582
    %v2584 = vand.u32 %v2056, 4294901760
    %2585 = vmatprep.subr.mxu0 %v2584
    %v2586 = vand.u32 %v2055, 4294901760
    %2587 = vmatpush1.msra.mxu0 %v2586
    %v2588 = vand.u32 %v2058, 4294901760
    %2589 = vmatprep.subr.mxu0 %v2588
    %v2590 = vand.u32 %v2057, 4294901760
    %2591 = vmatpush1.msra.mxu0 %v2590
    %v2592 = vand.u32 %v2060, 4294901760
    %2593 = vmatprep.subr.mxu0 %v2592
    %v2594 = vand.u32 %v2059, 4294901760
    %2595 = vmatpush1.msra.mxu0 %v2594
    %v2596 = vand.u32 %v2062, 4294901760
    %2597 = vmatprep.subr.mxu0 %v2596
    %v2598 = vand.u32 %v2061, 4294901760
    %2599 = vmatpush1.msra.mxu0 %v2598
    %v2600 = vand.u32 %v2064, 4294901760
    %2601 = vmatprep.subr.mxu0 %v2600
    %v2602 = vand.u32 %v2063, 4294901760
    %2603 = vmatpush1.msra.mxu0 %v2602
    %v2604 = vand.u32 %v2066, 4294901760
    %2605 = vmatprep.subr.mxu0 %v2604
    %v2606 = vand.u32 %v2065, 4294901760
    %2607 = vmatpush1.msra.mxu0 %v2606
    %v2608 = vand.u32 %v2068, 4294901760
    %2609 = vmatprep.subr.mxu0 %v2608
    %v2610 = vand.u32 %v2067, 4294901760
    %2611 = vmatpush1.msra.mxu0 %v2610
    %v2612 = vand.u32 %v2070, 4294901760
    %2613 = vmatprep.subr.mxu0 %v2612
    %v2614 = vand.u32 %v2069, 4294901760
    %2615 = vmatpush1.msra.mxu0 %v2614
    %v2616 = vand.u32 %v2072, 4294901760
    %2617 = vmatprep.subr.mxu0 %v2616
    %v2618 = vand.u32 %v2071, 4294901760
    %2619 = vmatpush1.msra.mxu0 %v2618
    %v2620 = vand.u32 %v2074, 4294901760
    %2621 = vmatprep.subr.mxu0 %v2620
    %v2622 = vand.u32 %v2073, 4294901760
    %2623 = vmatpush1.msra.mxu0 %v2622
    %v2624 = vand.u32 %v2076, 4294901760
    %2625 = vmatprep.subr.mxu0 %v2624
    %v2626 = vand.u32 %v2075, 4294901760
    %2627 = vmatpush1.msra.mxu0 %v2626
    %v2628 = vand.u32 %v2078, 4294901760
    %2629 = vmatprep.subr.mxu0 %v2628
    %v2630 = vand.u32 %v2077, 4294901760
    %2631 = vmatpush1.msra.mxu0 %v2630
    %2632 = vmatprep.subr.mxu0 0.0
    %2633 = vmatpush1.msra.mxu0 0.0
    %2634 = vmatprep.subr.mxu0 0.0
    %2635 = vmatpush1.msra.mxu0 0.0
    %2636 = vmatprep.subr.mxu0 0.0
    %2637 = vmatpush1.msra.mxu0 0.0
    %2638 = vmatprep.subr.mxu0 0.0
    %2639 = vmatpush1.msra.mxu0 0.0
    %2640 = vmatprep.subr.mxu0 0.0
    %2641 = vmatpush1.msra.mxu0 0.0
    %2642 = vmatprep.subr.mxu0 0.0
    %2643 = vmatpush1.msra.mxu0 0.0
    %2644 = vmatprep.subr.mxu0 0.0
    %2645 = vmatpush1.msra.mxu0 0.0
    %2646 = vmatprep.subr.mxu0 0.0
    %2647 = vmatpush1.msra.mxu0 0.0
    %2648 = vmatprep.subr.mxu0 0.0
    %2649 = vmatpush1.msra.mxu0 0.0
    %2650 = vmatprep.subr.mxu0 0.0
    %2651 = vmatpush1.msra.mxu0 0.0
    %2652 = vmatprep.subr.mxu0 0.0
    %2653 = vmatpush1.msra.mxu0 0.0
    %2654 = vmatprep.subr.mxu0 0.0
    %2655 = vmatpush1.msra.mxu0 0.0
    %2656 = vmatprep.subr.mxu0 0.0
    %2657 = vmatpush1.msra.mxu0 0.0
    %2658 = vmatprep.subr.mxu0 0.0
    %2659 = vmatpush1.msra.mxu0 0.0
    %2660 = vmatprep.subr.mxu0 0.0
    %2661 = vmatpush1.msra.mxu0 0.0
    %2662 = vmatprep.subr.mxu0 0.0
    %2663 = vmatpush1.msra.mxu0 0.0
    %2664 = vmatprep.mubr.f32.mxu0 0.0
    %v2665 = vand.u32 %v2046, 4294901760
    %v2666 = vsub.f32 %v2046, %v2665
    %v2667 = vand.u32 %v2666, 4294901760
    %2668 = vmatmul.mubr.f32.gmra.mrb[0].mxu0 %v2667
    %v2669 = vpop.f32.mrb[0].mxu0
    %v2670 = vadd.f32 %v2564, %v2669
    %v2671 = vpop.f32.mrb[0].mxu0
    %v2672 = vadd.f32 %v2566, %v2671
    %2673 = vdwg.mxu0
    %v2674 = vand.u32 %v2048, 4294901760
    %v2675 = vsub.f32 %v2048, %v2674
    %v2676 = vand.u32 %v2675, 4294901760
    %2677 = vmatprep.subr.mxu0 %v2676
    %v2678 = vand.u32 %v2047, 4294901760
    %v2679 = vsub.f32 %v2047, %v2678
    %v2680 = vand.u32 %v2679, 4294901760
    %2681 = vmatpush1.msra.mxu0 %v2680
    %v2682 = vand.u32 %v2050, 4294901760
    %v2683 = vsub.f32 %v2050, %v2682
    %v2684 = vand.u32 %v2683, 4294901760
    %2685 = vmatprep.subr.mxu0 %v2684
    %v2686 = vand.u32 %v2049, 4294901760
    %v2687 = vsub.f32 %v2049, %v2686
    %v2688 = vand.u32 %v2687, 4294901760
    %2689 = vmatpush1.msra.mxu0 %v2688
    %v2690 = vand.u32 %v2052, 4294901760
    %v2691 = vsub.f32 %v2052, %v2690
    %v2692 = vand.u32 %v2691, 4294901760
    %2693 = vmatprep.subr.mxu0 %v2692
    %v2694 = vand.u32 %v2051, 4294901760
    %v2695 = vsub.f32 %v2051, %v2694
    %v2696 = vand.u32 %v2695, 4294901760
    %2697 = vmatpush1.msra.mxu0 %v2696
    %v2698 = vand.u32 %v2054, 4294901760
    %v2699 = vsub.f32 %v2054, %v2698
    %v2700 = vand.u32 %v2699, 4294901760
    %2701 = vmatprep.subr.mxu0 %v2700
    %v2702 = vand.u32 %v2053, 4294901760
    %v2703 = vsub.f32 %v2053, %v2702
    %v2704 = vand.u32 %v2703, 4294901760
    %2705 = vmatpush1.msra.mxu0 %v2704
    %v2706 = vand.u32 %v2056, 4294901760
    %v2707 = vsub.f32 %v2056, %v2706
    %v2708 = vand.u32 %v2707, 4294901760
    %2709 = vmatprep.subr.mxu0 %v2708
    %v2710 = vand.u32 %v2055, 4294901760
    %v2711 = vsub.f32 %v2055, %v2710
    %v2712 = vand.u32 %v2711, 4294901760
    %2713 = vmatpush1.msra.mxu0 %v2712
    %v2714 = vand.u32 %v2058, 4294901760
    %v2715 = vsub.f32 %v2058, %v2714
    %v2716 = vand.u32 %v2715, 4294901760
    %2717 = vmatprep.subr.mxu0 %v2716
    %v2718 = vand.u32 %v2057, 4294901760
    %v2719 = vsub.f32 %v2057, %v2718
    %v2720 = vand.u32 %v2719, 4294901760
    %2721 = vmatpush1.msra.mxu0 %v2720
    %v2722 = vand.u32 %v2060, 4294901760
    %v2723 = vsub.f32 %v2060, %v2722
    %v2724 = vand.u32 %v2723, 4294901760
    %2725 = vmatprep.subr.mxu0 %v2724
    %v2726 = vand.u32 %v2059, 4294901760
    %v2727 = vsub.f32 %v2059, %v2726
    %v2728 = vand.u32 %v2727, 4294901760
    %2729 = vmatpush1.msra.mxu0 %v2728
    %v2730 = vand.u32 %v2062, 4294901760
    %v2731 = vsub.f32 %v2062, %v2730
    %v2732 = vand.u32 %v2731, 4294901760
    %2733 = vmatprep.subr.mxu0 %v2732
    %v2734 = vand.u32 %v2061, 4294901760
    %v2735 = vsub.f32 %v2061, %v2734
    %v2736 = vand.u32 %v2735, 4294901760
    %2737 = vmatpush1.msra.mxu0 %v2736
    %v2738 = vand.u32 %v2064, 4294901760
    %v2739 = vsub.f32 %v2064, %v2738
    %v2740 = vand.u32 %v2739, 4294901760
    %2741 = vmatprep.subr.mxu0 %v2740
    %v2742 = vand.u32 %v2063, 4294901760
    %v2743 = vsub.f32 %v2063, %v2742
    %v2744 = vand.u32 %v2743, 4294901760
    %2745 = vmatpush1.msra.mxu0 %v2744
    %v2746 = vand.u32 %v2066, 4294901760
    %v2747 = vsub.f32 %v2066, %v2746
    %v2748 = vand.u32 %v2747, 4294901760
    %2749 = vmatprep.subr.mxu0 %v2748
    %v2750 = vand.u32 %v2065, 4294901760
    %v2751 = vsub.f32 %v2065, %v2750
    %v2752 = vand.u32 %v2751, 4294901760
    %2753 = vmatpush1.msra.mxu0 %v2752
    %v2754 = vand.u32 %v2068, 4294901760
    %v2755 = vsub.f32 %v2068, %v2754
    %v2756 = vand.u32 %v2755, 4294901760
    %2757 = vmatprep.subr.mxu0 %v2756
    %v2758 = vand.u32 %v2067, 4294901760
    %v2759 = vsub.f32 %v2067, %v2758
    %v2760 = vand.u32 %v2759, 4294901760
    %2761 = vmatpush1.msra.mxu0 %v2760
    %v2762 = vand.u32 %v2070, 4294901760
    %v2763 = vsub.f32 %v2070, %v2762
    %v2764 = vand.u32 %v2763, 4294901760
    %2765 = vmatprep.subr.mxu0 %v2764
    %v2766 = vand.u32 %v2069, 4294901760
    %v2767 = vsub.f32 %v2069, %v2766
    %v2768 = vand.u32 %v2767, 4294901760
    %2769 = vmatpush1.msra.mxu0 %v2768
    %v2770 = vand.u32 %v2072, 4294901760
    %v2771 = vsub.f32 %v2072, %v2770
    %v2772 = vand.u32 %v2771, 4294901760
    %2773 = vmatprep.subr.mxu0 %v2772
    %v2774 = vand.u32 %v2071, 4294901760
    %v2775 = vsub.f32 %v2071, %v2774
    %v2776 = vand.u32 %v2775, 4294901760
    %2777 = vmatpush1.msra.mxu0 %v2776
    %v2778 = vand.u32 %v2074, 4294901760
    %v2779 = vsub.f32 %v2074, %v2778
    %v2780 = vand.u32 %v2779, 4294901760
    %2781 = vmatprep.subr.mxu0 %v2780
    %v2782 = vand.u32 %v2073, 4294901760
    %v2783 = vsub.f32 %v2073, %v2782
    %v2784 = vand.u32 %v2783, 4294901760
    %2785 = vmatpush1.msra.mxu0 %v2784
    %v2786 = vand.u32 %v2076, 4294901760
    %v2787 = vsub.f32 %v2076, %v2786
    %v2788 = vand.u32 %v2787, 4294901760
    %2789 = vmatprep.subr.mxu0 %v2788
    %v2790 = vand.u32 %v2075, 4294901760
    %v2791 = vsub.f32 %v2075, %v2790
    %v2792 = vand.u32 %v2791, 4294901760
    %2793 = vmatpush1.msra.mxu0 %v2792
    %v2794 = vand.u32 %v2078, 4294901760
    %v2795 = vsub.f32 %v2078, %v2794
    %v2796 = vand.u32 %v2795, 4294901760
    %2797 = vmatprep.subr.mxu0 %v2796
    %v2798 = vand.u32 %v2077, 4294901760
    %v2799 = vsub.f32 %v2077, %v2798
    %v2800 = vand.u32 %v2799, 4294901760
    %2801 = vmatpush1.msra.mxu0 %v2800
    %2802 = vmatprep.subr.mxu0 0.0
    %2803 = vmatpush1.msra.mxu0 0.0
    %2804 = vmatprep.subr.mxu0 0.0
    %2805 = vmatpush1.msra.mxu0 0.0
    %2806 = vmatprep.subr.mxu0 0.0
    %2807 = vmatpush1.msra.mxu0 0.0
    %2808 = vmatprep.subr.mxu0 0.0
    %2809 = vmatpush1.msra.mxu0 0.0
    %2810 = vmatprep.subr.mxu0 0.0
    %2811 = vmatpush1.msra.mxu0 0.0
    %2812 = vmatprep.subr.mxu0 0.0
    %2813 = vmatpush1.msra.mxu0 0.0
    %2814 = vmatprep.subr.mxu0 0.0
    %2815 = vmatpush1.msra.mxu0 0.0
    %2816 = vmatprep.subr.mxu0 0.0
    %2817 = vmatpush1.msra.mxu0 0.0
    %2818 = vmatprep.subr.mxu0 0.0
    %2819 = vmatpush1.msra.mxu0 0.0
    %2820 = vmatprep.subr.mxu0 0.0
    %2821 = vmatpush1.msra.mxu0 0.0
    %2822 = vmatprep.subr.mxu0 0.0
    %2823 = vmatpush1.msra.mxu0 0.0
    %2824 = vmatprep.subr.mxu0 0.0
    %2825 = vmatpush1.msra.mxu0 0.0
    %2826 = vmatprep.subr.mxu0 0.0
    %2827 = vmatpush1.msra.mxu0 0.0
    %2828 = vmatprep.subr.mxu0 0.0
    %2829 = vmatpush1.msra.mxu0 0.0
    %2830 = vmatprep.subr.mxu0 0.0
    %2831 = vmatpush1.msra.mxu0 0.0
    %2832 = vmatprep.subr.mxu0 0.0
    %2833 = vmatpush1.msra.mxu0 0.0
    %2834 = vmatprep.mubr.f32.mxu0 0.0
    %v2835 = vand.u32 %v2046, 4294901760
    %2836 = vmatmul.mubr.f32.gmra.mrb[0].mxu0 %v2835
    %v2837 = vpop.f32.mrb[0].mxu0
    %v2838 = vadd.f32 %v2670, %v2837
    %v2839 = vpop.f32.mrb[0].mxu0
    %v2840 = vadd.f32 %v2672, %v2839
    %2841 = vdwg.mxu0
    %v2842 = vand.u32 %v2048, 4294901760
    %2843 = vmatprep.subr.mxu0 %v2842
    %v2844 = vand.u32 %v2047, 4294901760
    %2845 = vmatpush1.msra.mxu0 %v2844
    %v2846 = vand.u32 %v2050, 4294901760
    %2847 = vmatprep.subr.mxu0 %v2846
    %v2848 = vand.u32 %v2049, 4294901760
    %2849 = vmatpush1.msra.mxu0 %v2848
    %v2850 = vand.u32 %v2052, 4294901760
    %2851 = vmatprep.subr.mxu0 %v2850
    %v2852 = vand.u32 %v2051, 4294901760
    %2853 = vmatpush1.msra.mxu0 %v2852
    %v2854 = vand.u32 %v2054, 4294901760
    %2855 = vmatprep.subr.mxu0 %v2854
    %v2856 = vand.u32 %v2053, 4294901760
    %2857 = vmatpush1.msra.mxu0 %v2856
    %v2858 = vand.u32 %v2056, 4294901760
    %2859 = vmatprep.subr.mxu0 %v2858
    %v2860 = vand.u32 %v2055, 4294901760
    %2861 = vmatpush1.msra.mxu0 %v2860
    %v2862 = vand.u32 %v2058, 4294901760
    %2863 = vmatprep.subr.mxu0 %v2862
    %v2864 = vand.u32 %v2057, 4294901760
    %2865 = vmatpush1.msra.mxu0 %v2864
    %v2866 = vand.u32 %v2060, 4294901760
    %2867 = vmatprep.subr.mxu0 %v2866
    %v2868 = vand.u32 %v2059, 4294901760
    %2869 = vmatpush1.msra.mxu0 %v2868
    %v2870 = vand.u32 %v2062, 4294901760
    %2871 = vmatprep.subr.mxu0 %v2870
    %v2872 = vand.u32 %v2061, 4294901760
    %2873 = vmatpush1.msra.mxu0 %v2872
    %v2874 = vand.u32 %v2064, 4294901760
    %2875 = vmatprep.subr.mxu0 %v2874
    %v2876 = vand.u32 %v2063, 4294901760
    %2877 = vmatpush1.msra.mxu0 %v2876
    %v2878 = vand.u32 %v2066, 4294901760
    %2879 = vmatprep.subr.mxu0 %v2878
    %v2880 = vand.u32 %v2065, 4294901760
    %2881 = vmatpush1.msra.mxu0 %v2880
    %v2882 = vand.u32 %v2068, 4294901760
    %2883 = vmatprep.subr.mxu0 %v2882
    %v2884 = vand.u32 %v2067, 4294901760
    %2885 = vmatpush1.msra.mxu0 %v2884
    %v2886 = vand.u32 %v2070, 4294901760
    %2887 = vmatprep.subr.mxu0 %v2886
    %v2888 = vand.u32 %v2069, 4294901760
    %2889 = vmatpush1.msra.mxu0 %v2888
    %v2890 = vand.u32 %v2072, 4294901760
    %2891 = vmatprep.subr.mxu0 %v2890
    %v2892 = vand.u32 %v2071, 4294901760
    %2893 = vmatpush1.msra.mxu0 %v2892
    %v2894 = vand.u32 %v2074, 4294901760
    %2895 = vmatprep.subr.mxu0 %v2894
    %v2896 = vand.u32 %v2073, 4294901760
    %2897 = vmatpush1.msra.mxu0 %v2896
    %v2898 = vand.u32 %v2076, 4294901760
    %2899 = vmatprep.subr.mxu0 %v2898
    %v2900 = vand.u32 %v2075, 4294901760
    %2901 = vmatpush1.msra.mxu0 %v2900
    %v2902 = vand.u32 %v2078, 4294901760
    %2903 = vmatprep.subr.mxu0 %v2902
    %v2904 = vand.u32 %v2077, 4294901760
    %2905 = vmatpush1.msra.mxu0 %v2904
    %2906 = vmatprep.subr.mxu0 0.0
    %2907 = vmatpush1.msra.mxu0 0.0
    %2908 = vmatprep.subr.mxu0 0.0
    %2909 = vmatpush1.msra.mxu0 0.0
    %2910 = vmatprep.subr.mxu0 0.0
    %2911 = vmatpush1.msra.mxu0 0.0
    %2912 = vmatprep.subr.mxu0 0.0
    %2913 = vmatpush1.msra.mxu0 0.0
    %2914 = vmatprep.subr.mxu0 0.0
    %2915 = vmatpush1.msra.mxu0 0.0
    %2916 = vmatprep.subr.mxu0 0.0
    %2917 = vmatpush1.msra.mxu0 0.0
    %2918 = vmatprep.subr.mxu0 0.0
    %2919 = vmatpush1.msra.mxu0 0.0
    %2920 = vmatprep.subr.mxu0 0.0
    %2921 = vmatpush1.msra.mxu0 0.0
    %2922 = vmatprep.subr.mxu0 0.0
    %2923 = vmatpush1.msra.mxu0 0.0
    %2924 = vmatprep.subr.mxu0 0.0
    %2925 = vmatpush1.msra.mxu0 0.0
    %2926 = vmatprep.subr.mxu0 0.0
    %2927 = vmatpush1.msra.mxu0 0.0
    %2928 = vmatprep.subr.mxu0 0.0
    %2929 = vmatpush1.msra.mxu0 0.0
    %2930 = vmatprep.subr.mxu0 0.0
    %2931 = vmatpush1.msra.mxu0 0.0
    %2932 = vmatprep.subr.mxu0 0.0
    %2933 = vmatpush1.msra.mxu0 0.0
    %2934 = vmatprep.subr.mxu0 0.0
    %2935 = vmatpush1.msra.mxu0 0.0
    %2936 = vmatprep.subr.mxu0 0.0
    %2937 = vmatpush1.msra.mxu0 0.0
    %2938 = vmatprep.mubr.f32.mxu0 0.0
    %v2939 = vand.u32 %v2046, 4294901760
    %2940 = vmatmul.mubr.f32.gmra.mrb[0].mxu0 %v2939
    %v2941 = vpop.f32.mrb[0].mxu0
    %v2942 = vadd.f32 %v2838, %v2941
    %v2943 = vpop.f32.mrb[0].mxu0
    %v2944 = vadd.f32 %v2840, %v2943
    %2945 = vdwg.mxu0
    %v2946 = vmax.f32 %v2942, 0.0
    %v2947 = vmax.f32 %v2944, 0.0
    %v2948 = vld [vmem:[%s10] sm:$0xff]
    %v2949 = vld [vmem:[%s10 + $0x8] sm:$0xff]
    %v2950 = vld [vmem:[%s10 + $0x10] sm:$0xff]
    %v2951 = vld [vmem:[%s10 + $0x18] sm:$0xff]
    %v2952 = vld [vmem:[%s10 + $0x20] sm:$0xff]
    %v2953 = vld [vmem:[%s10 + $0x28] sm:$0xff]
    %v2954 = vld [vmem:[%s10 + $0x30] sm:$0xff]
    %v2955 = vld [vmem:[%s10 + $0x38] sm:$0xff]
    %v2956 = vld [vmem:[%s10 + $0x40] sm:$0xff]
    %v2957 = vld [vmem:[%s10 + $0x48] sm:$0xff]
    %v2958 = vld [vmem:[%s10 + $0x50] sm:$0xff]
    %v2959 = vld [vmem:[%s10 + $0x58] sm:$0xff]
    %v2960 = vld [vmem:[%s10 + $0x60] sm:$0xff]
    %v2961 = vld [vmem:[%s10 + $0x68] sm:$0xff]
    %v2962 = vld [vmem:[%s10 + $0x70] sm:$0xff]
    %v2963 = vld [vmem:[%s10 + $0x78] sm:$0xff]
    %v2964 = vld [vmem:[%s10 + $0x80] sm:$0xff]
    %v2965 = vld [vmem:[%s10 + $0x88] sm:$0xff]
    %v2966 = vld [vmem:[%s10 + $0x90] sm:$0xff]
    %v2967 = vld [vmem:[%s10 + $0x98] sm:$0xff]
    %v2968 = vld [vmem:[%s10 + $0xa0] sm:$0xff]
    %v2969 = vld [vmem:[%s10 + $0xa8] sm:$0xff]
    %v2970 = vld [vmem:[%s10 + $0xb0] sm:$0xff]
    %v2971 = vld [vmem:[%s10 + $0xb8] sm:$0xff]
    %v2972 = vld [vmem:[%s10 + $0xc0] sm:$0xff]
    %v2973 = vld [vmem:[%s10 + $0xc8] sm:$0xff]
    %v2974 = vld [vmem:[%s10 + $0xd0] sm:$0xff]
    %v2975 = vld [vmem:[%s10 + $0xd8] sm:$0xff]
    %v2976 = vld [vmem:[%s10 + $0xe0] sm:$0xff]
    %v2977 = vld [vmem:[%s10 + $0xe8] sm:$0xff]
    %v2978 = vld [vmem:[%s10 + $0xf0] sm:$0xff]
    %v2979 = vld [vmem:[%s10 + $0xf8] sm:$0xff]
    %v2980 = vld [vmem:[%s11] sm:$0x1]
    %v2982 = vlaneseq
    %v2983 = vshrl.u32 %v2982, 7
    %v2984 = vsub.s32 0, %v2983
    %v2985 = vrot.slane %v2980, %v2984
    %2987 = vmatprep.subr.mxu0 0.0
    %v2988 = vand.u32 %v2948, 4294901760
    %2989 = vmatpush1.msra.mxu0 %v2988
    %2990 = vmatprep.subr.mxu0 0.0
    %v2991 = vand.u32 %v2949, 4294901760
    %2992 = vmatpush1.msra.mxu0 %v2991
    %2993 = vmatprep.subr.mxu0 0.0
    %v2994 = vand.u32 %v2950, 4294901760
    %2995 = vmatpush1.msra.mxu0 %v2994
    %2996 = vmatprep.subr.mxu0 0.0
    %v2997 = vand.u32 %v2951, 4294901760
    %2998 = vmatpush1.msra.mxu0 %v2997
    %2999 = vmatprep.subr.mxu0 0.0
    %v3000 = vand.u32 %v2952, 4294901760
    %3001 = vmatpush1.msra.mxu0 %v3000
    %3002 = vmatprep.subr.mxu0 0.0
    %v3003 = vand.u32 %v2953, 4294901760
    %3004 = vmatpush1.msra.mxu0 %v3003
    %3005 = vmatprep.subr.mxu0 0.0
    %v3006 = vand.u32 %v2954, 4294901760
    %3007 = vmatpush1.msra.mxu0 %v3006
    %3008 = vmatprep.subr.mxu0 0.0
    %v3009 = vand.u32 %v2955, 4294901760
    %3010 = vmatpush1.msra.mxu0 %v3009
    %3011 = vmatprep.subr.mxu0 0.0
    %v3012 = vand.u32 %v2956, 4294901760
    %3013 = vmatpush1.msra.mxu0 %v3012
    %3014 = vmatprep.subr.mxu0 0.0
    %v3015 = vand.u32 %v2957, 4294901760
    %3016 = vmatpush1.msra.mxu0 %v3015
    %3017 = vmatprep.subr.mxu0 0.0
    %v3018 = vand.u32 %v2958, 4294901760
    %3019 = vmatpush1.msra.mxu0 %v3018
    %3020 = vmatprep.subr.mxu0 0.0
    %v3021 = vand.u32 %v2959, 4294901760
    %3022 = vmatpush1.msra.mxu0 %v3021
    %3023 = vmatprep.subr.mxu0 0.0
    %v3024 = vand.u32 %v2960, 4294901760
    %3025 = vmatpush1.msra.mxu0 %v3024
    %3026 = vmatprep.subr.mxu0 0.0
    %v3027 = vand.u32 %v2961, 4294901760
    %3028 = vmatpush1.msra.mxu0 %v3027
    %3029 = vmatprep.subr.mxu0 0.0
    %v3030 = vand.u32 %v2962, 4294901760
    %3031 = vmatpush1.msra.mxu0 %v3030
    %3032 = vmatprep.subr.mxu0 0.0
    %v3033 = vand.u32 %v2963, 4294901760
    %3034 = vmatpush1.msra.mxu0 %v3033
    %3035 = vmatprep.subr.mxu0 0.0
    %v3036 = vand.u32 %v2964, 4294901760
    %3037 = vmatpush1.msra.mxu0 %v3036
    %3038 = vmatprep.subr.mxu0 0.0
    %v3039 = vand.u32 %v2965, 4294901760
    %3040 = vmatpush1.msra.mxu0 %v3039
    %3041 = vmatprep.subr.mxu0 0.0
    %v3042 = vand.u32 %v2966, 4294901760
    %3043 = vmatpush1.msra.mxu0 %v3042
    %3044 = vmatprep.subr.mxu0 0.0
    %v3045 = vand.u32 %v2967, 4294901760
    %3046 = vmatpush1.msra.mxu0 %v3045
    %3047 = vmatprep.subr.mxu0 0.0
    %v3048 = vand.u32 %v2968, 4294901760
    %3049 = vmatpush1.msra.mxu0 %v3048
    %3050 = vmatprep.subr.mxu0 0.0
    %v3051 = vand.u32 %v2969, 4294901760
    %3052 = vmatpush1.msra.mxu0 %v3051
    %3053 = vmatprep.subr.mxu0 0.0
    %v3054 = vand.u32 %v2970, 4294901760
    %3055 = vmatpush1.msra.mxu0 %v3054
    %3056 = vmatprep.subr.mxu0 0.0
    %v3057 = vand.u32 %v2971, 4294901760
    %3058 = vmatpush1.msra.mxu0 %v3057
    %3059 = vmatprep.subr.mxu0 0.0
    %v3060 = vand.u32 %v2972, 4294901760
    %3061 = vmatpush1.msra.mxu0 %v3060
    %3062 = vmatprep.subr.mxu0 0.0
    %v3063 = vand.u32 %v2973, 4294901760
    %3064 = vmatpush1.msra.mxu0 %v3063
    %3065 = vmatprep.subr.mxu0 0.0
    %v3066 = vand.u32 %v2974, 4294901760
    %3067 = vmatpush1.msra.mxu0 %v3066
    %3068 = vmatprep.subr.mxu0 0.0
    %v3069 = vand.u32 %v2975, 4294901760
    %3070 = vmatpush1.msra.mxu0 %v3069
    %3071 = vmatprep.subr.mxu0 0.0
    %v3072 = vand.u32 %v2976, 4294901760
    %3073 = vmatpush1.msra.mxu0 %v3072
    %3074 = vmatprep.subr.mxu0 0.0
    %v3075 = vand.u32 %v2977, 4294901760
    %3076 = vmatpush1.msra.mxu0 %v3075
    %3077 = vmatprep.subr.mxu0 0.0
    %v3078 = vand.u32 %v2978, 4294901760
    %3079 = vmatpush1.msra.mxu0 %v3078
    %3080 = vmatprep.subr.mxu0 0.0
    %v3081 = vand.u32 %v2979, 4294901760
    %3082 = vmatpush1.msra.mxu0 %v3081
    %v3083 = vand.u32 %v2947, 4294901760
    %v3084 = vsub.f32 %v2947, %v3083
    %v3085 = vand.u32 %v3084, 4294901760
    %v3086 = vsub.f32 %v3084, %v3085
    %v3087 = vand.u32 %v3086, 4294901760
    %3088 = vmatprep.mubr.f32.mxu0 %v3087
    %v3089 = vand.u32 %v2946, 4294901760
    %v3090 = vsub.f32 %v2946, %v3089
    %v3091 = vand.u32 %v3090, 4294901760
    %v3092 = vsub.f32 %v3090, %v3091
    %v3093 = vand.u32 %v3092, 4294901760
    %3094 = vmatmul.mubr.f32.gmra.mrb[0].mxu0 %v3093
    %v3095 = vpop.f32.mrb[0].mxu0
    %v3096 = vadd.f32 %v2985, %v3095
    %v3097 = vpop.f32.mrb[0].mxu0
    %3098 = vdwg.mxu0
    %3099 = vmatprep.subr.mxu0 0.0
    %v3100 = vand.u32 %v2948, 4294901760
    %v3101 = vsub.f32 %v2948, %v3100
    %v3102 = vand.u32 %v3101, 4294901760
    %v3103 = vsub.f32 %v3101, %v3102
    %v3104 = vand.u32 %v3103, 4294901760
    %3105 = vmatpush1.msra.mxu0 %v3104
    %3106 = vmatprep.subr.mxu0 0.0
    %v3107 = vand.u32 %v2949, 4294901760
    %v3108 = vsub.f32 %v2949, %v3107
    %v3109 = vand.u32 %v3108, 4294901760
    %v3110 = vsub.f32 %v3108, %v3109
    %v3111 = vand.u32 %v3110, 4294901760
    %3112 = vmatpush1.msra.mxu0 %v3111
    %3113 = vmatprep.subr.mxu0 0.0
    %v3114 = vand.u32 %v2950, 4294901760
    %v3115 = vsub.f32 %v2950, %v3114
    %v3116 = vand.u32 %v3115, 4294901760
    %v3117 = vsub.f32 %v3115, %v3116
    %v3118 = vand.u32 %v3117, 4294901760
    %3119 = vmatpush1.msra.mxu0 %v3118
    %3120 = vmatprep.subr.mxu0 0.0
    %v3121 = vand.u32 %v2951, 4294901760
    %v3122 = vsub.f32 %v2951, %v3121
    %v3123 = vand.u32 %v3122, 4294901760
    %v3124 = vsub.f32 %v3122, %v3123
    %v3125 = vand.u32 %v3124, 4294901760
    %3126 = vmatpush1.msra.mxu0 %v3125
    %3127 = vmatprep.subr.mxu0 0.0
    %v3128 = vand.u32 %v2952, 4294901760
    %v3129 = vsub.f32 %v2952, %v3128
    %v3130 = vand.u32 %v3129, 4294901760
    %v3131 = vsub.f32 %v3129, %v3130
    %v3132 = vand.u32 %v3131, 4294901760
    %3133 = vmatpush1.msra.mxu0 %v3132
    %3134 = vmatprep.subr.mxu0 0.0
    %v3135 = vand.u32 %v2953, 4294901760
    %v3136 = vsub.f32 %v2953, %v3135
    %v3137 = vand.u32 %v3136, 4294901760
    %v3138 = vsub.f32 %v3136, %v3137
    %v3139 = vand.u32 %v3138, 4294901760
    %3140 = vmatpush1.msra.mxu0 %v3139
    %3141 = vmatprep.subr.mxu0 0.0
    %v3142 = vand.u32 %v2954, 4294901760
    %v3143 = vsub.f32 %v2954, %v3142
    %v3144 = vand.u32 %v3143, 4294901760
    %v3145 = vsub.f32 %v3143, %v3144
    %v3146 = vand.u32 %v3145, 4294901760
    %3147 = vmatpush1.msra.mxu0 %v3146
    %3148 = vmatprep.subr.mxu0 0.0
    %v3149 = vand.u32 %v2955, 4294901760
    %v3150 = vsub.f32 %v2955, %v3149
    %v3151 = vand.u32 %v3150, 4294901760
    %v3152 = vsub.f32 %v3150, %v3151
    %v3153 = vand.u32 %v3152, 4294901760
    %3154 = vmatpush1.msra.mxu0 %v3153
    %3155 = vmatprep.subr.mxu0 0.0
    %v3156 = vand.u32 %v2956, 4294901760
    %v3157 = vsub.f32 %v2956, %v3156
    %v3158 = vand.u32 %v3157, 4294901760
    %v3159 = vsub.f32 %v3157, %v3158
    %v3160 = vand.u32 %v3159, 4294901760
    %3161 = vmatpush1.msra.mxu0 %v3160
    %3162 = vmatprep.subr.mxu0 0.0
    %v3163 = vand.u32 %v2957, 4294901760
    %v3164 = vsub.f32 %v2957, %v3163
    %v3165 = vand.u32 %v3164, 4294901760
    %v3166 = vsub.f32 %v3164, %v3165
    %v3167 = vand.u32 %v3166, 4294901760
    %3168 = vmatpush1.msra.mxu0 %v3167
    %3169 = vmatprep.subr.mxu0 0.0
    %v3170 = vand.u32 %v2958, 4294901760
    %v3171 = vsub.f32 %v2958, %v3170
    %v3172 = vand.u32 %v3171, 4294901760
    %v3173 = vsub.f32 %v3171, %v3172
    %v3174 = vand.u32 %v3173, 4294901760
    %3175 = vmatpush1.msra.mxu0 %v3174
    %3176 = vmatprep.subr.mxu0 0.0
    %v3177 = vand.u32 %v2959, 4294901760
    %v3178 = vsub.f32 %v2959, %v3177
    %v3179 = vand.u32 %v3178, 4294901760
    %v3180 = vsub.f32 %v3178, %v3179
    %v3181 = vand.u32 %v3180, 4294901760
    %3182 = vmatpush1.msra.mxu0 %v3181
    %3183 = vmatprep.subr.mxu0 0.0
    %v3184 = vand.u32 %v2960, 4294901760
    %v3185 = vsub.f32 %v2960, %v3184
    %v3186 = vand.u32 %v3185, 4294901760
    %v3187 = vsub.f32 %v3185, %v3186
    %v3188 = vand.u32 %v3187, 4294901760
    %3189 = vmatpush1.msra.mxu0 %v3188
    %3190 = vmatprep.subr.mxu0 0.0
    %v3191 = vand.u32 %v2961, 4294901760
    %v3192 = vsub.f32 %v2961, %v3191
    %v3193 = vand.u32 %v3192, 4294901760
    %v3194 = vsub.f32 %v3192, %v3193
    %v3195 = vand.u32 %v3194, 4294901760
    %3196 = vmatpush1.msra.mxu0 %v3195
    %3197 = vmatprep.subr.mxu0 0.0
    %v3198 = vand.u32 %v2962, 4294901760
    %v3199 = vsub.f32 %v2962, %v3198
    %v3200 = vand.u32 %v3199, 4294901760
    %v3201 = vsub.f32 %v3199, %v3200
    %v3202 = vand.u32 %v3201, 4294901760
    %3203 = vmatpush1.msra.mxu0 %v3202
    %3204 = vmatprep.subr.mxu0 0.0
    %v3205 = vand.u32 %v2963, 4294901760
    %v3206 = vsub.f32 %v2963, %v3205
    %v3207 = vand.u32 %v3206, 4294901760
    %v3208 = vsub.f32 %v3206, %v3207
    %v3209 = vand.u32 %v3208, 4294901760
    %3210 = vmatpush1.msra.mxu0 %v3209
    %3211 = vmatprep.subr.mxu0 0.0
    %v3212 = vand.u32 %v2964, 4294901760
    %v3213 = vsub.f32 %v2964, %v3212
    %v3214 = vand.u32 %v3213, 4294901760
    %v3215 = vsub.f32 %v3213, %v3214
    %v3216 = vand.u32 %v3215, 4294901760
    %3217 = vmatpush1.msra.mxu0 %v3216
    %3218 = vmatprep.subr.mxu0 0.0
    %v3219 = vand.u32 %v2965, 4294901760
    %v3220 = vsub.f32 %v2965, %v3219
    %v3221 = vand.u32 %v3220, 4294901760
    %v3222 = vsub.f32 %v3220, %v3221
    %v3223 = vand.u32 %v3222, 4294901760
    %3224 = vmatpush1.msra.mxu0 %v3223
    %3225 = vmatprep.subr.mxu0 0.0
    %v3226 = vand.u32 %v2966, 4294901760
    %v3227 = vsub.f32 %v2966, %v3226
    %v3228 = vand.u32 %v3227, 4294901760
    %v3229 = vsub.f32 %v3227, %v3228
    %v3230 = vand.u32 %v3229, 4294901760
    %3231 = vmatpush1.msra.mxu0 %v3230
    %3232 = vmatprep.subr.mxu0 0.0
    %v3233 = vand.u32 %v2967, 4294901760
    %v3234 = vsub.f32 %v2967, %v3233
    %v3235 = vand.u32 %v3234, 4294901760
    %v3236 = vsub.f32 %v3234, %v3235
    %v3237 = vand.u32 %v3236, 4294901760
    %3238 = vmatpush1.msra.mxu0 %v3237
    %3239 = vmatprep.subr.mxu0 0.0
    %v3240 = vand.u32 %v2968, 4294901760
    %v3241 = vsub.f32 %v2968, %v3240
    %v3242 = vand.u32 %v3241, 4294901760
    %v3243 = vsub.f32 %v3241, %v3242
    %v3244 = vand.u32 %v3243, 4294901760
    %3245 = vmatpush1.msra.mxu0 %v3244
    %3246 = vmatprep.subr.mxu0 0.0
    %v3247 = vand.u32 %v2969, 4294901760
    %v3248 = vsub.f32 %v2969, %v3247
    %v3249 = vand.u32 %v3248, 4294901760
    %v3250 = vsub.f32 %v3248, %v3249
    %v3251 = vand.u32 %v3250, 4294901760
    %3252 = vmatpush1.msra.mxu0 %v3251
    %3253 = vmatprep.subr.mxu0 0.0
    %v3254 = vand.u32 %v2970, 4294901760
    %v3255 = vsub.f32 %v2970, %v3254
    %v3256 = vand.u32 %v3255, 4294901760
    %v3257 = vsub.f32 %v3255, %v3256
    %v3258 = vand.u32 %v3257, 4294901760
    %3259 = vmatpush1.msra.mxu0 %v3258
    %3260 = vmatprep.subr.mxu0 0.0
    %v3261 = vand.u32 %v2971, 4294901760
    %v3262 = vsub.f32 %v2971, %v3261
    %v3263 = vand.u32 %v3262, 4294901760
    %v3264 = vsub.f32 %v3262, %v3263
    %v3265 = vand.u32 %v3264, 4294901760
    %3266 = vmatpush1.msra.mxu0 %v3265
    %3267 = vmatprep.subr.mxu0 0.0
    %v3268 = vand.u32 %v2972, 4294901760
    %v3269 = vsub.f32 %v2972, %v3268
    %v3270 = vand.u32 %v3269, 4294901760
    %v3271 = vsub.f32 %v3269, %v3270
    %v3272 = vand.u32 %v3271, 4294901760
    %3273 = vmatpush1.msra.mxu0 %v3272
    %3274 = vmatprep.subr.mxu0 0.0
    %v3275 = vand.u32 %v2973, 4294901760
    %v3276 = vsub.f32 %v2973, %v3275
    %v3277 = vand.u32 %v3276, 4294901760
    %v3278 = vsub.f32 %v3276, %v3277
    %v3279 = vand.u32 %v3278, 4294901760
    %3280 = vmatpush1.msra.mxu0 %v3279
    %3281 = vmatprep.subr.mxu0 0.0
    %v3282 = vand.u32 %v2974, 4294901760
    %v3283 = vsub.f32 %v2974, %v3282
    %v3284 = vand.u32 %v3283, 4294901760
    %v3285 = vsub.f32 %v3283, %v3284
    %v3286 = vand.u32 %v3285, 4294901760
    %3287 = vmatpush1.msra.mxu0 %v3286
    %3288 = vmatprep.subr.mxu0 0.0
    %v3289 = vand.u32 %v2975, 4294901760
    %v3290 = vsub.f32 %v2975, %v3289
    %v3291 = vand.u32 %v3290, 4294901760
    %v3292 = vsub.f32 %v3290, %v3291
    %v3293 = vand.u32 %v3292, 4294901760
    %3294 = vmatpush1.msra.mxu0 %v3293
    %3295 = vmatprep.subr.mxu0 0.0
    %v3296 = vand.u32 %v2976, 4294901760
    %v3297 = vsub.f32 %v2976, %v3296
    %v3298 = vand.u32 %v3297, 4294901760
    %v3299 = vsub.f32 %v3297, %v3298
    %v3300 = vand.u32 %v3299, 4294901760
    %3301 = vmatpush1.msra.mxu0 %v3300
    %3302 = vmatprep.subr.mxu0 0.0
    %v3303 = vand.u32 %v2977, 4294901760
    %v3304 = vsub.f32 %v2977, %v3303
    %v3305 = vand.u32 %v3304, 4294901760
    %v3306 = vsub.f32 %v3304, %v3305
    %v3307 = vand.u32 %v3306, 4294901760
    %3308 = vmatpush1.msra.mxu0 %v3307
    %3309 = vmatprep.subr.mxu0 0.0
    %v3310 = vand.u32 %v2978, 4294901760
    %v3311 = vsub.f32 %v2978, %v3310
    %v3312 = vand.u32 %v3311, 4294901760
    %v3313 = vsub.f32 %v3311, %v3312
    %v3314 = vand.u32 %v3313, 4294901760
    %3315 = vmatpush1.msra.mxu0 %v3314
    %3316 = vmatprep.subr.mxu0 0.0
    %v3317 = vand.u32 %v2979, 4294901760
    %v3318 = vsub.f32 %v2979, %v3317
    %v3319 = vand.u32 %v3318, 4294901760
    %v3320 = vsub.f32 %v3318, %v3319
    %v3321 = vand.u32 %v3320, 4294901760
    %3322 = vmatpush1.msra.mxu0 %v3321
    %v3323 = vand.u32 %v2947, 4294901760
    %3324 = vmatprep.mubr.f32.mxu0 %v3323
    %v3325 = vand.u32 %v2946, 4294901760
    %3326 = vmatmul.mubr.f32.gmra.mrb[0].mxu0 %v3325
    %v3327 = vpop.f32.mrb[0].mxu0
    %v3328 = vadd.f32 %v3096, %v3327
    %v3329 = vpop.f32.mrb[0].mxu0
    %3330 = vdwg.mxu0
    %3331 = vmatprep.subr.mxu0 0.0
    %v3332 = vand.u32 %v2948, 4294901760
    %v3333 = vsub.f32 %v2948, %v3332
    %3334 = vmatpush1.msra.mxu0 %v3333
    %3335 = vmatprep.subr.mxu0 0.0
    %v3336 = vand.u32 %v2949, 4294901760
    %v3337 = vsub.f32 %v2949, %v3336
    %3338 = vmatpush1.msra.mxu0 %v3337
    %3339 = vmatprep.subr.mxu0 0.0
    %v3340 = vand.u32 %v2950, 4294901760
    %v3341 = vsub.f32 %v2950, %v3340
    %3342 = vmatpush1.msra.mxu0 %v3341
    %3343 = vmatprep.subr.mxu0 0.0
    %v3344 = vand.u32 %v2951, 4294901760
    %v3345 = vsub.f32 %v2951, %v3344
    %3346 = vmatpush1.msra.mxu0 %v3345
    %3347 = vmatprep.subr.mxu0 0.0
    %v3348 = vand.u32 %v2952, 4294901760
    %v3349 = vsub.f32 %v2952, %v3348
    %3350 = vmatpush1.msra.mxu0 %v3349
    %3351 = vmatprep.subr.mxu0 0.0
    %v3352 = vand.u32 %v2953, 4294901760
    %v3353 = vsub.f32 %v2953, %v3352
    %3354 = vmatpush1.msra.mxu0 %v3353
    %3355 = vmatprep.subr.mxu0 0.0
    %v3356 = vand.u32 %v2954, 4294901760
    %v3357 = vsub.f32 %v2954, %v3356
    %3358 = vmatpush1.msra.mxu0 %v3357
    %3359 = vmatprep.subr.mxu0 0.0
    %v3360 = vand.u32 %v2955, 4294901760
    %v3361 = vsub.f32 %v2955, %v3360
    %3362 = vmatpush1.msra.mxu0 %v3361
    %3363 = vmatprep.subr.mxu0 0.0
    %v3364 = vand.u32 %v2956, 4294901760
    %v3365 = vsub.f32 %v2956, %v3364
    %3366 = vmatpush1.msra.mxu0 %v3365
    %3367 = vmatprep.subr.mxu0 0.0
    %v3368 = vand.u32 %v2957, 4294901760
    %v3369 = vsub.f32 %v2957, %v3368
    %3370 = vmatpush1.msra.mxu0 %v3369
    %3371 = vmatprep.subr.mxu0 0.0
    %v3372 = vand.u32 %v2958, 4294901760
    %v3373 = vsub.f32 %v2958, %v3372
    %3374 = vmatpush1.msra.mxu0 %v3373
    %3375 = vmatprep.subr.mxu0 0.0
    %v3376 = vand.u32 %v2959, 4294901760
    %v3377 = vsub.f32 %v2959, %v3376
    %3378 = vmatpush1.msra.mxu0 %v3377
    %3379 = vmatprep.subr.mxu0 0.0
    %v3380 = vand.u32 %v2960, 4294901760
    %v3381 = vsub.f32 %v2960, %v3380
    %3382 = vmatpush1.msra.mxu0 %v3381
    %3383 = vmatprep.subr.mxu0 0.0
    %v3384 = vand.u32 %v2961, 4294901760
    %v3385 = vsub.f32 %v2961, %v3384
    %3386 = vmatpush1.msra.mxu0 %v3385
    %3387 = vmatprep.subr.mxu0 0.0
    %v3388 = vand.u32 %v2962, 4294901760
    %v3389 = vsub.f32 %v2962, %v3388
    %3390 = vmatpush1.msra.mxu0 %v3389
    %3391 = vmatprep.subr.mxu0 0.0
    %v3392 = vand.u32 %v2963, 4294901760
    %v3393 = vsub.f32 %v2963, %v3392
    %3394 = vmatpush1.msra.mxu0 %v3393
    %3395 = vmatprep.subr.mxu0 0.0
    %v3396 = vand.u32 %v2964, 4294901760
    %v3397 = vsub.f32 %v2964, %v3396
    %3398 = vmatpush1.msra.mxu0 %v3397
    %3399 = vmatprep.subr.mxu0 0.0
    %v3400 = vand.u32 %v2965, 4294901760
    %v3401 = vsub.f32 %v2965, %v3400
    %3402 = vmatpush1.msra.mxu0 %v3401
    %3403 = vmatprep.subr.mxu0 0.0
    %v3404 = vand.u32 %v2966, 4294901760
    %v3405 = vsub.f32 %v2966, %v3404
    %3406 = vmatpush1.msra.mxu0 %v3405
    %3407 = vmatprep.subr.mxu0 0.0
    %v3408 = vand.u32 %v2967, 4294901760
    %v3409 = vsub.f32 %v2967, %v3408
    %3410 = vmatpush1.msra.mxu0 %v3409
    %3411 = vmatprep.subr.mxu0 0.0
    %v3412 = vand.u32 %v2968, 4294901760
    %v3413 = vsub.f32 %v2968, %v3412
    %3414 = vmatpush1.msra.mxu0 %v3413
    %3415 = vmatprep.subr.mxu0 0.0
    %v3416 = vand.u32 %v2969, 4294901760
    %v3417 = vsub.f32 %v2969, %v3416
    %3418 = vmatpush1.msra.mxu0 %v3417
    %3419 = vmatprep.subr.mxu0 0.0
    %v3420 = vand.u32 %v2970, 4294901760
    %v3421 = vsub.f32 %v2970, %v3420
    %3422 = vmatpush1.msra.mxu0 %v3421
    %3423 = vmatprep.subr.mxu0 0.0
    %v3424 = vand.u32 %v2971, 4294901760
    %v3425 = vsub.f32 %v2971, %v3424
    %3426 = vmatpush1.msra.mxu0 %v3425
    %3427 = vmatprep.subr.mxu0 0.0
    %v3428 = vand.u32 %v2972, 4294901760
    %v3429 = vsub.f32 %v2972, %v3428
    %3430 = vmatpush1.msra.mxu0 %v3429
    %3431 = vmatprep.subr.mxu0 0.0
    %v3432 = vand.u32 %v2973, 4294901760
    %v3433 = vsub.f32 %v2973, %v3432
    %3434 = vmatpush1.msra.mxu0 %v3433
    %3435 = vmatprep.subr.mxu0 0.0
    %v3436 = vand.u32 %v2974, 4294901760
    %v3437 = vsub.f32 %v2974, %v3436
    %3438 = vmatpush1.msra.mxu0 %v3437
    %3439 = vmatprep.subr.mxu0 0.0
    %v3440 = vand.u32 %v2975, 4294901760
    %v3441 = vsub.f32 %v2975, %v3440
    %3442 = vmatpush1.msra.mxu0 %v3441
    %3443 = vmatprep.subr.mxu0 0.0
    %v3444 = vand.u32 %v2976, 4294901760
    %v3445 = vsub.f32 %v2976, %v3444
    %3446 = vmatpush1.msra.mxu0 %v3445
    %3447 = vmatprep.subr.mxu0 0.0
    %v3448 = vand.u32 %v2977, 4294901760
    %v3449 = vsub.f32 %v2977, %v3448
    %3450 = vmatpush1.msra.mxu0 %v3449
    %3451 = vmatprep.subr.mxu0 0.0
    %v3452 = vand.u32 %v2978, 4294901760
    %v3453 = vsub.f32 %v2978, %v3452
    %3454 = vmatpush1.msra.mxu0 %v3453
    %3455 = vmatprep.subr.mxu0 0.0
    %v3456 = vand.u32 %v2979, 4294901760
    %v3457 = vsub.f32 %v2979, %v3456
    %3458 = vmatpush1.msra.mxu0 %v3457
    %v3459 = vand.u32 %v2947, 4294901760
    %v3460 = vsub.f32 %v2947, %v3459
    %3461 = vmatprep.mubr.f32.mxu0 %v3460
    %v3462 = vand.u32 %v2946, 4294901760
    %v3463 = vsub.f32 %v2946, %v3462
    %3464 = vmatmul.mubr.f32.gmra.mrb[0].mxu0 %v3463
    %v3465 = vpop.f32.mrb[0].mxu0
    %v3466 = vadd.f32 %v3328, %v3465
    %v3467 = vpop.f32.mrb[0].mxu0
    %3468 = vdwg.mxu0
    %3469 = vmatprep.subr.mxu0 0.0
    %v3470 = vand.u32 %v2948, 4294901760
    %3471 = vmatpush1.msra.mxu0 %v3470
    %3472 = vmatprep.subr.mxu0 0.0
    %v3473 = vand.u32 %v2949, 4294901760
    %3474 = vmatpush1.msra.mxu0 %v3473
    %3475 = vmatprep.subr.mxu0 0.0
    %v3476 = vand.u32 %v2950, 4294901760
    %3477 = vmatpush1.msra.mxu0 %v3476
    %3478 = vmatprep.subr.mxu0 0.0
    %v3479 = vand.u32 %v2951, 4294901760
    %3480 = vmatpush1.msra.mxu0 %v3479
    %3481 = vmatprep.subr.mxu0 0.0
    %v3482 = vand.u32 %v2952, 4294901760
    %3483 = vmatpush1.msra.mxu0 %v3482
    %3484 = vmatprep.subr.mxu0 0.0
    %v3485 = vand.u32 %v2953, 4294901760
    %3486 = vmatpush1.msra.mxu0 %v3485
    %3487 = vmatprep.subr.mxu0 0.0
    %v3488 = vand.u32 %v2954, 4294901760
    %3489 = vmatpush1.msra.mxu0 %v3488
    %3490 = vmatprep.subr.mxu0 0.0
    %v3491 = vand.u32 %v2955, 4294901760
    %3492 = vmatpush1.msra.mxu0 %v3491
    %3493 = vmatprep.subr.mxu0 0.0
    %v3494 = vand.u32 %v2956, 4294901760
    %3495 = vmatpush1.msra.mxu0 %v3494
    %3496 = vmatprep.subr.mxu0 0.0
    %v3497 = vand.u32 %v2957, 4294901760
    %3498 = vmatpush1.msra.mxu0 %v3497
    %3499 = vmatprep.subr.mxu0 0.0
    %v3500 = vand.u32 %v2958, 4294901760
    %3501 = vmatpush1.msra.mxu0 %v3500
    %3502 = vmatprep.subr.mxu0 0.0
    %v3503 = vand.u32 %v2959, 4294901760
    %3504 = vmatpush1.msra.mxu0 %v3503
    %3505 = vmatprep.subr.mxu0 0.0
    %v3506 = vand.u32 %v2960, 4294901760
    %3507 = vmatpush1.msra.mxu0 %v3506
    %3508 = vmatprep.subr.mxu0 0.0
    %v3509 = vand.u32 %v2961, 4294901760
    %3510 = vmatpush1.msra.mxu0 %v3509
    %3511 = vmatprep.subr.mxu0 0.0
    %v3512 = vand.u32 %v2962, 4294901760
    %3513 = vmatpush1.msra.mxu0 %v3512
    %3514 = vmatprep.subr.mxu0 0.0
    %v3515 = vand.u32 %v2963, 4294901760
    %3516 = vmatpush1.msra.mxu0 %v3515
    %3517 = vmatprep.subr.mxu0 0.0
    %v3518 = vand.u32 %v2964, 4294901760
    %3519 = vmatpush1.msra.mxu0 %v3518
    %3520 = vmatprep.subr.mxu0 0.0
    %v3521 = vand.u32 %v2965, 4294901760
    %3522 = vmatpush1.msra.mxu0 %v3521
    %3523 = vmatprep.subr.mxu0 0.0
    %v3524 = vand.u32 %v2966, 4294901760
    %3525 = vmatpush1.msra.mxu0 %v3524
    %3526 = vmatprep.subr.mxu0 0.0
    %v3527 = vand.u32 %v2967, 4294901760
    %3528 = vmatpush1.msra.mxu0 %v3527
    %3529 = vmatprep.subr.mxu0 0.0
    %v3530 = vand.u32 %v2968, 4294901760
    %3531 = vmatpush1.msra.mxu0 %v3530
    %3532 = vmatprep.subr.mxu0 0.0
    %v3533 = vand.u32 %v2969, 4294901760
    %3534 = vmatpush1.msra.mxu0 %v3533
    %3535 = vmatprep.subr.mxu0 0.0
    %v3536 = vand.u32 %v2970, 4294901760
    %3537 = vmatpush1.msra.mxu0 %v3536
    %3538 = vmatprep.subr.mxu0 0.0
    %v3539 = vand.u32 %v2971, 4294901760
    %3540 = vmatpush1.msra.mxu0 %v3539
    %3541 = vmatprep.subr.mxu0 0.0
    %v3542 = vand.u32 %v2972, 4294901760
    %3543 = vmatpush1.msra.mxu0 %v3542
    %3544 = vmatprep.subr.mxu0 0.0
    %v3545 = vand.u32 %v2973, 4294901760
    %3546 = vmatpush1.msra.mxu0 %v3545
    %3547 = vmatprep.subr.mxu0 0.0
    %v3548 = vand.u32 %v2974, 4294901760
    %3549 = vmatpush1.msra.mxu0 %v3548
    %3550 = vmatprep.subr.mxu0 0.0
    %v3551 = vand.u32 %v2975, 4294901760
    %3552 = vmatpush1.msra.mxu0 %v3551
    %3553 = vmatprep.subr.mxu0 0.0
    %v3554 = vand.u32 %v2976, 4294901760
    %3555 = vmatpush1.msra.mxu0 %v3554
    %3556 = vmatprep.subr.mxu0 0.0
    %v3557 = vand.u32 %v2977, 4294901760
    %3558 = vmatpush1.msra.mxu0 %v3557
    %3559 = vmatprep.subr.mxu0 0.0
    %v3560 = vand.u32 %v2978, 4294901760
    %3561 = vmatpush1.msra.mxu0 %v3560
    %3562 = vmatprep.subr.mxu0 0.0
    %v3563 = vand.u32 %v2979, 4294901760
    %3564 = vmatpush1.msra.mxu0 %v3563
    %v3565 = vand.u32 %v2947, 4294901760
    %v3566 = vsub.f32 %v2947, %v3565
    %v3567 = vand.u32 %v3566, 4294901760
    %3568 = vmatprep.mubr.f32.mxu0 %v3567
    %v3569 = vand.u32 %v2946, 4294901760
    %v3570 = vsub.f32 %v2946, %v3569
    %v3571 = vand.u32 %v3570, 4294901760
    %3572 = vmatmul.mubr.f32.gmra.mrb[0].mxu0 %v3571
    %v3573 = vpop.f32.mrb[0].mxu0
    %v3574 = vadd.f32 %v3466, %v3573
    %v3575 = vpop.f32.mrb[0].mxu0
    %3576 = vdwg.mxu0
    %3577 = vmatprep.subr.mxu0 0.0
    %v3578 = vand.u32 %v2948, 4294901760
    %v3579 = vsub.f32 %v2948, %v3578
    %v3580 = vand.u32 %v3579, 4294901760
    %3581 = vmatpush1.msra.mxu0 %v3580
    %3582 = vmatprep.subr.mxu0 0.0
    %v3583 = vand.u32 %v2949, 4294901760
    %v3584 = vsub.f32 %v2949, %v3583
    %v3585 = vand.u32 %v3584, 4294901760
    %3586 = vmatpush1.msra.mxu0 %v3585
    %3587 = vmatprep.subr.mxu0 0.0
    %v3588 = vand.u32 %v2950, 4294901760
    %v3589 = vsub.f32 %v2950, %v3588
    %v3590 = vand.u32 %v3589, 4294901760
    %3591 = vmatpush1.msra.mxu0 %v3590
    %3592 = vmatprep.subr.mxu0 0.0
    %v3593 = vand.u32 %v2951, 4294901760
    %v3594 = vsub.f32 %v2951, %v3593
    %v3595 = vand.u32 %v3594, 4294901760
    %3596 = vmatpush1.msra.mxu0 %v3595
    %3597 = vmatprep.subr.mxu0 0.0
    %v3598 = vand.u32 %v2952, 4294901760
    %v3599 = vsub.f32 %v2952, %v3598
    %v3600 = vand.u32 %v3599, 4294901760
    %3601 = vmatpush1.msra.mxu0 %v3600
    %3602 = vmatprep.subr.mxu0 0.0
    %v3603 = vand.u32 %v2953, 4294901760
    %v3604 = vsub.f32 %v2953, %v3603
    %v3605 = vand.u32 %v3604, 4294901760
    %3606 = vmatpush1.msra.mxu0 %v3605
    %3607 = vmatprep.subr.mxu0 0.0
    %v3608 = vand.u32 %v2954, 4294901760
    %v3609 = vsub.f32 %v2954, %v3608
    %v3610 = vand.u32 %v3609, 4294901760
    %3611 = vmatpush1.msra.mxu0 %v3610
    %3612 = vmatprep.subr.mxu0 0.0
    %v3613 = vand.u32 %v2955, 4294901760
    %v3614 = vsub.f32 %v2955, %v3613
    %v3615 = vand.u32 %v3614, 4294901760
    %3616 = vmatpush1.msra.mxu0 %v3615
    %3617 = vmatprep.subr.mxu0 0.0
    %v3618 = vand.u32 %v2956, 4294901760
    %v3619 = vsub.f32 %v2956, %v3618
    %v3620 = vand.u32 %v3619, 4294901760
    %3621 = vmatpush1.msra.mxu0 %v3620
    %3622 = vmatprep.subr.mxu0 0.0
    %v3623 = vand.u32 %v2957, 4294901760
    %v3624 = vsub.f32 %v2957, %v3623
    %v3625 = vand.u32 %v3624, 4294901760
    %3626 = vmatpush1.msra.mxu0 %v3625
    %3627 = vmatprep.subr.mxu0 0.0
    %v3628 = vand.u32 %v2958, 4294901760
    %v3629 = vsub.f32 %v2958, %v3628
    %v3630 = vand.u32 %v3629, 4294901760
    %3631 = vmatpush1.msra.mxu0 %v3630
    %3632 = vmatprep.subr.mxu0 0.0
    %v3633 = vand.u32 %v2959, 4294901760
    %v3634 = vsub.f32 %v2959, %v3633
    %v3635 = vand.u32 %v3634, 4294901760
    %3636 = vmatpush1.msra.mxu0 %v3635
    %3637 = vmatprep.subr.mxu0 0.0
    %v3638 = vand.u32 %v2960, 4294901760
    %v3639 = vsub.f32 %v2960, %v3638
    %v3640 = vand.u32 %v3639, 4294901760
    %3641 = vmatpush1.msra.mxu0 %v3640
    %3642 = vmatprep.subr.mxu0 0.0
    %v3643 = vand.u32 %v2961, 4294901760
    %v3644 = vsub.f32 %v2961, %v3643
    %v3645 = vand.u32 %v3644, 4294901760
    %3646 = vmatpush1.msra.mxu0 %v3645
    %3647 = vmatprep.subr.mxu0 0.0
    %v3648 = vand.u32 %v2962, 4294901760
    %v3649 = vsub.f32 %v2962, %v3648
    %v3650 = vand.u32 %v3649, 4294901760
    %3651 = vmatpush1.msra.mxu0 %v3650
    %3652 = vmatprep.subr.mxu0 0.0
    %v3653 = vand.u32 %v2963, 4294901760
    %v3654 = vsub.f32 %v2963, %v3653
    %v3655 = vand.u32 %v3654, 4294901760
    %3656 = vmatpush1.msra.mxu0 %v3655
    %3657 = vmatprep.subr.mxu0 0.0
    %v3658 = vand.u32 %v2964, 4294901760
    %v3659 = vsub.f32 %v2964, %v3658
    %v3660 = vand.u32 %v3659, 4294901760
    %3661 = vmatpush1.msra.mxu0 %v3660
    %3662 = vmatprep.subr.mxu0 0.0
    %v3663 = vand.u32 %v2965, 4294901760
    %v3664 = vsub.f32 %v2965, %v3663
    %v3665 = vand.u32 %v3664, 4294901760
    %3666 = vmatpush1.msra.mxu0 %v3665
    %3667 = vmatprep.subr.mxu0 0.0
    %v3668 = vand.u32 %v2966, 4294901760
    %v3669 = vsub.f32 %v2966, %v3668
    %v3670 = vand.u32 %v3669, 4294901760
    %3671 = vmatpush1.msra.mxu0 %v3670
    %3672 = vmatprep.subr.mxu0 0.0
    %v3673 = vand.u32 %v2967, 4294901760
    %v3674 = vsub.f32 %v2967, %v3673
    %v3675 = vand.u32 %v3674, 4294901760
    %3676 = vmatpush1.msra.mxu0 %v3675
    %3677 = vmatprep.subr.mxu0 0.0
    %v3678 = vand.u32 %v2968, 4294901760
    %v3679 = vsub.f32 %v2968, %v3678
    %v3680 = vand.u32 %v3679, 4294901760
    %3681 = vmatpush1.msra.mxu0 %v3680
    %3682 = vmatprep.subr.mxu0 0.0
    %v3683 = vand.u32 %v2969, 4294901760
    %v3684 = vsub.f32 %v2969, %v3683
    %v3685 = vand.u32 %v3684, 4294901760
    %3686 = vmatpush1.msra.mxu0 %v3685
    %3687 = vmatprep.subr.mxu0 0.0
    %v3688 = vand.u32 %v2970, 4294901760
    %v3689 = vsub.f32 %v2970, %v3688
    %v3690 = vand.u32 %v3689, 4294901760
    %3691 = vmatpush1.msra.mxu0 %v3690
    %3692 = vmatprep.subr.mxu0 0.0
    %v3693 = vand.u32 %v2971, 4294901760
    %v3694 = vsub.f32 %v2971, %v3693
    %v3695 = vand.u32 %v3694, 4294901760
    %3696 = vmatpush1.msra.mxu0 %v3695
    %3697 = vmatprep.subr.mxu0 0.0
    %v3698 = vand.u32 %v2972, 4294901760
    %v3699 = vsub.f32 %v2972, %v3698
    %v3700 = vand.u32 %v3699, 4294901760
    %3701 = vmatpush1.msra.mxu0 %v3700
    %3702 = vmatprep.subr.mxu0 0.0
    %v3703 = vand.u32 %v2973, 4294901760
    %v3704 = vsub.f32 %v2973, %v3703
    %v3705 = vand.u32 %v3704, 4294901760
    %3706 = vmatpush1.msra.mxu0 %v3705
    %3707 = vmatprep.subr.mxu0 0.0
    %v3708 = vand.u32 %v2974, 4294901760
    %v3709 = vsub.f32 %v2974, %v3708
    %v3710 = vand.u32 %v3709, 4294901760
    %3711 = vmatpush1.msra.mxu0 %v3710
    %3712 = vmatprep.subr.mxu0 0.0
    %v3713 = vand.u32 %v2975, 4294901760
    %v3714 = vsub.f32 %v2975, %v3713
    %v3715 = vand.u32 %v3714, 4294901760
    %3716 = vmatpush1.msra.mxu0 %v3715
    %3717 = vmatprep.subr.mxu0 0.0
    %v3718 = vand.u32 %v2976, 4294901760
    %v3719 = vsub.f32 %v2976, %v3718
    %v3720 = vand.u32 %v3719, 4294901760
    %3721 = vmatpush1.msra.mxu0 %v3720
    %3722 = vmatprep.subr.mxu0 0.0
    %v3723 = vand.u32 %v2977, 4294901760
    %v3724 = vsub.f32 %v2977, %v3723
    %v3725 = vand.u32 %v3724, 4294901760
    %3726 = vmatpush1.msra.mxu0 %v3725
    %3727 = vmatprep.subr.mxu0 0.0
    %v3728 = vand.u32 %v2978, 4294901760
    %v3729 = vsub.f32 %v2978, %v3728
    %v3730 = vand.u32 %v3729, 4294901760
    %3731 = vmatpush1.msra.mxu0 %v3730
    %3732 = vmatprep.subr.mxu0 0.0
    %v3733 = vand.u32 %v2979, 4294901760
    %v3734 = vsub.f32 %v2979, %v3733
    %v3735 = vand.u32 %v3734, 4294901760
    %3736 = vmatpush1.msra.mxu0 %v3735
    %v3737 = vand.u32 %v2947, 4294901760
    %3738 = vmatprep.mubr.f32.mxu0 %v3737
    %v3739 = vand.u32 %v2946, 4294901760
    %3740 = vmatmul.mubr.f32.gmra.mrb[0].mxu0 %v3739
    %v3741 = vpop.f32.mrb[0].mxu0
    %v3742 = vadd.f32 %v3574, %v3741
    %v3743 = vpop.f32.mrb[0].mxu0
    %3744 = vdwg.mxu0
    %3745 = vmatprep.subr.mxu0 0.0
    %v3746 = vand.u32 %v2948, 4294901760
    %3747 = vmatpush1.msra.mxu0 %v3746
    %3748 = vmatprep.subr.mxu0 0.0
    %v3749 = vand.u32 %v2949, 4294901760
    %3750 = vmatpush1.msra.mxu0 %v3749
    %3751 = vmatprep.subr.mxu0 0.0
    %v3752 = vand.u32 %v2950, 4294901760
    %3753 = vmatpush1.msra.mxu0 %v3752
    %3754 = vmatprep.subr.mxu0 0.0
    %v3755 = vand.u32 %v2951, 4294901760
    %3756 = vmatpush1.msra.mxu0 %v3755
    %3757 = vmatprep.subr.mxu0 0.0
    %v3758 = vand.u32 %v2952, 4294901760
    %3759 = vmatpush1.msra.mxu0 %v3758
    %3760 = vmatprep.subr.mxu0 0.0
    %v3761 = vand.u32 %v2953, 4294901760
    %3762 = vmatpush1.msra.mxu0 %v3761
    %3763 = vmatprep.subr.mxu0 0.0
    %v3764 = vand.u32 %v2954, 4294901760
    %3765 = vmatpush1.msra.mxu0 %v3764
    %3766 = vmatprep.subr.mxu0 0.0
    %v3767 = vand.u32 %v2955, 4294901760
    %3768 = vmatpush1.msra.mxu0 %v3767
    %3769 = vmatprep.subr.mxu0 0.0
    %v3770 = vand.u32 %v2956, 4294901760
    %3771 = vmatpush1.msra.mxu0 %v3770
    %3772 = vmatprep.subr.mxu0 0.0
    %v3773 = vand.u32 %v2957, 4294901760
    %3774 = vmatpush1.msra.mxu0 %v3773
    %3775 = vmatprep.subr.mxu0 0.0
    %v3776 = vand.u32 %v2958, 4294901760
    %3777 = vmatpush1.msra.mxu0 %v3776
    %3778 = vmatprep.subr.mxu0 0.0
    %v3779 = vand.u32 %v2959, 4294901760
    %3780 = vmatpush1.msra.mxu0 %v3779
    %3781 = vmatprep.subr.mxu0 0.0
    %v3782 = vand.u32 %v2960, 4294901760
    %3783 = vmatpush1.msra.mxu0 %v3782
    %3784 = vmatprep.subr.mxu0 0.0
    %v3785 = vand.u32 %v2961, 4294901760
    %3786 = vmatpush1.msra.mxu0 %v3785
    %3787 = vmatprep.subr.mxu0 0.0
    %v3788 = vand.u32 %v2962, 4294901760
    %3789 = vmatpush1.msra.mxu0 %v3788
    %3790 = vmatprep.subr.mxu0 0.0
    %v3791 = vand.u32 %v2963, 4294901760
    %3792 = vmatpush1.msra.mxu0 %v3791
    %3793 = vmatprep.subr.mxu0 0.0
    %v3794 = vand.u32 %v2964, 4294901760
    %3795 = vmatpush1.msra.mxu0 %v3794
    %3796 = vmatprep.subr.mxu0 0.0
    %v3797 = vand.u32 %v2965, 4294901760
    %3798 = vmatpush1.msra.mxu0 %v3797
    %3799 = vmatprep.subr.mxu0 0.0
    %v3800 = vand.u32 %v2966, 4294901760
    %3801 = vmatpush1.msra.mxu0 %v3800
    %3802 = vmatprep.subr.mxu0 0.0
    %v3803 = vand.u32 %v2967, 4294901760
    %3804 = vmatpush1.msra.mxu0 %v3803
    %3805 = vmatprep.subr.mxu0 0.0
    %v3806 = vand.u32 %v2968, 4294901760
    %3807 = vmatpush1.msra.mxu0 %v3806
    %3808 = vmatprep.subr.mxu0 0.0
    %v3809 = vand.u32 %v2969, 4294901760
    %3810 = vmatpush1.msra.mxu0 %v3809
    %3811 = vmatprep.subr.mxu0 0.0
    %v3812 = vand.u32 %v2970, 4294901760
    %3813 = vmatpush1.msra.mxu0 %v3812
    %3814 = vmatprep.subr.mxu0 0.0
    %v3815 = vand.u32 %v2971, 4294901760
    %3816 = vmatpush1.msra.mxu0 %v3815
    %3817 = vmatprep.subr.mxu0 0.0
    %v3818 = vand.u32 %v2972, 4294901760
    %3819 = vmatpush1.msra.mxu0 %v3818
    %3820 = vmatprep.subr.mxu0 0.0
    %v3821 = vand.u32 %v2973, 4294901760
    %3822 = vmatpush1.msra.mxu0 %v3821
    %3823 = vmatprep.subr.mxu0 0.0
    %v3824 = vand.u32 %v2974, 4294901760
    %3825 = vmatpush1.msra.mxu0 %v3824
    %3826 = vmatprep.subr.mxu0 0.0
    %v3827 = vand.u32 %v2975, 4294901760
    %3828 = vmatpush1.msra.mxu0 %v3827
    %3829 = vmatprep.subr.mxu0 0.0
    %v3830 = vand.u32 %v2976, 4294901760
    %3831 = vmatpush1.msra.mxu0 %v3830
    %3832 = vmatprep.subr.mxu0 0.0
    %v3833 = vand.u32 %v2977, 4294901760
    %3834 = vmatpush1.msra.mxu0 %v3833
    %3835 = vmatprep.subr.mxu0 0.0
    %v3836 = vand.u32 %v2978, 4294901760
    %3837 = vmatpush1.msra.mxu0 %v3836
    %3838 = vmatprep.subr.mxu0 0.0
    %v3839 = vand.u32 %v2979, 4294901760
    %3840 = vmatpush1.msra.mxu0 %v3839
    %v3841 = vand.u32 %v2947, 4294901760
    %3842 = vmatprep.mubr.f32.mxu0 %v3841
    %v3843 = vand.u32 %v2946, 4294901760
    %3844 = vmatmul.mubr.f32.gmra.mrb[0].mxu0 %v3843
    %v3845 = vpop.f32.mrb[0].mxu0
    %v3846 = vadd.f32 %v3742, %v3845
    %v3847 = vpop.f32.mrb[0].mxu0
    %3848 = vdwg.mxu0
    %vm3849 = vcmask 15360
    %3850 = vst.msk [vmem:[%s12] sm:$0xff] %vm3849, %v3846
    // Predicated region
    $region58: #{tpu_custom_call.1} parent=1 // pred_check
      _
    $region59: #{tpu_custom_call.1} parent=1 // pred_check_branch
      %3852 = sbr.rel (0) target = $region61
    $region60: #{tpu_custom_call.1} parent=1 // pred_region
      _
    $region61: #{tpu_custom_call.1} parent=1 // pred_fallthru
      _
    // Predicated region
    $region62: #{tpu_custom_call.1} parent=1 // pred_check
      _
    $region63: #{tpu_custom_call.1} parent=1 // pred_check_branch
      %3854 = sbr.rel (0) target = $region65
    $region64: #{tpu_custom_call.1} parent=1 // pred_region
      _
    $region65: #{tpu_custom_call.1} parent=1 // pred_fallthru
      _
    %3855 = vsyncpa [#allocation3], 1
    %3856 = vsyncpa [#allocation5], 1

</llo_original>
